<compile_context>
chip_gen: v7x
topology: tpu7x:2x2x1
jax: 0.10.0
libtpu: 0.0.40
codegen_flags: <defaults>
</compile_context>

<pallas_src>
import functools

import jax
import jax.numpy as jnp
from jax import lax
from jax.experimental import pallas as pl
from jax.experimental.pallas import tpu as pltpu


def _lstm_kernel(lens_ref, gx_ref, w_hh_ref, out_ref, h_ref, c_ref, *,
                 hidden_size, t_block, lane_dense):
    """One (batch-block, time-block) grid step of the packed LSTM.

    lens_ref : (B_BLK, 1) int32            sequence lengths (0 for padded rows)
    gx_ref   : (t_block, B_BLK, 4H) bf16   precomputed x @ W_ih + b, [i,f,o,g]
    w_hh_ref : (H, 4H) bf16                recurrent weights, [i,f,o,g]
    out_ref  : (1, B_BLK, t_block*H) f32   lane-dense hidden-output slab
    h_ref/c_ref : (B_BLK, H) f32           recurrent state; VMEM-resident
                                           accumulators across the time axis
    """
    tb = pl.program_id(1)                    # time-block index (serial axis)

    @pl.when(tb == 0)
    def _():
        h_ref[...] = jnp.zeros_like(h_ref)
        c_ref[...] = jnp.zeros_like(c_ref)

    H = hidden_size
    w_hh = w_hh_ref[...]                     # (H, 4H) bf16, loaded once/block
    lens = lens_ref[...]                     # (B_BLK, 1) int32
    t0 = tb * t_block

    # TODO(synk): when H / 4H fit a single MXU weight tile at production size,
    # stage w_hh once per block with pltpu.matmul_push_rhs / matmul_acc_lhs
    # instead of re-issuing jnp.dot every timestep.
    h = h_ref[...]
    c = c_ref[...]
    outs = []
    # Static Python loop: t_block is small, and we need compile-time-constant
    # lane offsets for the lane-dense output slab (live ranges are tiny here).
    for tt in range(t_block):
        # Only the recurrent projection stays on the serial critical path;
        # the input projection + bias was hoisted into one big XLA matmul.
        gates = gx_ref[tt].astype(jnp.float32) + jnp.dot(
            h.astype(jnp.bfloat16), w_hh,
            preferred_element_type=jnp.float32)              # (B_BLK, 4H) f32

        # Gate order permuted at init to [i, f, o, g]: one sigmoid over 3H
        # contiguous lanes + one tanh over H lanes (half the EUP work of
        # applying both nonlinearities to the full 4H vector).
        ifo = jax.nn.sigmoid(gates[:, :3 * H])
        g_g = jnp.tanh(gates[:, 3 * H:])
        i_g = ifo[:, 0 * H:1 * H]
        f_g = ifo[:, 1 * H:2 * H]
        o_g = ifo[:, 2 * H:3 * H]

        c_new = f_g * c + i_g * g_g
        h_new = o_g * jnp.tanh(c_new)

        # Packed-sequence semantics: state only advances on valid timesteps;
        # padded output positions are zero (like pad_packed_sequence).
        valid = (t0 + tt) < lens                              # (B_BLK, 1)
        h = jnp.where(valid, h_new, h)
        c = jnp.where(valid, c_new, c)
        out_t = jnp.where(valid, h_new, 0.0)

        if lane_dense:
            outs.append(out_t)                 # pack -> one wide store below
        else:
            # H >= 128: per-timestep column stores are already lane-dense.
            out_ref[0, :, tt * H:(tt + 1) * H] = out_t.astype(out_ref.dtype)

    if lane_dense:
        out_ref[0] = jnp.concatenate(outs, axis=-1).astype(out_ref.dtype)
    h_ref[...] = h
    c_ref[...] = c


def _build_lstm_call(T, B, H, *, t_block, b_block, single_buffer_whh):
    lane_dense = H < 128
    kernel = functools.partial(_lstm_kernel, hidden_size=H, t_block=t_block,
                               lane_dense=lane_dense)
    whh_kwargs = {"pipeline_mode": pl.Buffered(1)} if single_buffer_whh else {}
    grid_spec = pltpu.PrefetchScalarGridSpec(
        num_scalar_prefetch=0,
        grid=(B // b_block, T // t_block),   # (batch-parallel, time-serial)
        in_specs=[
            pl.BlockSpec((b_block, 1), lambda b, t: (b, 0)),
            pl.BlockSpec((t_block, b_block, 4 * H), lambda b, t: (t, b, 0)),
            # Constant index_map: never re-DMAed; single-buffer it to save a
            # full w_hh copy of VMEM (matters most on v7x's 64 MiB).
            pl.BlockSpec((H, 4 * H), lambda b, t: (0, 0), **whh_kwargs),
        ],
        out_specs=[
            pl.BlockSpec((1, b_block, t_block * H), lambda b, t: (t, b, 0)),
            # Constant-in-time index_maps -> VMEM-resident recurrent state.
            pl.BlockSpec((b_block, H), lambda b, t: (b, 0)),
            pl.BlockSpec((b_block, H), lambda b, t: (b, 0)),
        ],
    )
    out_shapes = (
        jax.ShapeDtypeStruct((T // t_block, B, t_block * H), jnp.float32),
        jax.ShapeDtypeStruct((B, H), jnp.float32),
        jax.ShapeDtypeStruct((B, H), jnp.float32),
    )
    return pl.pallas_call(
        kernel,
        out_shape=out_shapes,
        grid_spec=grid_spec,
        compiler_params=pltpu.CompilerParams(
            # Time recurrence is serial; batch blocks are independent and can
            # be sharded across v7x's two TensorCores.
            dimension_semantics=("parallel", "arbitrary"),
            vmem_limit_bytes=64 * 1024 * 1024),
    )


def lstm_packed_pallas(gates_x, lens, w_hh, *, t_block=16, b_block=8):
    """gates_x: (T, B, 4H) bf16 = x @ w_ih + bias (gate order [i,f,o,g]);
    lens: (B, 1) int32; w_hh: (H, 4H) bf16.
    Requires T % t_block == 0, B % b_block == 0, b_block % 8 == 0 (pad outside).
    Returns (output (T, B, H) f32, h (B, H) f32, c (B, H) f32)."""
    T, B, G = gates_x.shape
    H = w_hh.shape[0]
    assert G == 4 * H
    assert T % t_block == 0 and B % b_block == 0 and b_block % 8 == 0

    try:
        call = _build_lstm_call(T, B, H, t_block=t_block, b_block=b_block,
                                single_buffer_whh=True)
        out, h, c = call(lens, gates_x, w_hh)
    except Exception:
        # Fallback for jax builds that reject pl.Buffered(1): identical
        # semantics, just one extra (H, 4H) VMEM buffer for w_hh.
        call = _build_lstm_call(T, B, H, t_block=t_block, b_block=b_block,
                                single_buffer_whh=False)
        out, h, c = call(lens, gates_x, w_hh)

    # Lane-dense slab (T//t_block, B, t_block*H) -> time-major (T, B, H).
    out = out.reshape(T // t_block, B, t_block, H)
    out = jnp.transpose(out, (0, 2, 1, 3)).reshape(T, B, H)
    return out, h, c


class EncoderLSTMAttPallas:
    """JAX/Pallas equivalent of EncoderLSTM_Att.forward."""

    T_BLOCK = 16  # timesteps per grid step (VMEM-gated; re-derive for v7x)
    B_BLOCK = 8   # batch rows per grid step (f32 sublane multiple)

    def __init__(self, vocab_size, embedding_size, hidden_size, key,
                 word_embedding=None):
        self.hidden_size = hidden_size
        k_emb, k_wih, k_whh, k_bih, k_bhh = jax.random.split(key, 5)
        bound = 1.0 / jnp.sqrt(hidden_size)
        # nn.Embedding: N(0, 1) init (or user-provided table).
        if word_embedding is not None:
            self.embedding = jnp.asarray(word_embedding, jnp.float32)
        else:
            self.embedding = jax.random.normal(
                k_emb, (vocab_size, embedding_size), jnp.float32)
        # nn.LSTM weights, PyTorch gate order [i, f, g, o], kept in f32 for
        # the pure-JAX reference / checkpoint compatibility.
        self.w_ih = jax.random.uniform(
            k_wih, (embedding_size, 4 * hidden_size), jnp.float32, -bound, bound)
        self.w_hh = jax.random.uniform(
            k_whh, (hidden_size, 4 * hidden_size), jnp.float32, -bound, bound)
        b_ih = jax.random.uniform(
            k_bih, (4 * hidden_size,), jnp.float32, -bound, bound)
        b_hh = jax.random.uniform(
            k_bhh, (4 * hidden_size,), jnp.float32, -bound, bound)
        self.bias = (b_ih + b_hh).reshape(1, 1, 4 * hidden_size)

        # Kernel-layout copies: gate columns permuted [i,f,g,o] -> [i,f,o,g];
        # w_hh in bf16 for the MXU (f32 accumulate).  w_ih / bias stay f32 --
        # the hoisted input projection is one big XLA matmul where accuracy
        # is cheap.
        H = hidden_size
        perm = lambda a: jnp.concatenate(
            [a[..., :2 * H], a[..., 3 * H:4 * H], a[..., 2 * H:3 * H]], axis=-1)
        self.w_ih_k = perm(self.w_ih)
        self.bias_k = perm(self.bias)
        self.w_hh_k = perm(self.w_hh).astype(jnp.bfloat16)

    def forward(self, tokens, lengths):
        """tokens: (B, S) int32, lengths: python list of ints (all >= 1).
        Returns (output (T_max, B, H), hidden (B, H), cell (1, B, H))."""
        t_max = int(max(lengths))
        B = tokens.shape[0]

        # Embedding lookup (plain-JAX glue), transpose to time-major.
        embedded = jnp.take(self.embedding, tokens, axis=0)         # (B, S, E)
        x_tbe = jnp.transpose(embedded, (1, 0, 2))[:t_max]          # (T, B, E)

        # Hoisted input projection: one big (T*B, E) x (E, 4H) matmul + bias
        # outside the serial recurrence; shipped to the kernel as bf16 (the
        # dominant HBM read stream, esp. on v5e).
        gates_x = jnp.einsum('tbe,ef->tbf', x_tbe, self.w_ih_k) + self.bias_k

        # Pad T to the time block and B to the batch block.  Padded rows get
        # length 0 so their state stays frozen and their outputs are zero;
        # everything padded is sliced away below.
        t_block, b_block = self.T_BLOCK, self.B_BLOCK
        t_pad = -(-t_max // t_block) * t_block
        b_pad = -(-B // b_block) * b_block
        gates_x = jnp.pad(
            gates_x, ((0, t_pad - t_max), (0, b_pad - B), (0, 0))
        ).astype(jnp.bfloat16)
        len_arr = jnp.asarray(lengths, jnp.int32)
        lens = jnp.pad(len_arr, (0, b_pad - B)).reshape(b_pad, 1)

        # TODO(synk): if multiple independent sequences/directions/layers run
        # this LSTM, concatenate them along the batch axis into one call to
        # fill MXU rows and amortize per-call overhead.
        out, h_final, c_final = lstm_packed_pallas(
            gates_x, lens, self.w_hh_k, t_block=t_block, b_block=b_block)

        output = out[:t_max, :B]            # (T_max, B, H)
        # hidden.permute(1,0,2).reshape(B,-1) with 1 layer/direction == (B,H)
        hidden = h_final[:B]                # (B, H)
        cell = c_final[:B][None]            # (1, B, H)
        return output, hidden, cell


def _reference_forward(model, tokens, lengths):
    """Pure-JAX f32 reference (lax.scan) using the original [i,f,g,o] weights."""
    t_max = int(max(lengths))
    embedded = jnp.take(model.embedding, tokens, axis=0)
    x = jnp.transpose(embedded, (1, 0, 2))[:t_max]
    len_arr = jnp.asarray(lengths, jnp.int32)
    mask = (jnp.arange(t_max)[:, None] < len_arr[None, :]
            ).astype(jnp.float32)[:, :, None]
    H = model.hidden_size
    B = tokens.shape[0]
    bias = model.bias.reshape(1, 4 * H)

    def step(carry, inp):
        h, c = carry
        x_t, m_t = inp
        gates = x_t @ model.w_ih + h @ model.w_hh + bias
        i = jax.nn.sigmoid(gates[:, 0 * H:1 * H])
        f = jax.nn.sigmoid(gates[:, 1 * H:2 * H])
        g = jnp.tanh(gates[:, 2 * H:3 * H])
        o = jax.nn.sigmoid(gates[:, 3 * H:4 * H])
        c_new = f * c + i * g
        h_new = o * jnp.tanh(c_new)
        h = m_t * h_new + (1 - m_t) * h
        c = m_t * c_new + (1 - m_t) * c
        return (h, c), m_t * h_new

    (h, c), out = lax.scan(
        step, (jnp.zeros((B, H)), jnp.zeros((B, H))), (x, mask))
    return out, h, c[None]


if __name__ == "__main__":
    vocab_size, embedding_size, hidden_size = 50, 16, 32
    batch, seq_len = 2, 8
    lengths = [8, 5]

    key = jax.random.PRNGKey(0)
    k_model, k_tok = jax.random.split(key)
    model = EncoderLSTMAttPallas(vocab_size, embedding_size, hidden_size,
                                 k_model)
    tokens = jax.random.randint(k_tok, (batch, seq_len), 0, vocab_size,
                                jnp.int32)

    output, hidden, cell = model.forward(tokens, lengths)
    jax.block_until_ready((output, hidden, cell))

    ref_out, ref_h, ref_c = _reference_forward(model, tokens, lengths)
    assert output.shape == (max(lengths), batch, hidden_size)
    assert hidden.shape == (batch, hidden_size)
    assert cell.shape == (1, batch, hidden_size)
    # bf16 gates_x / bf16 recurrent matmul vs f32 reference -> looser tolerance.
    assert jnp.allclose(output, ref_out, atol=5e-2)
    assert jnp.allclose(hidden, ref_h, atol=5e-2)
    assert jnp.allclose(cell, ref_c, atol=5e-2)

    print("KERNEL_OK")
</pallas_src>

<mosaic_0001>
module attributes {stable_mosaic.version = 11 : i64} {
  func.func @_lstm_kernel(%arg0: i32, %arg1: i32, %arg2: memref<8x1xi32, #tpu.memory_space<vmem>>, %arg3: memref<16x8x128xbf16, #tpu.memory_space<vmem>>, %arg4: memref<32x128xbf16, #tpu.memory_space<vmem>>, %arg5: memref<1x8x512xf32, #tpu.memory_space<vmem>>, %arg6: memref<8x32xf32, #tpu.memory_space<vmem>>, %arg7: memref<8x32xf32, #tpu.memory_space<vmem>>) attributes {dimension_semantics = [#tpu.dimension_semantics<parallel>, #tpu.dimension_semantics<arbitrary>], iteration_bounds = array<i64: 1, 1>, scalar_prefetch = 0 : i64, scratch_operands = 0 : i64, tpu.core_type = #tpu.core_type<tc>, window_params = [{transform_indices = @transform_0, window_bounds = array<i64: 8, 1>}, {transform_indices = @transform_1, window_bounds = array<i64: 16, 8, 128>}, {pipeline_mode = #tpu.pipeline_mode<synchronous>, transform_indices = @transform_2, window_bounds = array<i64: 32, 128>}, {transform_indices = @transform_3, window_bounds = array<i64: 1, 8, 512>}, {transform_indices = @transform_4, window_bounds = array<i64: 8, 32>}, {transform_indices = @transform_5, window_bounds = array<i64: 8, 32>}]} {
    %c0_i32 = arith.constant 0 : i32
    %0 = arith.cmpi eq, %arg1, %c0_i32 : i32
    %1 = arith.extui %0 : i1 to i32
    %c0_i32_0 = arith.constant 0 : i32
    %2 = arith.cmpi ne, %1, %c0_i32_0 : i32
    scf.if %2 {
      %cst_96 = arith.constant 0.000000e+00 : f32
      %574 = vector.broadcast %cst_96 : f32 to vector<8x32xf32>
      %c0_97 = arith.constant 0 : index
      %c0_98 = arith.constant 0 : index
      %575 = vector.load %arg6[%c0_97, %c0_98] : memref<8x32xf32, #tpu.memory_space<vmem>>, vector<8x32xf32>
      tpu.vector_store %arg6[%c0_97, %c0_98], %574 {strides = array<i32>} : memref<8x32xf32, #tpu.memory_space<vmem>>, vector<8x32xf32>,
      %cst_99 = arith.constant 0.000000e+00 : f32
      %576 = vector.broadcast %cst_99 : f32 to vector<8x32xf32>
      %c0_100 = arith.constant 0 : index
      %c0_101 = arith.constant 0 : index
      %577 = vector.load %arg7[%c0_100, %c0_101] : memref<8x32xf32, #tpu.memory_space<vmem>>, vector<8x32xf32>
      tpu.vector_store %arg7[%c0_100, %c0_101], %576 {strides = array<i32>} : memref<8x32xf32, #tpu.memory_space<vmem>>, vector<8x32xf32>,
    } else {
    }
    %c0 = arith.constant 0 : index
    %c0_1 = arith.constant 0 : index
    %3 = vector.load %arg4[%c0, %c0_1] : memref<32x128xbf16, #tpu.memory_space<vmem>>, vector<32x128xbf16>
    %c0_2 = arith.constant 0 : index
    %c0_3 = arith.constant 0 : index
    %4 = vector.load %arg2[%c0_2, %c0_3] : memref<8x1xi32, #tpu.memory_space<vmem>>, vector<8x1xi32>
    %c16_i32 = arith.constant 16 : i32
    %5 = arith.muli %arg1, %c16_i32 : i32
    %c0_4 = arith.constant 0 : index
    %c0_5 = arith.constant 0 : index
    %6 = vector.load %arg6[%c0_4, %c0_5] : memref<8x32xf32, #tpu.memory_space<vmem>>, vector<8x32xf32>
    %c0_6 = arith.constant 0 : index
    %c0_7 = arith.constant 0 : index
    %7 = vector.load %arg7[%c0_6, %c0_7] : memref<8x32xf32, #tpu.memory_space<vmem>>, vector<8x32xf32>
    %c0_8 = arith.constant 0 : index
    %c0_9 = arith.constant 0 : index
    %c0_10 = arith.constant 0 : index
    %8 = vector.load %arg3[%c0_8, %c0_9, %c0_10] : memref<16x8x128xbf16, #tpu.memory_space<vmem>>, vector<1x8x128xbf16>
    %9 = vector.shape_cast %8 : vector<1x8x128xbf16> to vector<8x128xbf16>
    %10 = arith.extf %9 : vector<8x128xbf16> to vector<8x128xf32>
    %11 = arith.truncf %6 : vector<8x32xf32> to vector<8x32xbf16>
    %cst = arith.constant dense<0.000000e+00> : vector<8x128xf32>
    %12 = tpu.matmul %11, %3, %cst {dimension_numbers = #tpu.dot_dimension_numbers<[1], [0], [0], [1], [0, 0, 1, 1], [], []>} : vector<8x32xbf16>, vector<32x128xbf16>, vector<8x128xf32> -> vector<8x128xf32>
    %13 = arith.addf %10, %12 : vector<8x128xf32>
    %14 = vector.extract_strided_slice %13 {offsets = [0, 0], sizes = [8, 96], strides = [1, 1]} : vector<8x128xf32> to vector<8x96xf32>
    %15 = arith.negf %14 : vector<8x96xf32>
    %16 = math.exp %15 : vector<8x96xf32>
    %cst_11 = arith.constant 1.000000e+00 : f32
    %17 = vector.broadcast %cst_11 : f32 to vector<8x96xf32>
    %18 = arith.addf %17, %16 : vector<8x96xf32>
    %19 = arith.divf %17, %18 : vector<8x96xf32>
    %20 = vector.extract_strided_slice %13 {offsets = [0, 96], sizes = [8, 32], strides = [1, 1]} : vector<8x128xf32> to vector<8x32xf32>
    %21 = math.tanh %20 : vector<8x32xf32>
    %22 = vector.extract_strided_slice %19 {offsets = [0, 0], sizes = [8, 32], strides = [1, 1]} : vector<8x96xf32> to vector<8x32xf32>
    %23 = vector.extract_strided_slice %19 {offsets = [0, 32], sizes = [8, 32], strides = [1, 1]} : vector<8x96xf32> to vector<8x32xf32>
    %24 = vector.extract_strided_slice %19 {offsets = [0, 64], sizes = [8, 32], strides = [1, 1]} : vector<8x96xf32> to vector<8x32xf32>
    %25 = arith.mulf %23, %7 : vector<8x32xf32>
    %26 = arith.mulf %22, %21 : vector<8x32xf32>
    %27 = arith.addf %25, %26 : vector<8x32xf32>
    %28 = math.tanh %27 : vector<8x32xf32>
    %29 = arith.mulf %24, %28 : vector<8x32xf32>
    %c0_i32_12 = arith.constant 0 : i32
    %30 = arith.addi %5, %c0_i32_12 : i32
    %31 = vector.broadcast %30 : i32 to vector<8x1xi32>
    %32 = arith.cmpi slt, %31, %4 : vector<8x1xi32>
    %33 = vector.shape_cast %32 : vector<8x1xi1> to vector<8x1xi1>
    %34 = vector.broadcast %33 : vector<8x1xi1> to vector<8x32xi1>
    %35 = arith.select %34, %29, %6 : vector<8x32xi1>, vector<8x32xf32>
    %36 = vector.shape_cast %32 : vector<8x1xi1> to vector<8x1xi1>
    %37 = vector.broadcast %36 : vector<8x1xi1> to vector<8x32xi1>
    %38 = arith.select %37, %27, %7 : vector<8x32xi1>, vector<8x32xf32>
    %cst_13 = arith.constant 0.000000e+00 : f32
    %39 = vector.shape_cast %32 : vector<8x1xi1> to vector<8x1xi1>
    %40 = vector.broadcast %39 : vector<8x1xi1> to vector<8x32xi1>
    %41 = vector.broadcast %cst_13 : f32 to vector<8x32xf32>
    %42 = arith.select %40, %29, %41 : vector<8x32xi1>, vector<8x32xf32>
    %c1 = arith.constant 1 : index
    %c0_14 = arith.constant 0 : index
    %c0_15 = arith.constant 0 : index
    %43 = vector.load %arg3[%c1, %c0_14, %c0_15] : memref<16x8x128xbf16, #tpu.memory_space<vmem>>, vector<1x8x128xbf16>
    %44 = vector.shape_cast %43 : vector<1x8x128xbf16> to vector<8x128xbf16>
    %45 = arith.extf %44 : vector<8x128xbf16> to vector<8x128xf32>
    %46 = arith.truncf %35 : vector<8x32xf32> to vector<8x32xbf16>
    %cst_16 = arith.constant dense<0.000000e+00> : vector<8x128xf32>
    %47 = tpu.matmul %46, %3, %cst_16 {dimension_numbers = #tpu.dot_dimension_numbers<[1], [0], [0], [1], [0, 0, 1, 1], [], []>} : vector<8x32xbf16>, vector<32x128xbf16>, vector<8x128xf32> -> vector<8x128xf32>
    %48 = arith.addf %45, %47 : vector<8x128xf32>
    %49 = vector.extract_strided_slice %48 {offsets = [0, 0], sizes = [8, 96], strides = [1, 1]} : vector<8x128xf32> to vector<8x96xf32>
    %50 = arith.negf %49 : vector<8x96xf32>
    %51 = math.exp %50 : vector<8x96xf32>
    %cst_17 = arith.constant 1.000000e+00 : f32
    %52 = vector.broadcast %cst_17 : f32 to vector<8x96xf32>
    %53 = arith.addf %52, %51 : vector<8x96xf32>
    %54 = arith.divf %52, %53 : vector<8x96xf32>
    %55 = vector.extract_strided_slice %48 {offsets = [0, 96], sizes = [8, 32], strides = [1, 1]} : vector<8x128xf32> to vector<8x32xf32>
    %56 = math.tanh %55 : vector<8x32xf32>
    %57 = vector.extract_strided_slice %54 {offsets = [0, 0], sizes = [8, 32], strides = [1, 1]} : vector<8x96xf32> to vector<8x32xf32>
    %58 = vector.extract_strided_slice %54 {offsets = [0, 32], sizes = [8, 32], strides = [1, 1]} : vector<8x96xf32> to vector<8x32xf32>
    %59 = vector.extract_strided_slice %54 {offsets = [0, 64], sizes = [8, 32], strides = [1, 1]} : vector<8x96xf32> to vector<8x32xf32>
    %60 = arith.mulf %58, %38 : vector<8x32xf32>
    %61 = arith.mulf %57, %56 : vector<8x32xf32>
    %62 = arith.addf %60, %61 : vector<8x32xf32>
    %63 = math.tanh %62 : vector<8x32xf32>
    %64 = arith.mulf %59, %63 : vector<8x32xf32>
    %c1_i32 = arith.constant 1 : i32
    %65 = arith.addi %5, %c1_i32 : i32
    %66 = vector.broadcast %65 : i32 to vector<8x1xi32>
    %67 = arith.cmpi slt, %66, %4 : vector<8x1xi32>
    %68 = vector.shape_cast %67 : vector<8x1xi1> to vector<8x1xi1>
    %69 = vector.broadcast %68 : vector<8x1xi1> to vector<8x32xi1>
    %70 = arith.select %69, %64, %35 : vector<8x32xi1>, vector<8x32xf32>
    %71 = vector.shape_cast %67 : vector<8x1xi1> to vector<8x1xi1>
    %72 = vector.broadcast %71 : vector<8x1xi1> to vector<8x32xi1>
    %73 = arith.select %72, %62, %38 : vector<8x32xi1>, vector<8x32xf32>
    %cst_18 = arith.constant 0.000000e+00 : f32
    %74 = vector.shape_cast %67 : vector<8x1xi1> to vector<8x1xi1>
    %75 = vector.broadcast %74 : vector<8x1xi1> to vector<8x32xi1>
    %76 = vector.broadcast %cst_18 : f32 to vector<8x32xf32>
    %77 = arith.select %75, %64, %76 : vector<8x32xi1>, vector<8x32xf32>
    %c2 = arith.constant 2 : index
    %c0_19 = arith.constant 0 : index
    %c0_20 = arith.constant 0 : index
    %78 = vector.load %arg3[%c2, %c0_19, %c0_20] : memref<16x8x128xbf16, #tpu.memory_space<vmem>>, vector<1x8x128xbf16>
    %79 = vector.shape_cast %78 : vector<1x8x128xbf16> to vector<8x128xbf16>
    %80 = arith.extf %79 : vector<8x128xbf16> to vector<8x128xf32>
    %81 = arith.truncf %70 : vector<8x32xf32> to vector<8x32xbf16>
    %cst_21 = arith.constant dense<0.000000e+00> : vector<8x128xf32>
    %82 = tpu.matmul %81, %3, %cst_21 {dimension_numbers = #tpu.dot_dimension_numbers<[1], [0], [0], [1], [0, 0, 1, 1], [], []>} : vector<8x32xbf16>, vector<32x128xbf16>, vector<8x128xf32> -> vector<8x128xf32>
    %83 = arith.addf %80, %82 : vector<8x128xf32>
    %84 = vector.extract_strided_slice %83 {offsets = [0, 0], sizes = [8, 96], strides = [1, 1]} : vector<8x128xf32> to vector<8x96xf32>
    %85 = arith.negf %84 : vector<8x96xf32>
    %86 = math.exp %85 : vector<8x96xf32>
    %cst_22 = arith.constant 1.000000e+00 : f32
    %87 = vector.broadcast %cst_22 : f32 to vector<8x96xf32>
    %88 = arith.addf %87, %86 : vector<8x96xf32>
    %89 = arith.divf %87, %88 : vector<8x96xf32>
    %90 = vector.extract_strided_slice %83 {offsets = [0, 96], sizes = [8, 32], strides = [1, 1]} : vector<8x128xf32> to vector<8x32xf32>
    %91 = math.tanh %90 : vector<8x32xf32>
    %92 = vector.extract_strided_slice %89 {offsets = [0, 0], sizes = [8, 32], strides = [1, 1]} : vector<8x96xf32> to vector<8x32xf32>
    %93 = vector.extract_strided_slice %89 {offsets = [0, 32], sizes = [8, 32], strides = [1, 1]} : vector<8x96xf32> to vector<8x32xf32>
    %94 = vector.extract_strided_slice %89 {offsets = [0, 64], sizes = [8, 32], strides = [1, 1]} : vector<8x96xf32> to vector<8x32xf32>
    %95 = arith.mulf %93, %73 : vector<8x32xf32>
    %96 = arith.mulf %92, %91 : vector<8x32xf32>
    %97 = arith.addf %95, %96 : vector<8x32xf32>
    %98 = math.tanh %97 : vector<8x32xf32>
    %99 = arith.mulf %94, %98 : vector<8x32xf32>
    %c2_i32 = arith.constant 2 : i32
    %100 = arith.addi %5, %c2_i32 : i32
    %101 = vector.broadcast %100 : i32 to vector<8x1xi32>
    %102 = arith.cmpi slt, %101, %4 : vector<8x1xi32>
    %103 = vector.shape_cast %102 : vector<8x1xi1> to vector<8x1xi1>
    %104 = vector.broadcast %103 : vector<8x1xi1> to vector<8x32xi1>
    %105 = arith.select %104, %99, %70 : vector<8x32xi1>, vector<8x32xf32>
    %106 = vector.shape_cast %102 : vector<8x1xi1> to vector<8x1xi1>
    %107 = vector.broadcast %106 : vector<8x1xi1> to vector<8x32xi1>
    %108 = arith.select %107, %97, %73 : vector<8x32xi1>, vector<8x32xf32>
    %cst_23 = arith.constant 0.000000e+00 : f32
    %109 = vector.shape_cast %102 : vector<8x1xi1> to vector<8x1xi1>
    %110 = vector.broadcast %109 : vector<8x1xi1> to vector<8x32xi1>
    %111 = vector.broadcast %cst_23 : f32 to vector<8x32xf32>
    %112 = arith.select %110, %99, %111 : vector<8x32xi1>, vector<8x32xf32>
    %c3 = arith.constant 3 : index
    %c0_24 = arith.constant 0 : index
    %c0_25 = arith.constant 0 : index
    %113 = vector.load %arg3[%c3, %c0_24, %c0_25] : memref<16x8x128xbf16, #tpu.memory_space<vmem>>, vector<1x8x128xbf16>
    %114 = vector.shape_cast %113 : vector<1x8x128xbf16> to vector<8x128xbf16>
    %115 = arith.extf %114 : vector<8x128xbf16> to vector<8x128xf32>
    %116 = arith.truncf %105 : vector<8x32xf32> to vector<8x32xbf16>
    %cst_26 = arith.constant dense<0.000000e+00> : vector<8x128xf32>
    %117 = tpu.matmul %116, %3, %cst_26 {dimension_numbers = #tpu.dot_dimension_numbers<[1], [0], [0], [1], [0, 0, 1, 1], [], []>} : vector<8x32xbf16>, vector<32x128xbf16>, vector<8x128xf32> -> vector<8x128xf32>
    %118 = arith.addf %115, %117 : vector<8x128xf32>
    %119 = vector.extract_strided_slice %118 {offsets = [0, 0], sizes = [8, 96], strides = [1, 1]} : vector<8x128xf32> to vector<8x96xf32>
    %120 = arith.negf %119 : vector<8x96xf32>
    %121 = math.exp %120 : vector<8x96xf32>
    %cst_27 = arith.constant 1.000000e+00 : f32
    %122 = vector.broadcast %cst_27 : f32 to vector<8x96xf32>
    %123 = arith.addf %122, %121 : vector<8x96xf32>
    %124 = arith.divf %122, %123 : vector<8x96xf32>
    %125 = vector.extract_strided_slice %118 {offsets = [0, 96], sizes = [8, 32], strides = [1, 1]} : vector<8x128xf32> to vector<8x32xf32>
    %126 = math.tanh %125 : vector<8x32xf32>
    %127 = vector.extract_strided_slice %124 {offsets = [0, 0], sizes = [8, 32], strides = [1, 1]} : vector<8x96xf32> to vector<8x32xf32>
    %128 = vector.extract_strided_slice %124 {offsets = [0, 32], sizes = [8, 32], strides = [1, 1]} : vector<8x96xf32> to vector<8x32xf32>
    %129 = vector.extract_strided_slice %124 {offsets = [0, 64], sizes = [8, 32], strides = [1, 1]} : vector<8x96xf32> to vector<8x32xf32>
    %130 = arith.mulf %128, %108 : vector<8x32xf32>
    %131 = arith.mulf %127, %126 : vector<8x32xf32>
    %132 = arith.addf %130, %131 : vector<8x32xf32>
    %133 = math.tanh %132 : vector<8x32xf32>
    %134 = arith.mulf %129, %133 : vector<8x32xf32>
    %c3_i32 = arith.constant 3 : i32
    %135 = arith.addi %5, %c3_i32 : i32
    %136 = vector.broadcast %135 : i32 to vector<8x1xi32>
    %137 = arith.cmpi slt, %136, %4 : vector<8x1xi32>
    %138 = vector.shape_cast %137 : vector<8x1xi1> to vector<8x1xi1>
    %139 = vector.broadcast %138 : vector<8x1xi1> to vector<8x32xi1>
    %140 = arith.select %139, %134, %105 : vector<8x32xi1>, vector<8x32xf32>
    %141 = vector.shape_cast %137 : vector<8x1xi1> to vector<8x1xi1>
    %142 = vector.broadcast %141 : vector<8x1xi1> to vector<8x32xi1>
    %143 = arith.select %142, %132, %108 : vector<8x32xi1>, vector<8x32xf32>
    %cst_28 = arith.constant 0.000000e+00 : f32
    %144 = vector.shape_cast %137 : vector<8x1xi1> to vector<8x1xi1>
    %145 = vector.broadcast %144 : vector<8x1xi1> to vector<8x32xi1>
    %146 = vector.broadcast %cst_28 : f32 to vector<8x32xf32>
    %147 = arith.select %145, %134, %146 : vector<8x32xi1>, vector<8x32xf32>
    %c4 = arith.constant 4 : index
    %c0_29 = arith.constant 0 : index
    %c0_30 = arith.constant 0 : index
    %148 = vector.load %arg3[%c4, %c0_29, %c0_30] : memref<16x8x128xbf16, #tpu.memory_space<vmem>>, vector<1x8x128xbf16>
    %149 = vector.shape_cast %148 : vector<1x8x128xbf16> to vector<8x128xbf16>
    %150 = arith.extf %149 : vector<8x128xbf16> to vector<8x128xf32>
    %151 = arith.truncf %140 : vector<8x32xf32> to vector<8x32xbf16>
    %cst_31 = arith.constant dense<0.000000e+00> : vector<8x128xf32>
    %152 = tpu.matmul %151, %3, %cst_31 {dimension_numbers = #tpu.dot_dimension_numbers<[1], [0], [0], [1], [0, 0, 1, 1], [], []>} : vector<8x32xbf16>, vector<32x128xbf16>, vector<8x128xf32> -> vector<8x128xf32>
    %153 = arith.addf %150, %152 : vector<8x128xf32>
    %154 = vector.extract_strided_slice %153 {offsets = [0, 0], sizes = [8, 96], strides = [1, 1]} : vector<8x128xf32> to vector<8x96xf32>
    %155 = arith.negf %154 : vector<8x96xf32>
    %156 = math.exp %155 : vector<8x96xf32>
    %cst_32 = arith.constant 1.000000e+00 : f32
    %157 = vector.broadcast %cst_32 : f32 to vector<8x96xf32>
    %158 = arith.addf %157, %156 : vector<8x96xf32>
    %159 = arith.divf %157, %158 : vector<8x96xf32>
    %160 = vector.extract_strided_slice %153 {offsets = [0, 96], sizes = [8, 32], strides = [1, 1]} : vector<8x128xf32> to vector<8x32xf32>
    %161 = math.tanh %160 : vector<8x32xf32>
    %162 = vector.extract_strided_slice %159 {offsets = [0, 0], sizes = [8, 32], strides = [1, 1]} : vector<8x96xf32> to vector<8x32xf32>
    %163 = vector.extract_strided_slice %159 {offsets = [0, 32], sizes = [8, 32], strides = [1, 1]} : vector<8x96xf32> to vector<8x32xf32>
    %164 = vector.extract_strided_slice %159 {offsets = [0, 64], sizes = [8, 32], strides = [1, 1]} : vector<8x96xf32> to vector<8x32xf32>
    %165 = arith.mulf %163, %143 : vector<8x32xf32>
    %166 = arith.mulf %162, %161 : vector<8x32xf32>
    %167 = arith.addf %165, %166 : vector<8x32xf32>
    %168 = math.tanh %167 : vector<8x32xf32>
    %169 = arith.mulf %164, %168 : vector<8x32xf32>
    %c4_i32 = arith.constant 4 : i32
    %170 = arith.addi %5, %c4_i32 : i32
    %171 = vector.broadcast %170 : i32 to vector<8x1xi32>
    %172 = arith.cmpi slt, %171, %4 : vector<8x1xi32>
    %173 = vector.shape_cast %172 : vector<8x1xi1> to vector<8x1xi1>
    %174 = vector.broadcast %173 : vector<8x1xi1> to vector<8x32xi1>
    %175 = arith.select %174, %169, %140 : vector<8x32xi1>, vector<8x32xf32>
    %176 = vector.shape_cast %172 : vector<8x1xi1> to vector<8x1xi1>
    %177 = vector.broadcast %176 : vector<8x1xi1> to vector<8x32xi1>
    %178 = arith.select %177, %167, %143 : vector<8x32xi1>, vector<8x32xf32>
    %cst_33 = arith.constant 0.000000e+00 : f32
    %179 = vector.shape_cast %172 : vector<8x1xi1> to vector<8x1xi1>
    %180 = vector.broadcast %179 : vector<8x1xi1> to vector<8x32xi1>
    %181 = vector.broadcast %cst_33 : f32 to vector<8x32xf32>
    %182 = arith.select %180, %169, %181 : vector<8x32xi1>, vector<8x32xf32>
    %c5 = arith.constant 5 : index
    %c0_34 = arith.constant 0 : index
    %c0_35 = arith.constant 0 : index
    %183 = vector.load %arg3[%c5, %c0_34, %c0_35] : memref<16x8x128xbf16, #tpu.memory_space<vmem>>, vector<1x8x128xbf16>
    %184 = vector.shape_cast %183 : vector<1x8x128xbf16> to vector<8x128xbf16>
    %185 = arith.extf %184 : vector<8x128xbf16> to vector<8x128xf32>
    %186 = arith.truncf %175 : vector<8x32xf32> to vector<8x32xbf16>
    %cst_36 = arith.constant dense<0.000000e+00> : vector<8x128xf32>
    %187 = tpu.matmul %186, %3, %cst_36 {dimension_numbers = #tpu.dot_dimension_numbers<[1], [0], [0], [1], [0, 0, 1, 1], [], []>} : vector<8x32xbf16>, vector<32x128xbf16>, vector<8x128xf32> -> vector<8x128xf32>
    %188 = arith.addf %185, %187 : vector<8x128xf32>
    %189 = vector.extract_strided_slice %188 {offsets = [0, 0], sizes = [8, 96], strides = [1, 1]} : vector<8x128xf32> to vector<8x96xf32>
    %190 = arith.negf %189 : vector<8x96xf32>
    %191 = math.exp %190 : vector<8x96xf32>
    %cst_37 = arith.constant 1.000000e+00 : f32
    %192 = vector.broadcast %cst_37 : f32 to vector<8x96xf32>
    %193 = arith.addf %192, %191 : vector<8x96xf32>
    %194 = arith.divf %192, %193 : vector<8x96xf32>
    %195 = vector.extract_strided_slice %188 {offsets = [0, 96], sizes = [8, 32], strides = [1, 1]} : vector<8x128xf32> to vector<8x32xf32>
    %196 = math.tanh %195 : vector<8x32xf32>
    %197 = vector.extract_strided_slice %194 {offsets = [0, 0], sizes = [8, 32], strides = [1, 1]} : vector<8x96xf32> to vector<8x32xf32>
    %198 = vector.extract_strided_slice %194 {offsets = [0, 32], sizes = [8, 32], strides = [1, 1]} : vector<8x96xf32> to vector<8x32xf32>
    %199 = vector.extract_strided_slice %194 {offsets = [0, 64], sizes = [8, 32], strides = [1, 1]} : vector<8x96xf32> to vector<8x32xf32>
    %200 = arith.mulf %198, %178 : vector<8x32xf32>
    %201 = arith.mulf %197, %196 : vector<8x32xf32>
    %202 = arith.addf %200, %201 : vector<8x32xf32>
    %203 = math.tanh %202 : vector<8x32xf32>
    %204 = arith.mulf %199, %203 : vector<8x32xf32>
    %c5_i32 = arith.constant 5 : i32
    %205 = arith.addi %5, %c5_i32 : i32
    %206 = vector.broadcast %205 : i32 to vector<8x1xi32>
    %207 = arith.cmpi slt, %206, %4 : vector<8x1xi32>
    %208 = vector.shape_cast %207 : vector<8x1xi1> to vector<8x1xi1>
    %209 = vector.broadcast %208 : vector<8x1xi1> to vector<8x32xi1>
    %210 = arith.select %209, %204, %175 : vector<8x32xi1>, vector<8x32xf32>
    %211 = vector.shape_cast %207 : vector<8x1xi1> to vector<8x1xi1>
    %212 = vector.broadcast %211 : vector<8x1xi1> to vector<8x32xi1>
    %213 = arith.select %212, %202, %178 : vector<8x32xi1>, vector<8x32xf32>
    %cst_38 = arith.constant 0.000000e+00 : f32
    %214 = vector.shape_cast %207 : vector<8x1xi1> to vector<8x1xi1>
    %215 = vector.broadcast %214 : vector<8x1xi1> to vector<8x32xi1>
    %216 = vector.broadcast %cst_38 : f32 to vector<8x32xf32>
    %217 = arith.select %215, %204, %216 : vector<8x32xi1>, vector<8x32xf32>
    %c6 = arith.constant 6 : index
    %c0_39 = arith.constant 0 : index
    %c0_40 = arith.constant 0 : index
    %218 = vector.load %arg3[%c6, %c0_39, %c0_40] : memref<16x8x128xbf16, #tpu.memory_space<vmem>>, vector<1x8x128xbf16>
    %219 = vector.shape_cast %218 : vector<1x8x128xbf16> to vector<8x128xbf16>
    %220 = arith.extf %219 : vector<8x128xbf16> to vector<8x128xf32>
    %221 = arith.truncf %210 : vector<8x32xf32> to vector<8x32xbf16>
    %cst_41 = arith.constant dense<0.000000e+00> : vector<8x128xf32>
    %222 = tpu.matmul %221, %3, %cst_41 {dimension_numbers = #tpu.dot_dimension_numbers<[1], [0], [0], [1], [0, 0, 1, 1], [], []>} : vector<8x32xbf16>, vector<32x128xbf16>, vector<8x128xf32> -> vector<8x128xf32>
    %223 = arith.addf %220, %222 : vector<8x128xf32>
    %224 = vector.extract_strided_slice %223 {offsets = [0, 0], sizes = [8, 96], strides = [1, 1]} : vector<8x128xf32> to vector<8x96xf32>
    %225 = arith.negf %224 : vector<8x96xf32>
    %226 = math.exp %225 : vector<8x96xf32>
    %cst_42 = arith.constant 1.000000e+00 : f32
    %227 = vector.broadcast %cst_42 : f32 to vector<8x96xf32>
    %228 = arith.addf %227, %226 : vector<8x96xf32>
    %229 = arith.divf %227, %228 : vector<8x96xf32>
    %230 = vector.extract_strided_slice %223 {offsets = [0, 96], sizes = [8, 32], strides = [1, 1]} : vector<8x128xf32> to vector<8x32xf32>
    %231 = math.tanh %230 : vector<8x32xf32>
    %232 = vector.extract_strided_slice %229 {offsets = [0, 0], sizes = [8, 32], strides = [1, 1]} : vector<8x96xf32> to vector<8x32xf32>
    %233 = vector.extract_strided_slice %229 {offsets = [0, 32], sizes = [8, 32], strides = [1, 1]} : vector<8x96xf32> to vector<8x32xf32>
    %234 = vector.extract_strided_slice %229 {offsets = [0, 64], sizes = [8, 32], strides = [1, 1]} : vector<8x96xf32> to vector<8x32xf32>
    %235 = arith.mulf %233, %213 : vector<8x32xf32>
    %236 = arith.mulf %232, %231 : vector<8x32xf32>
    %237 = arith.addf %235, %236 : vector<8x32xf32>
    %238 = math.tanh %237 : vector<8x32xf32>
    %239 = arith.mulf %234, %238 : vector<8x32xf32>
    %c6_i32 = arith.constant 6 : i32
    %240 = arith.addi %5, %c6_i32 : i32
    %241 = vector.broadcast %240 : i32 to vector<8x1xi32>
    %242 = arith.cmpi slt, %241, %4 : vector<8x1xi32>
    %243 = vector.shape_cast %242 : vector<8x1xi1> to vector<8x1xi1>
    %244 = vector.broadcast %243 : vector<8x1xi1> to vector<8x32xi1>
    %245 = arith.select %244, %239, %210 : vector<8x32xi1>, vector<8x32xf32>
    %246 = vector.shape_cast %242 : vector<8x1xi1> to vector<8x1xi1>
    %247 = vector.broadcast %246 : vector<8x1xi1> to vector<8x32xi1>
    %248 = arith.select %247, %237, %213 : vector<8x32xi1>, vector<8x32xf32>
    %cst_43 = arith.constant 0.000000e+00 : f32
    %249 = vector.shape_cast %242 : vector<8x1xi1> to vector<8x1xi1>
    %250 = vector.broadcast %249 : vector<8x1xi1> to vector<8x32xi1>
    %251 = vector.broadcast %cst_43 : f32 to vector<8x32xf32>
    %252 = arith.select %250, %239, %251 : vector<8x32xi1>, vector<8x32xf32>
    %c7 = arith.constant 7 : index
    %c0_44 = arith.constant 0 : index
    %c0_45 = arith.constant 0 : index
    %253 = vector.load %arg3[%c7, %c0_44, %c0_45] : memref<16x8x128xbf16, #tpu.memory_space<vmem>>, vector<1x8x128xbf16>
    %254 = vector.shape_cast %253 : vector<1x8x128xbf16> to vector<8x128xbf16>
    %255 = arith.extf %254 : vector<8x128xbf16> to vector<8x128xf32>
    %256 = arith.truncf %245 : vector<8x32xf32> to vector<8x32xbf16>
    %cst_46 = arith.constant dense<0.000000e+00> : vector<8x128xf32>
    %257 = tpu.matmul %256, %3, %cst_46 {dimension_numbers = #tpu.dot_dimension_numbers<[1], [0], [0], [1], [0, 0, 1, 1], [], []>} : vector<8x32xbf16>, vector<32x128xbf16>, vector<8x128xf32> -> vector<8x128xf32>
    %258 = arith.addf %255, %257 : vector<8x128xf32>
    %259 = vector.extract_strided_slice %258 {offsets = [0, 0], sizes = [8, 96], strides = [1, 1]} : vector<8x128xf32> to vector<8x96xf32>
    %260 = arith.negf %259 : vector<8x96xf32>
    %261 = math.exp %260 : vector<8x96xf32>
    %cst_47 = arith.constant 1.000000e+00 : f32
    %262 = vector.broadcast %cst_47 : f32 to vector<8x96xf32>
    %263 = arith.addf %262, %261 : vector<8x96xf32>
    %264 = arith.divf %262, %263 : vector<8x96xf32>
    %265 = vector.extract_strided_slice %258 {offsets = [0, 96], sizes = [8, 32], strides = [1, 1]} : vector<8x128xf32> to vector<8x32xf32>
    %266 = math.tanh %265 : vector<8x32xf32>
    %267 = vector.extract_strided_slice %264 {offsets = [0, 0], sizes = [8, 32], strides = [1, 1]} : vector<8x96xf32> to vector<8x32xf32>
    %268 = vector.extract_strided_slice %264 {offsets = [0, 32], sizes = [8, 32], strides = [1, 1]} : vector<8x96xf32> to vector<8x32xf32>
    %269 = vector.extract_strided_slice %264 {offsets = [0, 64], sizes = [8, 32], strides = [1, 1]} : vector<8x96xf32> to vector<8x32xf32>
    %270 = arith.mulf %268, %248 : vector<8x32xf32>
    %271 = arith.mulf %267, %266 : vector<8x32xf32>
    %272 = arith.addf %270, %271 : vector<8x32xf32>
    %273 = math.tanh %272 : vector<8x32xf32>
    %274 = arith.mulf %269, %273 : vector<8x32xf32>
    %c7_i32 = arith.constant 7 : i32
    %275 = arith.addi %5, %c7_i32 : i32
    %276 = vector.broadcast %275 : i32 to vector<8x1xi32>
    %277 = arith.cmpi slt, %276, %4 : vector<8x1xi32>
    %278 = vector.shape_cast %277 : vector<8x1xi1> to vector<8x1xi1>
    %279 = vector.broadcast %278 : vector<8x1xi1> to vector<8x32xi1>
    %280 = arith.select %279, %274, %245 : vector<8x32xi1>, vector<8x32xf32>
    %281 = vector.shape_cast %277 : vector<8x1xi1> to vector<8x1xi1>
    %282 = vector.broadcast %281 : vector<8x1xi1> to vector<8x32xi1>
    %283 = arith.select %282, %272, %248 : vector<8x32xi1>, vector<8x32xf32>
    %cst_48 = arith.constant 0.000000e+00 : f32
    %284 = vector.shape_cast %277 : vector<8x1xi1> to vector<8x1xi1>
    %285 = vector.broadcast %284 : vector<8x1xi1> to vector<8x32xi1>
    %286 = vector.broadcast %cst_48 : f32 to vector<8x32xf32>
    %287 = arith.select %285, %274, %286 : vector<8x32xi1>, vector<8x32xf32>
    %c8 = arith.constant 8 : index
    %c0_49 = arith.constant 0 : index
    %c0_50 = arith.constant 0 : index
    %288 = vector.load %arg3[%c8, %c0_49, %c0_50] : memref<16x8x128xbf16, #tpu.memory_space<vmem>>, vector<1x8x128xbf16>
    %289 = vector.shape_cast %288 : vector<1x8x128xbf16> to vector<8x128xbf16>
    %290 = arith.extf %289 : vector<8x128xbf16> to vector<8x128xf32>
    %291 = arith.truncf %280 : vector<8x32xf32> to vector<8x32xbf16>
    %cst_51 = arith.constant dense<0.000000e+00> : vector<8x128xf32>
    %292 = tpu.matmul %291, %3, %cst_51 {dimension_numbers = #tpu.dot_dimension_numbers<[1], [0], [0], [1], [0, 0, 1, 1], [], []>} : vector<8x32xbf16>, vector<32x128xbf16>, vector<8x128xf32> -> vector<8x128xf32>
    %293 = arith.addf %290, %292 : vector<8x128xf32>
    %294 = vector.extract_strided_slice %293 {offsets = [0, 0], sizes = [8, 96], strides = [1, 1]} : vector<8x128xf32> to vector<8x96xf32>
    %295 = arith.negf %294 : vector<8x96xf32>
    %296 = math.exp %295 : vector<8x96xf32>
    %cst_52 = arith.constant 1.000000e+00 : f32
    %297 = vector.broadcast %cst_52 : f32 to vector<8x96xf32>
    %298 = arith.addf %297, %296 : vector<8x96xf32>
    %299 = arith.divf %297, %298 : vector<8x96xf32>
    %300 = vector.extract_strided_slice %293 {offsets = [0, 96], sizes = [8, 32], strides = [1, 1]} : vector<8x128xf32> to vector<8x32xf32>
    %301 = math.tanh %300 : vector<8x32xf32>
    %302 = vector.extract_strided_slice %299 {offsets = [0, 0], sizes = [8, 32], strides = [1, 1]} : vector<8x96xf32> to vector<8x32xf32>
    %303 = vector.extract_strided_slice %299 {offsets = [0, 32], sizes = [8, 32], strides = [1, 1]} : vector<8x96xf32> to vector<8x32xf32>
    %304 = vector.extract_strided_slice %299 {offsets = [0, 64], sizes = [8, 32], strides = [1, 1]} : vector<8x96xf32> to vector<8x32xf32>
    %305 = arith.mulf %303, %283 : vector<8x32xf32>
    %306 = arith.mulf %302, %301 : vector<8x32xf32>
    %307 = arith.addf %305, %306 : vector<8x32xf32>
    %308 = math.tanh %307 : vector<8x32xf32>
    %309 = arith.mulf %304, %308 : vector<8x32xf32>
    %c8_i32 = arith.constant 8 : i32
    %310 = arith.addi %5, %c8_i32 : i32
    %311 = vector.broadcast %310 : i32 to vector<8x1xi32>
    %312 = arith.cmpi slt, %311, %4 : vector<8x1xi32>
    %313 = vector.shape_cast %312 : vector<8x1xi1> to vector<8x1xi1>
    %314 = vector.broadcast %313 : vector<8x1xi1> to vector<8x32xi1>
    %315 = arith.select %314, %309, %280 : vector<8x32xi1>, vector<8x32xf32>
    %316 = vector.shape_cast %312 : vector<8x1xi1> to vector<8x1xi1>
    %317 = vector.broadcast %316 : vector<8x1xi1> to vector<8x32xi1>
    %318 = arith.select %317, %307, %283 : vector<8x32xi1>, vector<8x32xf32>
    %cst_53 = arith.constant 0.000000e+00 : f32
    %319 = vector.shape_cast %312 : vector<8x1xi1> to vector<8x1xi1>
    %320 = vector.broadcast %319 : vector<8x1xi1> to vector<8x32xi1>
    %321 = vector.broadcast %cst_53 : f32 to vector<8x32xf32>
    %322 = arith.select %320, %309, %321 : vector<8x32xi1>, vector<8x32xf32>
    %c9 = arith.constant 9 : index
    %c0_54 = arith.constant 0 : index
    %c0_55 = arith.constant 0 : index
    %323 = vector.load %arg3[%c9, %c0_54, %c0_55] : memref<16x8x128xbf16, #tpu.memory_space<vmem>>, vector<1x8x128xbf16>
    %324 = vector.shape_cast %323 : vector<1x8x128xbf16> to vector<8x128xbf16>
    %325 = arith.extf %324 : vector<8x128xbf16> to vector<8x128xf32>
    %326 = arith.truncf %315 : vector<8x32xf32> to vector<8x32xbf16>
    %cst_56 = arith.constant dense<0.000000e+00> : vector<8x128xf32>
    %327 = tpu.matmul %326, %3, %cst_56 {dimension_numbers = #tpu.dot_dimension_numbers<[1], [0], [0], [1], [0, 0, 1, 1], [], []>} : vector<8x32xbf16>, vector<32x128xbf16>, vector<8x128xf32> -> vector<8x128xf32>
    %328 = arith.addf %325, %327 : vector<8x128xf32>
    %329 = vector.extract_strided_slice %328 {offsets = [0, 0], sizes = [8, 96], strides = [1, 1]} : vector<8x128xf32> to vector<8x96xf32>
    %330 = arith.negf %329 : vector<8x96xf32>
    %331 = math.exp %330 : vector<8x96xf32>
    %cst_57 = arith.constant 1.000000e+00 : f32
    %332 = vector.broadcast %cst_57 : f32 to vector<8x96xf32>
    %333 = arith.addf %332, %331 : vector<8x96xf32>
    %334 = arith.divf %332, %333 : vector<8x96xf32>
    %335 = vector.extract_strided_slice %328 {offsets = [0, 96], sizes = [8, 32], strides = [1, 1]} : vector<8x128xf32> to vector<8x32xf32>
    %336 = math.tanh %335 : vector<8x32xf32>
    %337 = vector.extract_strided_slice %334 {offsets = [0, 0], sizes = [8, 32], strides = [1, 1]} : vector<8x96xf32> to vector<8x32xf32>
    %338 = vector.extract_strided_slice %334 {offsets = [0, 32], sizes = [8, 32], strides = [1, 1]} : vector<8x96xf32> to vector<8x32xf32>
    %339 = vector.extract_strided_slice %334 {offsets = [0, 64], sizes = [8, 32], strides = [1, 1]} : vector<8x96xf32> to vector<8x32xf32>
    %340 = arith.mulf %338, %318 : vector<8x32xf32>
    %341 = arith.mulf %337, %336 : vector<8x32xf32>
    %342 = arith.addf %340, %341 : vector<8x32xf32>
    %343 = math.tanh %342 : vector<8x32xf32>
    %344 = arith.mulf %339, %343 : vector<8x32xf32>
    %c9_i32 = arith.constant 9 : i32
    %345 = arith.addi %5, %c9_i32 : i32
    %346 = vector.broadcast %345 : i32 to vector<8x1xi32>
    %347 = arith.cmpi slt, %346, %4 : vector<8x1xi32>
    %348 = vector.shape_cast %347 : vector<8x1xi1> to vector<8x1xi1>
    %349 = vector.broadcast %348 : vector<8x1xi1> to vector<8x32xi1>
    %350 = arith.select %349, %344, %315 : vector<8x32xi1>, vector<8x32xf32>
    %351 = vector.shape_cast %347 : vector<8x1xi1> to vector<8x1xi1>
    %352 = vector.broadcast %351 : vector<8x1xi1> to vector<8x32xi1>
    %353 = arith.select %352, %342, %318 : vector<8x32xi1>, vector<8x32xf32>
    %cst_58 = arith.constant 0.000000e+00 : f32
    %354 = vector.shape_cast %347 : vector<8x1xi1> to vector<8x1xi1>
    %355 = vector.broadcast %354 : vector<8x1xi1> to vector<8x32xi1>
    %356 = vector.broadcast %cst_58 : f32 to vector<8x32xf32>
    %357 = arith.select %355, %344, %356 : vector<8x32xi1>, vector<8x32xf32>
    %c10 = arith.constant 10 : index
    %c0_59 = arith.constant 0 : index
    %c0_60 = arith.constant 0 : index
    %358 = vector.load %arg3[%c10, %c0_59, %c0_60] : memref<16x8x128xbf16, #tpu.memory_space<vmem>>, vector<1x8x128xbf16>
    %359 = vector.shape_cast %358 : vector<1x8x128xbf16> to vector<8x128xbf16>
    %360 = arith.extf %359 : vector<8x128xbf16> to vector<8x128xf32>
    %361 = arith.truncf %350 : vector<8x32xf32> to vector<8x32xbf16>
    %cst_61 = arith.constant dense<0.000000e+00> : vector<8x128xf32>
    %362 = tpu.matmul %361, %3, %cst_61 {dimension_numbers = #tpu.dot_dimension_numbers<[1], [0], [0], [1], [0, 0, 1, 1], [], []>} : vector<8x32xbf16>, vector<32x128xbf16>, vector<8x128xf32> -> vector<8x128xf32>
    %363 = arith.addf %360, %362 : vector<8x128xf32>
    %364 = vector.extract_strided_slice %363 {offsets = [0, 0], sizes = [8, 96], strides = [1, 1]} : vector<8x128xf32> to vector<8x96xf32>
    %365 = arith.negf %364 : vector<8x96xf32>
    %366 = math.exp %365 : vector<8x96xf32>
    %cst_62 = arith.constant 1.000000e+00 : f32
    %367 = vector.broadcast %cst_62 : f32 to vector<8x96xf32>
    %368 = arith.addf %367, %366 : vector<8x96xf32>
    %369 = arith.divf %367, %368 : vector<8x96xf32>
    %370 = vector.extract_strided_slice %363 {offsets = [0, 96], sizes = [8, 32], strides = [1, 1]} : vector<8x128xf32> to vector<8x32xf32>
    %371 = math.tanh %370 : vector<8x32xf32>
    %372 = vector.extract_strided_slice %369 {offsets = [0, 0], sizes = [8, 32], strides = [1, 1]} : vector<8x96xf32> to vector<8x32xf32>
    %373 = vector.extract_strided_slice %369 {offsets = [0, 32], sizes = [8, 32], strides = [1, 1]} : vector<8x96xf32> to vector<8x32xf32>
    %374 = vector.extract_strided_slice %369 {offsets = [0, 64], sizes = [8, 32], strides = [1, 1]} : vector<8x96xf32> to vector<8x32xf32>
    %375 = arith.mulf %373, %353 : vector<8x32xf32>
    %376 = arith.mulf %372, %371 : vector<8x32xf32>
    %377 = arith.addf %375, %376 : vector<8x32xf32>
    %378 = math.tanh %377 : vector<8x32xf32>
    %379 = arith.mulf %374, %378 : vector<8x32xf32>
    %c10_i32 = arith.constant 10 : i32
    %380 = arith.addi %5, %c10_i32 : i32
    %381 = vector.broadcast %380 : i32 to vector<8x1xi32>
    %382 = arith.cmpi slt, %381, %4 : vector<8x1xi32>
    %383 = vector.shape_cast %382 : vector<8x1xi1> to vector<8x1xi1>
    %384 = vector.broadcast %383 : vector<8x1xi1> to vector<8x32xi1>
    %385 = arith.select %384, %379, %350 : vector<8x32xi1>, vector<8x32xf32>
    %386 = vector.shape_cast %382 : vector<8x1xi1> to vector<8x1xi1>
    %387 = vector.broadcast %386 : vector<8x1xi1> to vector<8x32xi1>
    %388 = arith.select %387, %377, %353 : vector<8x32xi1>, vector<8x32xf32>
    %cst_63 = arith.constant 0.000000e+00 : f32
    %389 = vector.shape_cast %382 : vector<8x1xi1> to vector<8x1xi1>
    %390 = vector.broadcast %389 : vector<8x1xi1> to vector<8x32xi1>
    %391 = vector.broadcast %cst_63 : f32 to vector<8x32xf32>
    %392 = arith.select %390, %379, %391 : vector<8x32xi1>, vector<8x32xf32>
    %c11 = arith.constant 11 : index
    %c0_64 = arith.constant 0 : index
    %c0_65 = arith.constant 0 : index
    %393 = vector.load %arg3[%c11, %c0_64, %c0_65] : memref<16x8x128xbf16, #tpu.memory_space<vmem>>, vector<1x8x128xbf16>
    %394 = vector.shape_cast %393 : vector<1x8x128xbf16> to vector<8x128xbf16>
    %395 = arith.extf %394 : vector<8x128xbf16> to vector<8x128xf32>
    %396 = arith.truncf %385 : vector<8x32xf32> to vector<8x32xbf16>
    %cst_66 = arith.constant dense<0.000000e+00> : vector<8x128xf32>
    %397 = tpu.matmul %396, %3, %cst_66 {dimension_numbers = #tpu.dot_dimension_numbers<[1], [0], [0], [1], [0, 0, 1, 1], [], []>} : vector<8x32xbf16>, vector<32x128xbf16>, vector<8x128xf32> -> vector<8x128xf32>
    %398 = arith.addf %395, %397 : vector<8x128xf32>
    %399 = vector.extract_strided_slice %398 {offsets = [0, 0], sizes = [8, 96], strides = [1, 1]} : vector<8x128xf32> to vector<8x96xf32>
    %400 = arith.negf %399 : vector<8x96xf32>
    %401 = math.exp %400 : vector<8x96xf32>
    %cst_67 = arith.constant 1.000000e+00 : f32
    %402 = vector.broadcast %cst_67 : f32 to vector<8x96xf32>
    %403 = arith.addf %402, %401 : vector<8x96xf32>
    %404 = arith.divf %402, %403 : vector<8x96xf32>
    %405 = vector.extract_strided_slice %398 {offsets = [0, 96], sizes = [8, 32], strides = [1, 1]} : vector<8x128xf32> to vector<8x32xf32>
    %406 = math.tanh %405 : vector<8x32xf32>
    %407 = vector.extract_strided_slice %404 {offsets = [0, 0], sizes = [8, 32], strides = [1, 1]} : vector<8x96xf32> to vector<8x32xf32>
    %408 = vector.extract_strided_slice %404 {offsets = [0, 32], sizes = [8, 32], strides = [1, 1]} : vector<8x96xf32> to vector<8x32xf32>
    %409 = vector.extract_strided_slice %404 {offsets = [0, 64], sizes = [8, 32], strides = [1, 1]} : vector<8x96xf32> to vector<8x32xf32>
    %410 = arith.mulf %408, %388 : vector<8x32xf32>
    %411 = arith.mulf %407, %406 : vector<8x32xf32>
    %412 = arith.addf %410, %411 : vector<8x32xf32>
    %413 = math.tanh %412 : vector<8x32xf32>
    %414 = arith.mulf %409, %413 : vector<8x32xf32>
    %c11_i32 = arith.constant 11 : i32
    %415 = arith.addi %5, %c11_i32 : i32
    %416 = vector.broadcast %415 : i32 to vector<8x1xi32>
    %417 = arith.cmpi slt, %416, %4 : vector<8x1xi32>
    %418 = vector.shape_cast %417 : vector<8x1xi1> to vector<8x1xi1>
    %419 = vector.broadcast %418 : vector<8x1xi1> to vector<8x32xi1>
    %420 = arith.select %419, %414, %385 : vector<8x32xi1>, vector<8x32xf32>
    %421 = vector.shape_cast %417 : vector<8x1xi1> to vector<8x1xi1>
    %422 = vector.broadcast %421 : vector<8x1xi1> to vector<8x32xi1>
    %423 = arith.select %422, %412, %388 : vector<8x32xi1>, vector<8x32xf32>
    %cst_68 = arith.constant 0.000000e+00 : f32
    %424 = vector.shape_cast %417 : vector<8x1xi1> to vector<8x1xi1>
    %425 = vector.broadcast %424 : vector<8x1xi1> to vector<8x32xi1>
    %426 = vector.broadcast %cst_68 : f32 to vector<8x32xf32>
    %427 = arith.select %425, %414, %426 : vector<8x32xi1>, vector<8x32xf32>
    %c12 = arith.constant 12 : index
    %c0_69 = arith.constant 0 : index
    %c0_70 = arith.constant 0 : index
    %428 = vector.load %arg3[%c12, %c0_69, %c0_70] : memref<16x8x128xbf16, #tpu.memory_space<vmem>>, vector<1x8x128xbf16>
    %429 = vector.shape_cast %428 : vector<1x8x128xbf16> to vector<8x128xbf16>
    %430 = arith.extf %429 : vector<8x128xbf16> to vector<8x128xf32>
    %431 = arith.truncf %420 : vector<8x32xf32> to vector<8x32xbf16>
    %cst_71 = arith.constant dense<0.000000e+00> : vector<8x128xf32>
    %432 = tpu.matmul %431, %3, %cst_71 {dimension_numbers = #tpu.dot_dimension_numbers<[1], [0], [0], [1], [0, 0, 1, 1], [], []>} : vector<8x32xbf16>, vector<32x128xbf16>, vector<8x128xf32> -> vector<8x128xf32>
    %433 = arith.addf %430, %432 : vector<8x128xf32>
    %434 = vector.extract_strided_slice %433 {offsets = [0, 0], sizes = [8, 96], strides = [1, 1]} : vector<8x128xf32> to vector<8x96xf32>
    %435 = arith.negf %434 : vector<8x96xf32>
    %436 = math.exp %435 : vector<8x96xf32>
    %cst_72 = arith.constant 1.000000e+00 : f32
    %437 = vector.broadcast %cst_72 : f32 to vector<8x96xf32>
    %438 = arith.addf %437, %436 : vector<8x96xf32>
    %439 = arith.divf %437, %438 : vector<8x96xf32>
    %440 = vector.extract_strided_slice %433 {offsets = [0, 96], sizes = [8, 32], strides = [1, 1]} : vector<8x128xf32> to vector<8x32xf32>
    %441 = math.tanh %440 : vector<8x32xf32>
    %442 = vector.extract_strided_slice %439 {offsets = [0, 0], sizes = [8, 32], strides = [1, 1]} : vector<8x96xf32> to vector<8x32xf32>
    %443 = vector.extract_strided_slice %439 {offsets = [0, 32], sizes = [8, 32], strides = [1, 1]} : vector<8x96xf32> to vector<8x32xf32>
    %444 = vector.extract_strided_slice %439 {offsets = [0, 64], sizes = [8, 32], strides = [1, 1]} : vector<8x96xf32> to vector<8x32xf32>
    %445 = arith.mulf %443, %423 : vector<8x32xf32>
    %446 = arith.mulf %442, %441 : vector<8x32xf32>
    %447 = arith.addf %445, %446 : vector<8x32xf32>
    %448 = math.tanh %447 : vector<8x32xf32>
    %449 = arith.mulf %444, %448 : vector<8x32xf32>
    %c12_i32 = arith.constant 12 : i32
    %450 = arith.addi %5, %c12_i32 : i32
    %451 = vector.broadcast %450 : i32 to vector<8x1xi32>
    %452 = arith.cmpi slt, %451, %4 : vector<8x1xi32>
    %453 = vector.shape_cast %452 : vector<8x1xi1> to vector<8x1xi1>
    %454 = vector.broadcast %453 : vector<8x1xi1> to vector<8x32xi1>
    %455 = arith.select %454, %449, %420 : vector<8x32xi1>, vector<8x32xf32>
    %456 = vector.shape_cast %452 : vector<8x1xi1> to vector<8x1xi1>
    %457 = vector.broadcast %456 : vector<8x1xi1> to vector<8x32xi1>
    %458 = arith.select %457, %447, %423 : vector<8x32xi1>, vector<8x32xf32>
    %cst_73 = arith.constant 0.000000e+00 : f32
    %459 = vector.shape_cast %452 : vector<8x1xi1> to vector<8x1xi1>
    %460 = vector.broadcast %459 : vector<8x1xi1> to vector<8x32xi1>
    %461 = vector.broadcast %cst_73 : f32 to vector<8x32xf32>
    %462 = arith.select %460, %449, %461 : vector<8x32xi1>, vector<8x32xf32>
    %c13 = arith.constant 13 : index
    %c0_74 = arith.constant 0 : index
    %c0_75 = arith.constant 0 : index
    %463 = vector.load %arg3[%c13, %c0_74, %c0_75] : memref<16x8x128xbf16, #tpu.memory_space<vmem>>, vector<1x8x128xbf16>
    %464 = vector.shape_cast %463 : vector<1x8x128xbf16> to vector<8x128xbf16>
    %465 = arith.extf %464 : vector<8x128xbf16> to vector<8x128xf32>
    %466 = arith.truncf %455 : vector<8x32xf32> to vector<8x32xbf16>
    %cst_76 = arith.constant dense<0.000000e+00> : vector<8x128xf32>
    %467 = tpu.matmul %466, %3, %cst_76 {dimension_numbers = #tpu.dot_dimension_numbers<[1], [0], [0], [1], [0, 0, 1, 1], [], []>} : vector<8x32xbf16>, vector<32x128xbf16>, vector<8x128xf32> -> vector<8x128xf32>
    %468 = arith.addf %465, %467 : vector<8x128xf32>
    %469 = vector.extract_strided_slice %468 {offsets = [0, 0], sizes = [8, 96], strides = [1, 1]} : vector<8x128xf32> to vector<8x96xf32>
    %470 = arith.negf %469 : vector<8x96xf32>
    %471 = math.exp %470 : vector<8x96xf32>
    %cst_77 = arith.constant 1.000000e+00 : f32
    %472 = vector.broadcast %cst_77 : f32 to vector<8x96xf32>
    %473 = arith.addf %472, %471 : vector<8x96xf32>
    %474 = arith.divf %472, %473 : vector<8x96xf32>
    %475 = vector.extract_strided_slice %468 {offsets = [0, 96], sizes = [8, 32], strides = [1, 1]} : vector<8x128xf32> to vector<8x32xf32>
    %476 = math.tanh %475 : vector<8x32xf32>
    %477 = vector.extract_strided_slice %474 {offsets = [0, 0], sizes = [8, 32], strides = [1, 1]} : vector<8x96xf32> to vector<8x32xf32>
    %478 = vector.extract_strided_slice %474 {offsets = [0, 32], sizes = [8, 32], strides = [1, 1]} : vector<8x96xf32> to vector<8x32xf32>
    %479 = vector.extract_strided_slice %474 {offsets = [0, 64], sizes = [8, 32], strides = [1, 1]} : vector<8x96xf32> to vector<8x32xf32>
    %480 = arith.mulf %478, %458 : vector<8x32xf32>
    %481 = arith.mulf %477, %476 : vector<8x32xf32>
    %482 = arith.addf %480, %481 : vector<8x32xf32>
    %483 = math.tanh %482 : vector<8x32xf32>
    %484 = arith.mulf %479, %483 : vector<8x32xf32>
    %c13_i32 = arith.constant 13 : i32
    %485 = arith.addi %5, %c13_i32 : i32
    %486 = vector.broadcast %485 : i32 to vector<8x1xi32>
    %487 = arith.cmpi slt, %486, %4 : vector<8x1xi32>
    %488 = vector.shape_cast %487 : vector<8x1xi1> to vector<8x1xi1>
    %489 = vector.broadcast %488 : vector<8x1xi1> to vector<8x32xi1>
    %490 = arith.select %489, %484, %455 : vector<8x32xi1>, vector<8x32xf32>
    %491 = vector.shape_cast %487 : vector<8x1xi1> to vector<8x1xi1>
    %492 = vector.broadcast %491 : vector<8x1xi1> to vector<8x32xi1>
    %493 = arith.select %492, %482, %458 : vector<8x32xi1>, vector<8x32xf32>
    %cst_78 = arith.constant 0.000000e+00 : f32
    %494 = vector.shape_cast %487 : vector<8x1xi1> to vector<8x1xi1>
    %495 = vector.broadcast %494 : vector<8x1xi1> to vector<8x32xi1>
    %496 = vector.broadcast %cst_78 : f32 to vector<8x32xf32>
    %497 = arith.select %495, %484, %496 : vector<8x32xi1>, vector<8x32xf32>
    %c14 = arith.constant 14 : index
    %c0_79 = arith.constant 0 : index
    %c0_80 = arith.constant 0 : index
    %498 = vector.load %arg3[%c14, %c0_79, %c0_80] : memref<16x8x128xbf16, #tpu.memory_space<vmem>>, vector<1x8x128xbf16>
    %499 = vector.shape_cast %498 : vector<1x8x128xbf16> to vector<8x128xbf16>
    %500 = arith.extf %499 : vector<8x128xbf16> to vector<8x128xf32>
    %501 = arith.truncf %490 : vector<8x32xf32> to vector<8x32xbf16>
    %cst_81 = arith.constant dense<0.000000e+00> : vector<8x128xf32>
    %502 = tpu.matmul %501, %3, %cst_81 {dimension_numbers = #tpu.dot_dimension_numbers<[1], [0], [0], [1], [0, 0, 1, 1], [], []>} : vector<8x32xbf16>, vector<32x128xbf16>, vector<8x128xf32> -> vector<8x128xf32>
    %503 = arith.addf %500, %502 : vector<8x128xf32>
    %504 = vector.extract_strided_slice %503 {offsets = [0, 0], sizes = [8, 96], strides = [1, 1]} : vector<8x128xf32> to vector<8x96xf32>
    %505 = arith.negf %504 : vector<8x96xf32>
    %506 = math.exp %505 : vector<8x96xf32>
    %cst_82 = arith.constant 1.000000e+00 : f32
    %507 = vector.broadcast %cst_82 : f32 to vector<8x96xf32>
    %508 = arith.addf %507, %506 : vector<8x96xf32>
    %509 = arith.divf %507, %508 : vector<8x96xf32>
    %510 = vector.extract_strided_slice %503 {offsets = [0, 96], sizes = [8, 32], strides = [1, 1]} : vector<8x128xf32> to vector<8x32xf32>
    %511 = math.tanh %510 : vector<8x32xf32>
    %512 = vector.extract_strided_slice %509 {offsets = [0, 0], sizes = [8, 32], strides = [1, 1]} : vector<8x96xf32> to vector<8x32xf32>
    %513 = vector.extract_strided_slice %509 {offsets = [0, 32], sizes = [8, 32], strides = [1, 1]} : vector<8x96xf32> to vector<8x32xf32>
    %514 = vector.extract_strided_slice %509 {offsets = [0, 64], sizes = [8, 32], strides = [1, 1]} : vector<8x96xf32> to vector<8x32xf32>
    %515 = arith.mulf %513, %493 : vector<8x32xf32>
    %516 = arith.mulf %512, %511 : vector<8x32xf32>
    %517 = arith.addf %515, %516 : vector<8x32xf32>
    %518 = math.tanh %517 : vector<8x32xf32>
    %519 = arith.mulf %514, %518 : vector<8x32xf32>
    %c14_i32 = arith.constant 14 : i32
    %520 = arith.addi %5, %c14_i32 : i32
    %521 = vector.broadcast %520 : i32 to vector<8x1xi32>
    %522 = arith.cmpi slt, %521, %4 : vector<8x1xi32>
    %523 = vector.shape_cast %522 : vector<8x1xi1> to vector<8x1xi1>
    %524 = vector.broadcast %523 : vector<8x1xi1> to vector<8x32xi1>
    %525 = arith.select %524, %519, %490 : vector<8x32xi1>, vector<8x32xf32>
    %526 = vector.shape_cast %522 : vector<8x1xi1> to vector<8x1xi1>
    %527 = vector.broadcast %526 : vector<8x1xi1> to vector<8x32xi1>
    %528 = arith.select %527, %517, %493 : vector<8x32xi1>, vector<8x32xf32>
    %cst_83 = arith.constant 0.000000e+00 : f32
    %529 = vector.shape_cast %522 : vector<8x1xi1> to vector<8x1xi1>
    %530 = vector.broadcast %529 : vector<8x1xi1> to vector<8x32xi1>
    %531 = vector.broadcast %cst_83 : f32 to vector<8x32xf32>
    %532 = arith.select %530, %519, %531 : vector<8x32xi1>, vector<8x32xf32>
    %c15 = arith.constant 15 : index
    %c0_84 = arith.constant 0 : index
    %c0_85 = arith.constant 0 : index
    %533 = vector.load %arg3[%c15, %c0_84, %c0_85] : memref<16x8x128xbf16, #tpu.memory_space<vmem>>, vector<1x8x128xbf16>
    %534 = vector.shape_cast %533 : vector<1x8x128xbf16> to vector<8x128xbf16>
    %535 = arith.extf %534 : vector<8x128xbf16> to vector<8x128xf32>
    %536 = arith.truncf %525 : vector<8x32xf32> to vector<8x32xbf16>
    %cst_86 = arith.constant dense<0.000000e+00> : vector<8x128xf32>
    %537 = tpu.matmul %536, %3, %cst_86 {dimension_numbers = #tpu.dot_dimension_numbers<[1], [0], [0], [1], [0, 0, 1, 1], [], []>} : vector<8x32xbf16>, vector<32x128xbf16>, vector<8x128xf32> -> vector<8x128xf32>
    %538 = arith.addf %535, %537 : vector<8x128xf32>
    %539 = vector.extract_strided_slice %538 {offsets = [0, 0], sizes = [8, 96], strides = [1, 1]} : vector<8x128xf32> to vector<8x96xf32>
    %540 = arith.negf %539 : vector<8x96xf32>
    %541 = math.exp %540 : vector<8x96xf32>
    %cst_87 = arith.constant 1.000000e+00 : f32
    %542 = vector.broadcast %cst_87 : f32 to vector<8x96xf32>
    %543 = arith.addf %542, %541 : vector<8x96xf32>
    %544 = arith.divf %542, %543 : vector<8x96xf32>
    %545 = vector.extract_strided_slice %538 {offsets = [0, 96], sizes = [8, 32], strides = [1, 1]} : vector<8x128xf32> to vector<8x32xf32>
    %546 = math.tanh %545 : vector<8x32xf32>
    %547 = vector.extract_strided_slice %544 {offsets = [0, 0], sizes = [8, 32], strides = [1, 1]} : vector<8x96xf32> to vector<8x32xf32>
    %548 = vector.extract_strided_slice %544 {offsets = [0, 32], sizes = [8, 32], strides = [1, 1]} : vector<8x96xf32> to vector<8x32xf32>
    %549 = vector.extract_strided_slice %544 {offsets = [0, 64], sizes = [8, 32], strides = [1, 1]} : vector<8x96xf32> to vector<8x32xf32>
    %550 = arith.mulf %548, %528 : vector<8x32xf32>
    %551 = arith.mulf %547, %546 : vector<8x32xf32>
    %552 = arith.addf %550, %551 : vector<8x32xf32>
    %553 = math.tanh %552 : vector<8x32xf32>
    %554 = arith.mulf %549, %553 : vector<8x32xf32>
    %c15_i32 = arith.constant 15 : i32
    %555 = arith.addi %5, %c15_i32 : i32
    %556 = vector.broadcast %555 : i32 to vector<8x1xi32>
    %557 = arith.cmpi slt, %556, %4 : vector<8x1xi32>
    %558 = vector.shape_cast %557 : vector<8x1xi1> to vector<8x1xi1>
    %559 = vector.broadcast %558 : vector<8x1xi1> to vector<8x32xi1>
    %560 = arith.select %559, %554, %525 : vector<8x32xi1>, vector<8x32xf32>
    %561 = vector.shape_cast %557 : vector<8x1xi1> to vector<8x1xi1>
    %562 = vector.broadcast %561 : vector<8x1xi1> to vector<8x32xi1>
    %563 = arith.select %562, %552, %528 : vector<8x32xi1>, vector<8x32xf32>
    %cst_88 = arith.constant 0.000000e+00 : f32
    %564 = vector.shape_cast %557 : vector<8x1xi1> to vector<8x1xi1>
    %565 = vector.broadcast %564 : vector<8x1xi1> to vector<8x32xi1>
    %566 = vector.broadcast %cst_88 : f32 to vector<8x32xf32>
    %567 = arith.select %565, %554, %566 : vector<8x32xi1>, vector<8x32xf32>
    %568 = tpu.concatenate %42, %77, %112, %147, %182, %217, %252, %287, %322, %357, %392, %427, %462, %497, %532, %567 in 1 : vector<8x32xf32>, vector<8x32xf32>, vector<8x32xf32>, vector<8x32xf32>, vector<8x32xf32>, vector<8x32xf32>, vector<8x32xf32>, vector<8x32xf32>, vector<8x32xf32>, vector<8x32xf32>, vector<8x32xf32>, vector<8x32xf32>, vector<8x32xf32>, vector<8x32xf32>, vector<8x32xf32>, vector<8x32xf32> -> vector<8x512xf32>
    %c0_89 = arith.constant 0 : index
    %c0_90 = arith.constant 0 : index
    %c0_91 = arith.constant 0 : index
    %569 = vector.load %arg5[%c0_89, %c0_90, %c0_91] : memref<1x8x512xf32, #tpu.memory_space<vmem>>, vector<1x8x512xf32>
    %570 = vector.shape_cast %569 : vector<1x8x512xf32> to vector<8x512xf32>
    %571 = vector.shape_cast %568 : vector<8x512xf32> to vector<1x8x512xf32>
    tpu.vector_store %arg5[%c0_89, %c0_90, %c0_91], %571 {strides = array<i32>} : memref<1x8x512xf32, #tpu.memory_space<vmem>>, vector<1x8x512xf32>,
    %c0_92 = arith.constant 0 : index
    %c0_93 = arith.constant 0 : index
    %572 = vector.load %arg6[%c0_92, %c0_93] : memref<8x32xf32, #tpu.memory_space<vmem>>, vector<8x32xf32>
    tpu.vector_store %arg6[%c0_92, %c0_93], %560 {strides = array<i32>} : memref<8x32xf32, #tpu.memory_space<vmem>>, vector<8x32xf32>,
    %c0_94 = arith.constant 0 : index
    %c0_95 = arith.constant 0 : index
    %573 = vector.load %arg7[%c0_94, %c0_95] : memref<8x32xf32, #tpu.memory_space<vmem>>, vector<8x32xf32>
    tpu.vector_store %arg7[%c0_94, %c0_95], %563 {strides = array<i32>} : memref<8x32xf32, #tpu.memory_space<vmem>>, vector<8x32xf32>,
    return
  }
  func.func @transform_0(%arg0: i32, %arg1: i32) -> (i32, i32) {
    %c0_i32 = arith.constant 0 : i32
    %c0_i32_0 = arith.constant 0 : i32
    return %arg0, %c0_i32 : i32, i32
  }
  func.func @transform_1(%arg0: i32, %arg1: i32) -> (i32, i32, i32) {
    %c0_i32 = arith.constant 0 : i32
    %c0_i32_0 = arith.constant 0 : i32
    return %arg1, %arg0, %c0_i32 : i32, i32, i32
  }
  func.func @transform_2(%arg0: i32, %arg1: i32) -> (i32, i32) {
    %c0_i32 = arith.constant 0 : i32
    %c0_i32_0 = arith.constant 0 : i32
    %c0_i32_1 = arith.constant 0 : i32
    return %c0_i32, %c0_i32_0 : i32, i32
  }
  func.func @transform_3(%arg0: i32, %arg1: i32) -> (i32, i32, i32) {
    %c0_i32 = arith.constant 0 : i32
    %c0_i32_0 = arith.constant 0 : i32
    return %arg1, %arg0, %c0_i32 : i32, i32, i32
  }
  func.func @transform_4(%arg0: i32, %arg1: i32) -> (i32, i32) {
    %c0_i32 = arith.constant 0 : i32
    %c0_i32_0 = arith.constant 0 : i32
    return %arg0, %c0_i32 : i32, i32
  }
  func.func @transform_5(%arg0: i32, %arg1: i32) -> (i32, i32) {
    %c0_i32 = arith.constant 0 : i32
    %c0_i32_0 = arith.constant 0 : i32
    return %arg0, %c0_i32 : i32, i32
  }
}

module attributes {stable_mosaic.version = 11 : i64} {
  func.func @_lstm_kernel(%arg0: i32, %arg1: i32, %arg2: memref<8x1xi32, #tpu.memory_space<vmem>>, %arg3: memref<16x8x128xbf16, #tpu.memory_space<vmem>>, %arg4: memref<32x128xbf16, #tpu.memory_space<vmem>>, %arg5: memref<1x8x512xf32, #tpu.memory_space<vmem>>, %arg6: memref<8x32xf32, #tpu.memory_space<vmem>>, %arg7: memref<8x32xf32, #tpu.memory_space<vmem>>) attributes {dimension_semantics = [#tpu.dimension_semantics<parallel>, #tpu.dimension_semantics<arbitrary>], iteration_bounds = array<i64: 1, 1>, scalar_prefetch = 0 : i64, scratch_operands = 0 : i64, tpu.core_type = #tpu.core_type<tc>, window_params = [{transform_indices = @transform_0, window_bounds = array<i64: 8, 1>}, {transform_indices = @transform_1, window_bounds = array<i64: 16, 8, 128>}, {pipeline_mode = #tpu.pipeline_mode<synchronous>, transform_indices = @transform_2, window_bounds = array<i64: 32, 128>}, {transform_indices = @transform_3, window_bounds = array<i64: 1, 8, 512>}, {transform_indices = @transform_4, window_bounds = array<i64: 8, 32>}, {transform_indices = @transform_5, window_bounds = array<i64: 8, 32>}]} {
    %c0_i32 = arith.constant 0 : i32
    %0 = arith.cmpi eq, %arg1, %c0_i32 : i32
    %1 = arith.extui %0 : i1 to i32
    %c0_i32_0 = arith.constant 0 : i32
    %2 = arith.cmpi ne, %1, %c0_i32_0 : i32
    scf.if %2 {
      %cst_96 = arith.constant 0.000000e+00 : f32
      %574 = vector.broadcast %cst_96 : f32 to vector<8x32xf32>
      %c0_97 = arith.constant 0 : index
      %c0_98 = arith.constant 0 : index
      %575 = vector.load %arg6[%c0_97, %c0_98] : memref<8x32xf32, #tpu.memory_space<vmem>>, vector<8x32xf32>
      tpu.vector_store %arg6[%c0_97, %c0_98], %574 {strides = array<i32>} : memref<8x32xf32, #tpu.memory_space<vmem>>, vector<8x32xf32>,
      %cst_99 = arith.constant 0.000000e+00 : f32
      %576 = vector.broadcast %cst_99 : f32 to vector<8x32xf32>
      %c0_100 = arith.constant 0 : index
      %c0_101 = arith.constant 0 : index
      %577 = vector.load %arg7[%c0_100, %c0_101] : memref<8x32xf32, #tpu.memory_space<vmem>>, vector<8x32xf32>
      tpu.vector_store %arg7[%c0_100, %c0_101], %576 {strides = array<i32>} : memref<8x32xf32, #tpu.memory_space<vmem>>, vector<8x32xf32>,
    } else {
    }
    %c0 = arith.constant 0 : index
    %c0_1 = arith.constant 0 : index
    %3 = vector.load %arg4[%c0, %c0_1] : memref<32x128xbf16, #tpu.memory_space<vmem>>, vector<32x128xbf16>
    %c0_2 = arith.constant 0 : index
    %c0_3 = arith.constant 0 : index
    %4 = vector.load %arg2[%c0_2, %c0_3] : memref<8x1xi32, #tpu.memory_space<vmem>>, vector<8x1xi32>
    %c16_i32 = arith.constant 16 : i32
    %5 = arith.muli %arg1, %c16_i32 : i32
    %c0_4 = arith.constant 0 : index
    %c0_5 = arith.constant 0 : index
    %6 = vector.load %arg6[%c0_4, %c0_5] : memref<8x32xf32, #tpu.memory_space<vmem>>, vector<8x32xf32>
    %c0_6 = arith.constant 0 : index
    %c0_7 = arith.constant 0 : index
    %7 = vector.load %arg7[%c0_6, %c0_7] : memref<8x32xf32, #tpu.memory_space<vmem>>, vector<8x32xf32>
    %c0_8 = arith.constant 0 : index
    %c0_9 = arith.constant 0 : index
    %c0_10 = arith.constant 0 : index
    %8 = vector.load %arg3[%c0_8, %c0_9, %c0_10] : memref<16x8x128xbf16, #tpu.memory_space<vmem>>, vector<1x8x128xbf16>
    %9 = vector.shape_cast %8 : vector<1x8x128xbf16> to vector<8x128xbf16>
    %10 = arith.extf %9 : vector<8x128xbf16> to vector<8x128xf32>
    %11 = arith.truncf %6 : vector<8x32xf32> to vector<8x32xbf16>
    %cst = arith.constant dense<0.000000e+00> : vector<8x128xf32>
    %12 = tpu.matmul %11, %3, %cst {dimension_numbers = #tpu.dot_dimension_numbers<[1], [0], [0], [1], [0, 0, 1, 1], [], []>} : vector<8x32xbf16>, vector<32x128xbf16>, vector<8x128xf32> -> vector<8x128xf32>
    %13 = arith.addf %10, %12 : vector<8x128xf32>
    %14 = vector.extract_strided_slice %13 {offsets = [0, 0], sizes = [8, 96], strides = [1, 1]} : vector<8x128xf32> to vector<8x96xf32>
    %15 = arith.negf %14 : vector<8x96xf32>
    %16 = math.exp %15 : vector<8x96xf32>
    %cst_11 = arith.constant 1.000000e+00 : f32
    %17 = vector.broadcast %cst_11 : f32 to vector<8x96xf32>
    %18 = arith.addf %17, %16 : vector<8x96xf32>
    %19 = arith.divf %17, %18 : vector<8x96xf32>
    %20 = vector.extract_strided_slice %13 {offsets = [0, 96], sizes = [8, 32], strides = [1, 1]} : vector<8x128xf32> to vector<8x32xf32>
    %21 = math.tanh %20 : vector<8x32xf32>
    %22 = vector.extract_strided_slice %19 {offsets = [0, 0], sizes = [8, 32], strides = [1, 1]} : vector<8x96xf32> to vector<8x32xf32>
    %23 = vector.extract_strided_slice %19 {offsets = [0, 32], sizes = [8, 32], strides = [1, 1]} : vector<8x96xf32> to vector<8x32xf32>
    %24 = vector.extract_strided_slice %19 {offsets = [0, 64], sizes = [8, 32], strides = [1, 1]} : vector<8x96xf32> to vector<8x32xf32>
    %25 = arith.mulf %23, %7 : vector<8x32xf32>
    %26 = arith.mulf %22, %21 : vector<8x32xf32>
    %27 = arith.addf %25, %26 : vector<8x32xf32>
    %28 = math.tanh %27 : vector<8x32xf32>
    %29 = arith.mulf %24, %28 : vector<8x32xf32>
    %c0_i32_12 = arith.constant 0 : i32
    %30 = arith.addi %5, %c0_i32_12 : i32
    %31 = vector.broadcast %30 : i32 to vector<8x1xi32>
    %32 = arith.cmpi slt, %31, %4 : vector<8x1xi32>
    %33 = vector.shape_cast %32 : vector<8x1xi1> to vector<8x1xi1>
    %34 = vector.broadcast %33 : vector<8x1xi1> to vector<8x32xi1>
    %35 = arith.select %34, %29, %6 : vector<8x32xi1>, vector<8x32xf32>
    %36 = vector.shape_cast %32 : vector<8x1xi1> to vector<8x1xi1>
    %37 = vector.broadcast %36 : vector<8x1xi1> to vector<8x32xi1>
    %38 = arith.select %37, %27, %7 : vector<8x32xi1>, vector<8x32xf32>
    %cst_13 = arith.constant 0.000000e+00 : f32
    %39 = vector.shape_cast %32 : vector<8x1xi1> to vector<8x1xi1>
    %40 = vector.broadcast %39 : vector<8x1xi1> to vector<8x32xi1>
    %41 = vector.broadcast %cst_13 : f32 to vector<8x32xf32>
    %42 = arith.select %40, %29, %41 : vector<8x32xi1>, vector<8x32xf32>
    %c1 = arith.constant 1 : index
    %c0_14 = arith.constant 0 : index
    %c0_15 = arith.constant 0 : index
    %43 = vector.load %arg3[%c1, %c0_14, %c0_15] : memref<16x8x128xbf16, #tpu.memory_space<vmem>>, vector<1x8x128xbf16>
    %44 = vector.shape_cast %43 : vector<1x8x128xbf16> to vector<8x128xbf16>
    %45 = arith.extf %44 : vector<8x128xbf16> to vector<8x128xf32>
    %46 = arith.truncf %35 : vector<8x32xf32> to vector<8x32xbf16>
    %cst_16 = arith.constant dense<0.000000e+00> : vector<8x128xf32>
    %47 = tpu.matmul %46, %3, %cst_16 {dimension_numbers = #tpu.dot_dimension_numbers<[1], [0], [0], [1], [0, 0, 1, 1], [], []>} : vector<8x32xbf16>, vector<32x128xbf16>, vector<8x128xf32> -> vector<8x128xf32>
    %48 = arith.addf %45, %47 : vector<8x128xf32>
    %49 = vector.extract_strided_slice %48 {offsets = [0, 0], sizes = [8, 96], strides = [1, 1]} : vector<8x128xf32> to vector<8x96xf32>
    %50 = arith.negf %49 : vector<8x96xf32>
    %51 = math.exp %50 : vector<8x96xf32>
    %cst_17 = arith.constant 1.000000e+00 : f32
    %52 = vector.broadcast %cst_17 : f32 to vector<8x96xf32>
    %53 = arith.addf %52, %51 : vector<8x96xf32>
    %54 = arith.divf %52, %53 : vector<8x96xf32>
    %55 = vector.extract_strided_slice %48 {offsets = [0, 96], sizes = [8, 32], strides = [1, 1]} : vector<8x128xf32> to vector<8x32xf32>
    %56 = math.tanh %55 : vector<8x32xf32>
    %57 = vector.extract_strided_slice %54 {offsets = [0, 0], sizes = [8, 32], strides = [1, 1]} : vector<8x96xf32> to vector<8x32xf32>
    %58 = vector.extract_strided_slice %54 {offsets = [0, 32], sizes = [8, 32], strides = [1, 1]} : vector<8x96xf32> to vector<8x32xf32>
    %59 = vector.extract_strided_slice %54 {offsets = [0, 64], sizes = [8, 32], strides = [1, 1]} : vector<8x96xf32> to vector<8x32xf32>
    %60 = arith.mulf %58, %38 : vector<8x32xf32>
    %61 = arith.mulf %57, %56 : vector<8x32xf32>
    %62 = arith.addf %60, %61 : vector<8x32xf32>
    %63 = math.tanh %62 : vector<8x32xf32>
    %64 = arith.mulf %59, %63 : vector<8x32xf32>
    %c1_i32 = arith.constant 1 : i32
    %65 = arith.addi %5, %c1_i32 : i32
    %66 = vector.broadcast %65 : i32 to vector<8x1xi32>
    %67 = arith.cmpi slt, %66, %4 : vector<8x1xi32>
    %68 = vector.shape_cast %67 : vector<8x1xi1> to vector<8x1xi1>
    %69 = vector.broadcast %68 : vector<8x1xi1> to vector<8x32xi1>
    %70 = arith.select %69, %64, %35 : vector<8x32xi1>, vector<8x32xf32>
    %71 = vector.shape_cast %67 : vector<8x1xi1> to vector<8x1xi1>
    %72 = vector.broadcast %71 : vector<8x1xi1> to vector<8x32xi1>
    %73 = arith.select %72, %62, %38 : vector<8x32xi1>, vector<8x32xf32>
    %cst_18 = arith.constant 0.000000e+00 : f32
    %74 = vector.shape_cast %67 : vector<8x1xi1> to vector<8x1xi1>
    %75 = vector.broadcast %74 : vector<8x1xi1> to vector<8x32xi1>
    %76 = vector.broadcast %cst_18 : f32 to vector<8x32xf32>
    %77 = arith.select %75, %64, %76 : vector<8x32xi1>, vector<8x32xf32>
    %c2 = arith.constant 2 : index
    %c0_19 = arith.constant 0 : index
    %c0_20 = arith.constant 0 : index
    %78 = vector.load %arg3[%c2, %c0_19, %c0_20] : memref<16x8x128xbf16, #tpu.memory_space<vmem>>, vector<1x8x128xbf16>
    %79 = vector.shape_cast %78 : vector<1x8x128xbf16> to vector<8x128xbf16>
    %80 = arith.extf %79 : vector<8x128xbf16> to vector<8x128xf32>
    %81 = arith.truncf %70 : vector<8x32xf32> to vector<8x32xbf16>
    %cst_21 = arith.constant dense<0.000000e+00> : vector<8x128xf32>
    %82 = tpu.matmul %81, %3, %cst_21 {dimension_numbers = #tpu.dot_dimension_numbers<[1], [0], [0], [1], [0, 0, 1, 1], [], []>} : vector<8x32xbf16>, vector<32x128xbf16>, vector<8x128xf32> -> vector<8x128xf32>
    %83 = arith.addf %80, %82 : vector<8x128xf32>
    %84 = vector.extract_strided_slice %83 {offsets = [0, 0], sizes = [8, 96], strides = [1, 1]} : vector<8x128xf32> to vector<8x96xf32>
    %85 = arith.negf %84 : vector<8x96xf32>
    %86 = math.exp %85 : vector<8x96xf32>
    %cst_22 = arith.constant 1.000000e+00 : f32
    %87 = vector.broadcast %cst_22 : f32 to vector<8x96xf32>
    %88 = arith.addf %87, %86 : vector<8x96xf32>
    %89 = arith.divf %87, %88 : vector<8x96xf32>
    %90 = vector.extract_strided_slice %83 {offsets = [0, 96], sizes = [8, 32], strides = [1, 1]} : vector<8x128xf32> to vector<8x32xf32>
    %91 = math.tanh %90 : vector<8x32xf32>
    %92 = vector.extract_strided_slice %89 {offsets = [0, 0], sizes = [8, 32], strides = [1, 1]} : vector<8x96xf32> to vector<8x32xf32>
    %93 = vector.extract_strided_slice %89 {offsets = [0, 32], sizes = [8, 32], strides = [1, 1]} : vector<8x96xf32> to vector<8x32xf32>
    %94 = vector.extract_strided_slice %89 {offsets = [0, 64], sizes = [8, 32], strides = [1, 1]} : vector<8x96xf32> to vector<8x32xf32>
    %95 = arith.mulf %93, %73 : vector<8x32xf32>
    %96 = arith.mulf %92, %91 : vector<8x32xf32>
    %97 = arith.addf %95, %96 : vector<8x32xf32>
    %98 = math.tanh %97 : vector<8x32xf32>
    %99 = arith.mulf %94, %98 : vector<8x32xf32>
    %c2_i32 = arith.constant 2 : i32
    %100 = arith.addi %5, %c2_i32 : i32
    %101 = vector.broadcast %100 : i32 to vector<8x1xi32>
    %102 = arith.cmpi slt, %101, %4 : vector<8x1xi32>
    %103 = vector.shape_cast %102 : vector<8x1xi1> to vector<8x1xi1>
    %104 = vector.broadcast %103 : vector<8x1xi1> to vector<8x32xi1>
    %105 = arith.select %104, %99, %70 : vector<8x32xi1>, vector<8x32xf32>
    %106 = vector.shape_cast %102 : vector<8x1xi1> to vector<8x1xi1>
    %107 = vector.broadcast %106 : vector<8x1xi1> to vector<8x32xi1>
    %108 = arith.select %107, %97, %73 : vector<8x32xi1>, vector<8x32xf32>
    %cst_23 = arith.constant 0.000000e+00 : f32
    %109 = vector.shape_cast %102 : vector<8x1xi1> to vector<8x1xi1>
    %110 = vector.broadcast %109 : vector<8x1xi1> to vector<8x32xi1>
    %111 = vector.broadcast %cst_23 : f32 to vector<8x32xf32>
    %112 = arith.select %110, %99, %111 : vector<8x32xi1>, vector<8x32xf32>
    %c3 = arith.constant 3 : index
    %c0_24 = arith.constant 0 : index
    %c0_25 = arith.constant 0 : index
    %113 = vector.load %arg3[%c3, %c0_24, %c0_25] : memref<16x8x128xbf16, #tpu.memory_space<vmem>>, vector<1x8x128xbf16>
    %114 = vector.shape_cast %113 : vector<1x8x128xbf16> to vector<8x128xbf16>
    %115 = arith.extf %114 : vector<8x128xbf16> to vector<8x128xf32>
    %116 = arith.truncf %105 : vector<8x32xf32> to vector<8x32xbf16>
    %cst_26 = arith.constant dense<0.000000e+00> : vector<8x128xf32>
    %117 = tpu.matmul %116, %3, %cst_26 {dimension_numbers = #tpu.dot_dimension_numbers<[1], [0], [0], [1], [0, 0, 1, 1], [], []>} : vector<8x32xbf16>, vector<32x128xbf16>, vector<8x128xf32> -> vector<8x128xf32>
    %118 = arith.addf %115, %117 : vector<8x128xf32>
    %119 = vector.extract_strided_slice %118 {offsets = [0, 0], sizes = [8, 96], strides = [1, 1]} : vector<8x128xf32> to vector<8x96xf32>
    %120 = arith.negf %119 : vector<8x96xf32>
    %121 = math.exp %120 : vector<8x96xf32>
    %cst_27 = arith.constant 1.000000e+00 : f32
    %122 = vector.broadcast %cst_27 : f32 to vector<8x96xf32>
    %123 = arith.addf %122, %121 : vector<8x96xf32>
    %124 = arith.divf %122, %123 : vector<8x96xf32>
    %125 = vector.extract_strided_slice %118 {offsets = [0, 96], sizes = [8, 32], strides = [1, 1]} : vector<8x128xf32> to vector<8x32xf32>
    %126 = math.tanh %125 : vector<8x32xf32>
    %127 = vector.extract_strided_slice %124 {offsets = [0, 0], sizes = [8, 32], strides = [1, 1]} : vector<8x96xf32> to vector<8x32xf32>
    %128 = vector.extract_strided_slice %124 {offsets = [0, 32], sizes = [8, 32], strides = [1, 1]} : vector<8x96xf32> to vector<8x32xf32>
    %129 = vector.extract_strided_slice %124 {offsets = [0, 64], sizes = [8, 32], strides = [1, 1]} : vector<8x96xf32> to vector<8x32xf32>
    %130 = arith.mulf %128, %108 : vector<8x32xf32>
    %131 = arith.mulf %127, %126 : vector<8x32xf32>
    %132 = arith.addf %130, %131 : vector<8x32xf32>
    %133 = math.tanh %132 : vector<8x32xf32>
    %134 = arith.mulf %129, %133 : vector<8x32xf32>
    %c3_i32 = arith.constant 3 : i32
    %135 = arith.addi %5, %c3_i32 : i32
    %136 = vector.broadcast %135 : i32 to vector<8x1xi32>
    %137 = arith.cmpi slt, %136, %4 : vector<8x1xi32>
    %138 = vector.shape_cast %137 : vector<8x1xi1> to vector<8x1xi1>
    %139 = vector.broadcast %138 : vector<8x1xi1> to vector<8x32xi1>
    %140 = arith.select %139, %134, %105 : vector<8x32xi1>, vector<8x32xf32>
    %141 = vector.shape_cast %137 : vector<8x1xi1> to vector<8x1xi1>
    %142 = vector.broadcast %141 : vector<8x1xi1> to vector<8x32xi1>
    %143 = arith.select %142, %132, %108 : vector<8x32xi1>, vector<8x32xf32>
    %cst_28 = arith.constant 0.000000e+00 : f32
    %144 = vector.shape_cast %137 : vector<8x1xi1> to vector<8x1xi1>
    %145 = vector.broadcast %144 : vector<8x1xi1> to vector<8x32xi1>
    %146 = vector.broadcast %cst_28 : f32 to vector<8x32xf32>
    %147 = arith.select %145, %134, %146 : vector<8x32xi1>, vector<8x32xf32>
    %c4 = arith.constant 4 : index
    %c0_29 = arith.constant 0 : index
    %c0_30 = arith.constant 0 : index
    %148 = vector.load %arg3[%c4, %c0_29, %c0_30] : memref<16x8x128xbf16, #tpu.memory_space<vmem>>, vector<1x8x128xbf16>
    %149 = vector.shape_cast %148 : vector<1x8x128xbf16> to vector<8x128xbf16>
    %150 = arith.extf %149 : vector<8x128xbf16> to vector<8x128xf32>
    %151 = arith.truncf %140 : vector<8x32xf32> to vector<8x32xbf16>
    %cst_31 = arith.constant dense<0.000000e+00> : vector<8x128xf32>
    %152 = tpu.matmul %151, %3, %cst_31 {dimension_numbers = #tpu.dot_dimension_numbers<[1], [0], [0], [1], [0, 0, 1, 1], [], []>} : vector<8x32xbf16>, vector<32x128xbf16>, vector<8x128xf32> -> vector<8x128xf32>
    %153 = arith.addf %150, %152 : vector<8x128xf32>
    %154 = vector.extract_strided_slice %153 {offsets = [0, 0], sizes = [8, 96], strides = [1, 1]} : vector<8x128xf32> to vector<8x96xf32>
    %155 = arith.negf %154 : vector<8x96xf32>
    %156 = math.exp %155 : vector<8x96xf32>
    %cst_32 = arith.constant 1.000000e+00 : f32
    %157 = vector.broadcast %cst_32 : f32 to vector<8x96xf32>
    %158 = arith.addf %157, %156 : vector<8x96xf32>
    %159 = arith.divf %157, %158 : vector<8x96xf32>
    %160 = vector.extract_strided_slice %153 {offsets = [0, 96], sizes = [8, 32], strides = [1, 1]} : vector<8x128xf32> to vector<8x32xf32>
    %161 = math.tanh %160 : vector<8x32xf32>
    %162 = vector.extract_strided_slice %159 {offsets = [0, 0], sizes = [8, 32], strides = [1, 1]} : vector<8x96xf32> to vector<8x32xf32>
    %163 = vector.extract_strided_slice %159 {offsets = [0, 32], sizes = [8, 32], strides = [1, 1]} : vector<8x96xf32> to vector<8x32xf32>
    %164 = vector.extract_strided_slice %159 {offsets = [0, 64], sizes = [8, 32], strides = [1, 1]} : vector<8x96xf32> to vector<8x32xf32>
    %165 = arith.mulf %163, %143 : vector<8x32xf32>
    %166 = arith.mulf %162, %161 : vector<8x32xf32>
    %167 = arith.addf %165, %166 : vector<8x32xf32>
    %168 = math.tanh %167 : vector<8x32xf32>
    %169 = arith.mulf %164, %168 : vector<8x32xf32>
    %c4_i32 = arith.constant 4 : i32
    %170 = arith.addi %5, %c4_i32 : i32
    %171 = vector.broadcast %170 : i32 to vector<8x1xi32>
    %172 = arith.cmpi slt, %171, %4 : vector<8x1xi32>
    %173 = vector.shape_cast %172 : vector<8x1xi1> to vector<8x1xi1>
    %174 = vector.broadcast %173 : vector<8x1xi1> to vector<8x32xi1>
    %175 = arith.select %174, %169, %140 : vector<8x32xi1>, vector<8x32xf32>
    %176 = vector.shape_cast %172 : vector<8x1xi1> to vector<8x1xi1>
    %177 = vector.broadcast %176 : vector<8x1xi1> to vector<8x32xi1>
    %178 = arith.select %177, %167, %143 : vector<8x32xi1>, vector<8x32xf32>
    %cst_33 = arith.constant 0.000000e+00 : f32
    %179 = vector.shape_cast %172 : vector<8x1xi1> to vector<8x1xi1>
    %180 = vector.broadcast %179 : vector<8x1xi1> to vector<8x32xi1>
    %181 = vector.broadcast %cst_33 : f32 to vector<8x32xf32>
    %182 = arith.select %180, %169, %181 : vector<8x32xi1>, vector<8x32xf32>
    %c5 = arith.constant 5 : index
    %c0_34 = arith.constant 0 : index
    %c0_35 = arith.constant 0 : index
    %183 = vector.load %arg3[%c5, %c0_34, %c0_35] : memref<16x8x128xbf16, #tpu.memory_space<vmem>>, vector<1x8x128xbf16>
    %184 = vector.shape_cast %183 : vector<1x8x128xbf16> to vector<8x128xbf16>
    %185 = arith.extf %184 : vector<8x128xbf16> to vector<8x128xf32>
    %186 = arith.truncf %175 : vector<8x32xf32> to vector<8x32xbf16>
    %cst_36 = arith.constant dense<0.000000e+00> : vector<8x128xf32>
    %187 = tpu.matmul %186, %3, %cst_36 {dimension_numbers = #tpu.dot_dimension_numbers<[1], [0], [0], [1], [0, 0, 1, 1], [], []>} : vector<8x32xbf16>, vector<32x128xbf16>, vector<8x128xf32> -> vector<8x128xf32>
    %188 = arith.addf %185, %187 : vector<8x128xf32>
    %189 = vector.extract_strided_slice %188 {offsets = [0, 0], sizes = [8, 96], strides = [1, 1]} : vector<8x128xf32> to vector<8x96xf32>
    %190 = arith.negf %189 : vector<8x96xf32>
    %191 = math.exp %190 : vector<8x96xf32>
    %cst_37 = arith.constant 1.000000e+00 : f32
    %192 = vector.broadcast %cst_37 : f32 to vector<8x96xf32>
    %193 = arith.addf %192, %191 : vector<8x96xf32>
    %194 = arith.divf %192, %193 : vector<8x96xf32>
    %195 = vector.extract_strided_slice %188 {offsets = [0, 96], sizes = [8, 32], strides = [1, 1]} : vector<8x128xf32> to vector<8x32xf32>
    %196 = math.tanh %195 : vector<8x32xf32>
    %197 = vector.extract_strided_slice %194 {offsets = [0, 0], sizes = [8, 32], strides = [1, 1]} : vector<8x96xf32> to vector<8x32xf32>
    %198 = vector.extract_strided_slice %194 {offsets = [0, 32], sizes = [8, 32], strides = [1, 1]} : vector<8x96xf32> to vector<8x32xf32>
    %199 = vector.extract_strided_slice %194 {offsets = [0, 64], sizes = [8, 32], strides = [1, 1]} : vector<8x96xf32> to vector<8x32xf32>
    %200 = arith.mulf %198, %178 : vector<8x32xf32>
    %201 = arith.mulf %197, %196 : vector<8x32xf32>
    %202 = arith.addf %200, %201 : vector<8x32xf32>
    %203 = math.tanh %202 : vector<8x32xf32>
    %204 = arith.mulf %199, %203 : vector<8x32xf32>
    %c5_i32 = arith.constant 5 : i32
    %205 = arith.addi %5, %c5_i32 : i32
    %206 = vector.broadcast %205 : i32 to vector<8x1xi32>
    %207 = arith.cmpi slt, %206, %4 : vector<8x1xi32>
    %208 = vector.shape_cast %207 : vector<8x1xi1> to vector<8x1xi1>
    %209 = vector.broadcast %208 : vector<8x1xi1> to vector<8x32xi1>
    %210 = arith.select %209, %204, %175 : vector<8x32xi1>, vector<8x32xf32>
    %211 = vector.shape_cast %207 : vector<8x1xi1> to vector<8x1xi1>
    %212 = vector.broadcast %211 : vector<8x1xi1> to vector<8x32xi1>
    %213 = arith.select %212, %202, %178 : vector<8x32xi1>, vector<8x32xf32>
    %cst_38 = arith.constant 0.000000e+00 : f32
    %214 = vector.shape_cast %207 : vector<8x1xi1> to vector<8x1xi1>
    %215 = vector.broadcast %214 : vector<8x1xi1> to vector<8x32xi1>
    %216 = vector.broadcast %cst_38 : f32 to vector<8x32xf32>
    %217 = arith.select %215, %204, %216 : vector<8x32xi1>, vector<8x32xf32>
    %c6 = arith.constant 6 : index
    %c0_39 = arith.constant 0 : index
    %c0_40 = arith.constant 0 : index
    %218 = vector.load %arg3[%c6, %c0_39, %c0_40] : memref<16x8x128xbf16, #tpu.memory_space<vmem>>, vector<1x8x128xbf16>
    %219 = vector.shape_cast %218 : vector<1x8x128xbf16> to vector<8x128xbf16>
    %220 = arith.extf %219 : vector<8x128xbf16> to vector<8x128xf32>
    %221 = arith.truncf %210 : vector<8x32xf32> to vector<8x32xbf16>
    %cst_41 = arith.constant dense<0.000000e+00> : vector<8x128xf32>
    %222 = tpu.matmul %221, %3, %cst_41 {dimension_numbers = #tpu.dot_dimension_numbers<[1], [0], [0], [1], [0, 0, 1, 1], [], []>} : vector<8x32xbf16>, vector<32x128xbf16>, vector<8x128xf32> -> vector<8x128xf32>
    %223 = arith.addf %220, %222 : vector<8x128xf32>
    %224 = vector.extract_strided_slice %223 {offsets = [0, 0], sizes = [8, 96], strides = [1, 1]} : vector<8x128xf32> to vector<8x96xf32>
    %225 = arith.negf %224 : vector<8x96xf32>
    %226 = math.exp %225 : vector<8x96xf32>
    %cst_42 = arith.constant 1.000000e+00 : f32
    %227 = vector.broadcast %cst_42 : f32 to vector<8x96xf32>
    %228 = arith.addf %227, %226 : vector<8x96xf32>
    %229 = arith.divf %227, %228 : vector<8x96xf32>
    %230 = vector.extract_strided_slice %223 {offsets = [0, 96], sizes = [8, 32], strides = [1, 1]} : vector<8x128xf32> to vector<8x32xf32>
    %231 = math.tanh %230 : vector<8x32xf32>
    %232 = vector.extract_strided_slice %229 {offsets = [0, 0], sizes = [8, 32], strides = [1, 1]} : vector<8x96xf32> to vector<8x32xf32>
    %233 = vector.extract_strided_slice %229 {offsets = [0, 32], sizes = [8, 32], strides = [1, 1]} : vector<8x96xf32> to vector<8x32xf32>
    %234 = vector.extract_strided_slice %229 {offsets = [0, 64], sizes = [8, 32], strides = [1, 1]} : vector<8x96xf32> to vector<8x32xf32>
    %235 = arith.mulf %233, %213 : vector<8x32xf32>
    %236 = arith.mulf %232, %231 : vector<8x32xf32>
    %237 = arith.addf %235, %236 : vector<8x32xf32>
    %238 = math.tanh %237 : vector<8x32xf32>
    %239 = arith.mulf %234, %238 : vector<8x32xf32>
    %c6_i32 = arith.constant 6 : i32
    %240 = arith.addi %5, %c6_i32 : i32
    %241 = vector.broadcast %240 : i32 to vector<8x1xi32>
    %242 = arith.cmpi slt, %241, %4 : vector<8x1xi32>
    %243 = vector.shape_cast %242 : vector<8x1xi1> to vector<8x1xi1>
    %244 = vector.broadcast %243 : vector<8x1xi1> to vector<8x32xi1>
    %245 = arith.select %244, %239, %210 : vector<8x32xi1>, vector<8x32xf32>
    %246 = vector.shape_cast %242 : vector<8x1xi1> to vector<8x1xi1>
    %247 = vector.broadcast %246 : vector<8x1xi1> to vector<8x32xi1>
    %248 = arith.select %247, %237, %213 : vector<8x32xi1>, vector<8x32xf32>
    %cst_43 = arith.constant 0.000000e+00 : f32
    %249 = vector.shape_cast %242 : vector<8x1xi1> to vector<8x1xi1>
    %250 = vector.broadcast %249 : vector<8x1xi1> to vector<8x32xi1>
    %251 = vector.broadcast %cst_43 : f32 to vector<8x32xf32>
    %252 = arith.select %250, %239, %251 : vector<8x32xi1>, vector<8x32xf32>
    %c7 = arith.constant 7 : index
    %c0_44 = arith.constant 0 : index
    %c0_45 = arith.constant 0 : index
    %253 = vector.load %arg3[%c7, %c0_44, %c0_45] : memref<16x8x128xbf16, #tpu.memory_space<vmem>>, vector<1x8x128xbf16>
    %254 = vector.shape_cast %253 : vector<1x8x128xbf16> to vector<8x128xbf16>
    %255 = arith.extf %254 : vector<8x128xbf16> to vector<8x128xf32>
    %256 = arith.truncf %245 : vector<8x32xf32> to vector<8x32xbf16>
    %cst_46 = arith.constant dense<0.000000e+00> : vector<8x128xf32>
    %257 = tpu.matmul %256, %3, %cst_46 {dimension_numbers = #tpu.dot_dimension_numbers<[1], [0], [0], [1], [0, 0, 1, 1], [], []>} : vector<8x32xbf16>, vector<32x128xbf16>, vector<8x128xf32> -> vector<8x128xf32>
    %258 = arith.addf %255, %257 : vector<8x128xf32>
    %259 = vector.extract_strided_slice %258 {offsets = [0, 0], sizes = [8, 96], strides = [1, 1]} : vector<8x128xf32> to vector<8x96xf32>
    %260 = arith.negf %259 : vector<8x96xf32>
    %261 = math.exp %260 : vector<8x96xf32>
    %cst_47 = arith.constant 1.000000e+00 : f32
    %262 = vector.broadcast %cst_47 : f32 to vector<8x96xf32>
    %263 = arith.addf %262, %261 : vector<8x96xf32>
    %264 = arith.divf %262, %263 : vector<8x96xf32>
    %265 = vector.extract_strided_slice %258 {offsets = [0, 96], sizes = [8, 32], strides = [1, 1]} : vector<8x128xf32> to vector<8x32xf32>
    %266 = math.tanh %265 : vector<8x32xf32>
    %267 = vector.extract_strided_slice %264 {offsets = [0, 0], sizes = [8, 32], strides = [1, 1]} : vector<8x96xf32> to vector<8x32xf32>
    %268 = vector.extract_strided_slice %264 {offsets = [0, 32], sizes = [8, 32], strides = [1, 1]} : vector<8x96xf32> to vector<8x32xf32>
    %269 = vector.extract_strided_slice %264 {offsets = [0, 64], sizes = [8, 32], strides = [1, 1]} : vector<8x96xf32> to vector<8x32xf32>
    %270 = arith.mulf %268, %248 : vector<8x32xf32>
    %271 = arith.mulf %267, %266 : vector<8x32xf32>
    %272 = arith.addf %270, %271 : vector<8x32xf32>
    %273 = math.tanh %272 : vector<8x32xf32>
    %274 = arith.mulf %269, %273 : vector<8x32xf32>
    %c7_i32 = arith.constant 7 : i32
    %275 = arith.addi %5, %c7_i32 : i32
    %276 = vector.broadcast %275 : i32 to vector<8x1xi32>
    %277 = arith.cmpi slt, %276, %4 : vector<8x1xi32>
    %278 = vector.shape_cast %277 : vector<8x1xi1> to vector<8x1xi1>
    %279 = vector.broadcast %278 : vector<8x1xi1> to vector<8x32xi1>
    %280 = arith.select %279, %274, %245 : vector<8x32xi1>, vector<8x32xf32>
    %281 = vector.shape_cast %277 : vector<8x1xi1> to vector<8x1xi1>
    %282 = vector.broadcast %281 : vector<8x1xi1> to vector<8x32xi1>
    %283 = arith.select %282, %272, %248 : vector<8x32xi1>, vector<8x32xf32>
    %cst_48 = arith.constant 0.000000e+00 : f32
    %284 = vector.shape_cast %277 : vector<8x1xi1> to vector<8x1xi1>
    %285 = vector.broadcast %284 : vector<8x1xi1> to vector<8x32xi1>
    %286 = vector.broadcast %cst_48 : f32 to vector<8x32xf32>
    %287 = arith.select %285, %274, %286 : vector<8x32xi1>, vector<8x32xf32>
    %c8 = arith.constant 8 : index
    %c0_49 = arith.constant 0 : index
    %c0_50 = arith.constant 0 : index
    %288 = vector.load %arg3[%c8, %c0_49, %c0_50] : memref<16x8x128xbf16, #tpu.memory_space<vmem>>, vector<1x8x128xbf16>
    %289 = vector.shape_cast %288 : vector<1x8x128xbf16> to vector<8x128xbf16>
    %290 = arith.extf %289 : vector<8x128xbf16> to vector<8x128xf32>
    %291 = arith.truncf %280 : vector<8x32xf32> to vector<8x32xbf16>
    %cst_51 = arith.constant dense<0.000000e+00> : vector<8x128xf32>
    %292 = tpu.matmul %291, %3, %cst_51 {dimension_numbers = #tpu.dot_dimension_numbers<[1], [0], [0], [1], [0, 0, 1, 1], [], []>} : vector<8x32xbf16>, vector<32x128xbf16>, vector<8x128xf32> -> vector<8x128xf32>
    %293 = arith.addf %290, %292 : vector<8x128xf32>
    %294 = vector.extract_strided_slice %293 {offsets = [0, 0], sizes = [8, 96], strides = [1, 1]} : vector<8x128xf32> to vector<8x96xf32>
    %295 = arith.negf %294 : vector<8x96xf32>
    %296 = math.exp %295 : vector<8x96xf32>
    %cst_52 = arith.constant 1.000000e+00 : f32
    %297 = vector.broadcast %cst_52 : f32 to vector<8x96xf32>
    %298 = arith.addf %297, %296 : vector<8x96xf32>
    %299 = arith.divf %297, %298 : vector<8x96xf32>
    %300 = vector.extract_strided_slice %293 {offsets = [0, 96], sizes = [8, 32], strides = [1, 1]} : vector<8x128xf32> to vector<8x32xf32>
    %301 = math.tanh %300 : vector<8x32xf32>
    %302 = vector.extract_strided_slice %299 {offsets = [0, 0], sizes = [8, 32], strides = [1, 1]} : vector<8x96xf32> to vector<8x32xf32>
    %303 = vector.extract_strided_slice %299 {offsets = [0, 32], sizes = [8, 32], strides = [1, 1]} : vector<8x96xf32> to vector<8x32xf32>
    %304 = vector.extract_strided_slice %299 {offsets = [0, 64], sizes = [8, 32], strides = [1, 1]} : vector<8x96xf32> to vector<8x32xf32>
    %305 = arith.mulf %303, %283 : vector<8x32xf32>
    %306 = arith.mulf %302, %301 : vector<8x32xf32>
    %307 = arith.addf %305, %306 : vector<8x32xf32>
    %308 = math.tanh %307 : vector<8x32xf32>
    %309 = arith.mulf %304, %308 : vector<8x32xf32>
    %c8_i32 = arith.constant 8 : i32
    %310 = arith.addi %5, %c8_i32 : i32
    %311 = vector.broadcast %310 : i32 to vector<8x1xi32>
    %312 = arith.cmpi slt, %311, %4 : vector<8x1xi32>
    %313 = vector.shape_cast %312 : vector<8x1xi1> to vector<8x1xi1>
    %314 = vector.broadcast %313 : vector<8x1xi1> to vector<8x32xi1>
    %315 = arith.select %314, %309, %280 : vector<8x32xi1>, vector<8x32xf32>
    %316 = vector.shape_cast %312 : vector<8x1xi1> to vector<8x1xi1>
    %317 = vector.broadcast %316 : vector<8x1xi1> to vector<8x32xi1>
    %318 = arith.select %317, %307, %283 : vector<8x32xi1>, vector<8x32xf32>
    %cst_53 = arith.constant 0.000000e+00 : f32
    %319 = vector.shape_cast %312 : vector<8x1xi1> to vector<8x1xi1>
    %320 = vector.broadcast %319 : vector<8x1xi1> to vector<8x32xi1>
    %321 = vector.broadcast %cst_53 : f32 to vector<8x32xf32>
    %322 = arith.select %320, %309, %321 : vector<8x32xi1>, vector<8x32xf32>
    %c9 = arith.constant 9 : index
    %c0_54 = arith.constant 0 : index
    %c0_55 = arith.constant 0 : index
    %323 = vector.load %arg3[%c9, %c0_54, %c0_55] : memref<16x8x128xbf16, #tpu.memory_space<vmem>>, vector<1x8x128xbf16>
    %324 = vector.shape_cast %323 : vector<1x8x128xbf16> to vector<8x128xbf16>
    %325 = arith.extf %324 : vector<8x128xbf16> to vector<8x128xf32>
    %326 = arith.truncf %315 : vector<8x32xf32> to vector<8x32xbf16>
    %cst_56 = arith.constant dense<0.000000e+00> : vector<8x128xf32>
    %327 = tpu.matmul %326, %3, %cst_56 {dimension_numbers = #tpu.dot_dimension_numbers<[1], [0], [0], [1], [0, 0, 1, 1], [], []>} : vector<8x32xbf16>, vector<32x128xbf16>, vector<8x128xf32> -> vector<8x128xf32>
    %328 = arith.addf %325, %327 : vector<8x128xf32>
    %329 = vector.extract_strided_slice %328 {offsets = [0, 0], sizes = [8, 96], strides = [1, 1]} : vector<8x128xf32> to vector<8x96xf32>
    %330 = arith.negf %329 : vector<8x96xf32>
    %331 = math.exp %330 : vector<8x96xf32>
    %cst_57 = arith.constant 1.000000e+00 : f32
    %332 = vector.broadcast %cst_57 : f32 to vector<8x96xf32>
    %333 = arith.addf %332, %331 : vector<8x96xf32>
    %334 = arith.divf %332, %333 : vector<8x96xf32>
    %335 = vector.extract_strided_slice %328 {offsets = [0, 96], sizes = [8, 32], strides = [1, 1]} : vector<8x128xf32> to vector<8x32xf32>
    %336 = math.tanh %335 : vector<8x32xf32>
    %337 = vector.extract_strided_slice %334 {offsets = [0, 0], sizes = [8, 32], strides = [1, 1]} : vector<8x96xf32> to vector<8x32xf32>
    %338 = vector.extract_strided_slice %334 {offsets = [0, 32], sizes = [8, 32], strides = [1, 1]} : vector<8x96xf32> to vector<8x32xf32>
    %339 = vector.extract_strided_slice %334 {offsets = [0, 64], sizes = [8, 32], strides = [1, 1]} : vector<8x96xf32> to vector<8x32xf32>
    %340 = arith.mulf %338, %318 : vector<8x32xf32>
    %341 = arith.mulf %337, %336 : vector<8x32xf32>
    %342 = arith.addf %340, %341 : vector<8x32xf32>
    %343 = math.tanh %342 : vector<8x32xf32>
    %344 = arith.mulf %339, %343 : vector<8x32xf32>
    %c9_i32 = arith.constant 9 : i32
    %345 = arith.addi %5, %c9_i32 : i32
    %346 = vector.broadcast %345 : i32 to vector<8x1xi32>
    %347 = arith.cmpi slt, %346, %4 : vector<8x1xi32>
    %348 = vector.shape_cast %347 : vector<8x1xi1> to vector<8x1xi1>
    %349 = vector.broadcast %348 : vector<8x1xi1> to vector<8x32xi1>
    %350 = arith.select %349, %344, %315 : vector<8x32xi1>, vector<8x32xf32>
    %351 = vector.shape_cast %347 : vector<8x1xi1> to vector<8x1xi1>
    %352 = vector.broadcast %351 : vector<8x1xi1> to vector<8x32xi1>
    %353 = arith.select %352, %342, %318 : vector<8x32xi1>, vector<8x32xf32>
    %cst_58 = arith.constant 0.000000e+00 : f32
    %354 = vector.shape_cast %347 : vector<8x1xi1> to vector<8x1xi1>
    %355 = vector.broadcast %354 : vector<8x1xi1> to vector<8x32xi1>
    %356 = vector.broadcast %cst_58 : f32 to vector<8x32xf32>
    %357 = arith.select %355, %344, %356 : vector<8x32xi1>, vector<8x32xf32>
    %c10 = arith.constant 10 : index
    %c0_59 = arith.constant 0 : index
    %c0_60 = arith.constant 0 : index
    %358 = vector.load %arg3[%c10, %c0_59, %c0_60] : memref<16x8x128xbf16, #tpu.memory_space<vmem>>, vector<1x8x128xbf16>
    %359 = vector.shape_cast %358 : vector<1x8x128xbf16> to vector<8x128xbf16>
    %360 = arith.extf %359 : vector<8x128xbf16> to vector<8x128xf32>
    %361 = arith.truncf %350 : vector<8x32xf32> to vector<8x32xbf16>
    %cst_61 = arith.constant dense<0.000000e+00> : vector<8x128xf32>
    %362 = tpu.matmul %361, %3, %cst_61 {dimension_numbers = #tpu.dot_dimension_numbers<[1], [0], [0], [1], [0, 0, 1, 1], [], []>} : vector<8x32xbf16>, vector<32x128xbf16>, vector<8x128xf32> -> vector<8x128xf32>
    %363 = arith.addf %360, %362 : vector<8x128xf32>
    %364 = vector.extract_strided_slice %363 {offsets = [0, 0], sizes = [8, 96], strides = [1, 1]} : vector<8x128xf32> to vector<8x96xf32>
    %365 = arith.negf %364 : vector<8x96xf32>
    %366 = math.exp %365 : vector<8x96xf32>
    %cst_62 = arith.constant 1.000000e+00 : f32
    %367 = vector.broadcast %cst_62 : f32 to vector<8x96xf32>
    %368 = arith.addf %367, %366 : vector<8x96xf32>
    %369 = arith.divf %367, %368 : vector<8x96xf32>
    %370 = vector.extract_strided_slice %363 {offsets = [0, 96], sizes = [8, 32], strides = [1, 1]} : vector<8x128xf32> to vector<8x32xf32>
    %371 = math.tanh %370 : vector<8x32xf32>
    %372 = vector.extract_strided_slice %369 {offsets = [0, 0], sizes = [8, 32], strides = [1, 1]} : vector<8x96xf32> to vector<8x32xf32>
    %373 = vector.extract_strided_slice %369 {offsets = [0, 32], sizes = [8, 32], strides = [1, 1]} : vector<8x96xf32> to vector<8x32xf32>
    %374 = vector.extract_strided_slice %369 {offsets = [0, 64], sizes = [8, 32], strides = [1, 1]} : vector<8x96xf32> to vector<8x32xf32>
    %375 = arith.mulf %373, %353 : vector<8x32xf32>
    %376 = arith.mulf %372, %371 : vector<8x32xf32>
    %377 = arith.addf %375, %376 : vector<8x32xf32>
    %378 = math.tanh %377 : vector<8x32xf32>
    %379 = arith.mulf %374, %378 : vector<8x32xf32>
    %c10_i32 = arith.constant 10 : i32
    %380 = arith.addi %5, %c10_i32 : i32
    %381 = vector.broadcast %380 : i32 to vector<8x1xi32>
    %382 = arith.cmpi slt, %381, %4 : vector<8x1xi32>
    %383 = vector.shape_cast %382 : vector<8x1xi1> to vector<8x1xi1>
    %384 = vector.broadcast %383 : vector<8x1xi1> to vector<8x32xi1>
    %385 = arith.select %384, %379, %350 : vector<8x32xi1>, vector<8x32xf32>
    %386 = vector.shape_cast %382 : vector<8x1xi1> to vector<8x1xi1>
    %387 = vector.broadcast %386 : vector<8x1xi1> to vector<8x32xi1>
    %388 = arith.select %387, %377, %353 : vector<8x32xi1>, vector<8x32xf32>
    %cst_63 = arith.constant 0.000000e+00 : f32
    %389 = vector.shape_cast %382 : vector<8x1xi1> to vector<8x1xi1>
    %390 = vector.broadcast %389 : vector<8x1xi1> to vector<8x32xi1>
    %391 = vector.broadcast %cst_63 : f32 to vector<8x32xf32>
    %392 = arith.select %390, %379, %391 : vector<8x32xi1>, vector<8x32xf32>
    %c11 = arith.constant 11 : index
    %c0_64 = arith.constant 0 : index
    %c0_65 = arith.constant 0 : index
    %393 = vector.load %arg3[%c11, %c0_64, %c0_65] : memref<16x8x128xbf16, #tpu.memory_space<vmem>>, vector<1x8x128xbf16>
    %394 = vector.shape_cast %393 : vector<1x8x128xbf16> to vector<8x128xbf16>
    %395 = arith.extf %394 : vector<8x128xbf16> to vector<8x128xf32>
    %396 = arith.truncf %385 : vector<8x32xf32> to vector<8x32xbf16>
    %cst_66 = arith.constant dense<0.000000e+00> : vector<8x128xf32>
    %397 = tpu.matmul %396, %3, %cst_66 {dimension_numbers = #tpu.dot_dimension_numbers<[1], [0], [0], [1], [0, 0, 1, 1], [], []>} : vector<8x32xbf16>, vector<32x128xbf16>, vector<8x128xf32> -> vector<8x128xf32>
    %398 = arith.addf %395, %397 : vector<8x128xf32>
    %399 = vector.extract_strided_slice %398 {offsets = [0, 0], sizes = [8, 96], strides = [1, 1]} : vector<8x128xf32> to vector<8x96xf32>
    %400 = arith.negf %399 : vector<8x96xf32>
    %401 = math.exp %400 : vector<8x96xf32>
    %cst_67 = arith.constant 1.000000e+00 : f32
    %402 = vector.broadcast %cst_67 : f32 to vector<8x96xf32>
    %403 = arith.addf %402, %401 : vector<8x96xf32>
    %404 = arith.divf %402, %403 : vector<8x96xf32>
    %405 = vector.extract_strided_slice %398 {offsets = [0, 96], sizes = [8, 32], strides = [1, 1]} : vector<8x128xf32> to vector<8x32xf32>
    %406 = math.tanh %405 : vector<8x32xf32>
    %407 = vector.extract_strided_slice %404 {offsets = [0, 0], sizes = [8, 32], strides = [1, 1]} : vector<8x96xf32> to vector<8x32xf32>
    %408 = vector.extract_strided_slice %404 {offsets = [0, 32], sizes = [8, 32], strides = [1, 1]} : vector<8x96xf32> to vector<8x32xf32>
    %409 = vector.extract_strided_slice %404 {offsets = [0, 64], sizes = [8, 32], strides = [1, 1]} : vector<8x96xf32> to vector<8x32xf32>
    %410 = arith.mulf %408, %388 : vector<8x32xf32>
    %411 = arith.mulf %407, %406 : vector<8x32xf32>
    %412 = arith.addf %410, %411 : vector<8x32xf32>
    %413 = math.tanh %412 : vector<8x32xf32>
    %414 = arith.mulf %409, %413 : vector<8x32xf32>
    %c11_i32 = arith.constant 11 : i32
    %415 = arith.addi %5, %c11_i32 : i32
    %416 = vector.broadcast %415 : i32 to vector<8x1xi32>
    %417 = arith.cmpi slt, %416, %4 : vector<8x1xi32>
    %418 = vector.shape_cast %417 : vector<8x1xi1> to vector<8x1xi1>
    %419 = vector.broadcast %418 : vector<8x1xi1> to vector<8x32xi1>
    %420 = arith.select %419, %414, %385 : vector<8x32xi1>, vector<8x32xf32>
    %421 = vector.shape_cast %417 : vector<8x1xi1> to vector<8x1xi1>
    %422 = vector.broadcast %421 : vector<8x1xi1> to vector<8x32xi1>
    %423 = arith.select %422, %412, %388 : vector<8x32xi1>, vector<8x32xf32>
    %cst_68 = arith.constant 0.000000e+00 : f32
    %424 = vector.shape_cast %417 : vector<8x1xi1> to vector<8x1xi1>
    %425 = vector.broadcast %424 : vector<8x1xi1> to vector<8x32xi1>
    %426 = vector.broadcast %cst_68 : f32 to vector<8x32xf32>
    %427 = arith.select %425, %414, %426 : vector<8x32xi1>, vector<8x32xf32>
    %c12 = arith.constant 12 : index
    %c0_69 = arith.constant 0 : index
    %c0_70 = arith.constant 0 : index
    %428 = vector.load %arg3[%c12, %c0_69, %c0_70] : memref<16x8x128xbf16, #tpu.memory_space<vmem>>, vector<1x8x128xbf16>
    %429 = vector.shape_cast %428 : vector<1x8x128xbf16> to vector<8x128xbf16>
    %430 = arith.extf %429 : vector<8x128xbf16> to vector<8x128xf32>
    %431 = arith.truncf %420 : vector<8x32xf32> to vector<8x32xbf16>
    %cst_71 = arith.constant dense<0.000000e+00> : vector<8x128xf32>
    %432 = tpu.matmul %431, %3, %cst_71 {dimension_numbers = #tpu.dot_dimension_numbers<[1], [0], [0], [1], [0, 0, 1, 1], [], []>} : vector<8x32xbf16>, vector<32x128xbf16>, vector<8x128xf32> -> vector<8x128xf32>
    %433 = arith.addf %430, %432 : vector<8x128xf32>
    %434 = vector.extract_strided_slice %433 {offsets = [0, 0], sizes = [8, 96], strides = [1, 1]} : vector<8x128xf32> to vector<8x96xf32>
    %435 = arith.negf %434 : vector<8x96xf32>
    %436 = math.exp %435 : vector<8x96xf32>
    %cst_72 = arith.constant 1.000000e+00 : f32
    %437 = vector.broadcast %cst_72 : f32 to vector<8x96xf32>
    %438 = arith.addf %437, %436 : vector<8x96xf32>
    %439 = arith.divf %437, %438 : vector<8x96xf32>
    %440 = vector.extract_strided_slice %433 {offsets = [0, 96], sizes = [8, 32], strides = [1, 1]} : vector<8x128xf32> to vector<8x32xf32>
    %441 = math.tanh %440 : vector<8x32xf32>
    %442 = vector.extract_strided_slice %439 {offsets = [0, 0], sizes = [8, 32], strides = [1, 1]} : vector<8x96xf32> to vector<8x32xf32>
    %443 = vector.extract_strided_slice %439 {offsets = [0, 32], sizes = [8, 32], strides = [1, 1]} : vector<8x96xf32> to vector<8x32xf32>
    %444 = vector.extract_strided_slice %439 {offsets = [0, 64], sizes = [8, 32], strides = [1, 1]} : vector<8x96xf32> to vector<8x32xf32>
    %445 = arith.mulf %443, %423 : vector<8x32xf32>
    %446 = arith.mulf %442, %441 : vector<8x32xf32>
    %447 = arith.addf %445, %446 : vector<8x32xf32>
    %448 = math.tanh %447 : vector<8x32xf32>
    %449 = arith.mulf %444, %448 : vector<8x32xf32>
    %c12_i32 = arith.constant 12 : i32
    %450 = arith.addi %5, %c12_i32 : i32
    %451 = vector.broadcast %450 : i32 to vector<8x1xi32>
    %452 = arith.cmpi slt, %451, %4 : vector<8x1xi32>
    %453 = vector.shape_cast %452 : vector<8x1xi1> to vector<8x1xi1>
    %454 = vector.broadcast %453 : vector<8x1xi1> to vector<8x32xi1>
    %455 = arith.select %454, %449, %420 : vector<8x32xi1>, vector<8x32xf32>
    %456 = vector.shape_cast %452 : vector<8x1xi1> to vector<8x1xi1>
    %457 = vector.broadcast %456 : vector<8x1xi1> to vector<8x32xi1>
    %458 = arith.select %457, %447, %423 : vector<8x32xi1>, vector<8x32xf32>
    %cst_73 = arith.constant 0.000000e+00 : f32
    %459 = vector.shape_cast %452 : vector<8x1xi1> to vector<8x1xi1>
    %460 = vector.broadcast %459 : vector<8x1xi1> to vector<8x32xi1>
    %461 = vector.broadcast %cst_73 : f32 to vector<8x32xf32>
    %462 = arith.select %460, %449, %461 : vector<8x32xi1>, vector<8x32xf32>
    %c13 = arith.constant 13 : index
    %c0_74 = arith.constant 0 : index
    %c0_75 = arith.constant 0 : index
    %463 = vector.load %arg3[%c13, %c0_74, %c0_75] : memref<16x8x128xbf16, #tpu.memory_space<vmem>>, vector<1x8x128xbf16>
    %464 = vector.shape_cast %463 : vector<1x8x128xbf16> to vector<8x128xbf16>
    %465 = arith.extf %464 : vector<8x128xbf16> to vector<8x128xf32>
    %466 = arith.truncf %455 : vector<8x32xf32> to vector<8x32xbf16>
    %cst_76 = arith.constant dense<0.000000e+00> : vector<8x128xf32>
    %467 = tpu.matmul %466, %3, %cst_76 {dimension_numbers = #tpu.dot_dimension_numbers<[1], [0], [0], [1], [0, 0, 1, 1], [], []>} : vector<8x32xbf16>, vector<32x128xbf16>, vector<8x128xf32> -> vector<8x128xf32>
    %468 = arith.addf %465, %467 : vector<8x128xf32>
    %469 = vector.extract_strided_slice %468 {offsets = [0, 0], sizes = [8, 96], strides = [1, 1]} : vector<8x128xf32> to vector<8x96xf32>
    %470 = arith.negf %469 : vector<8x96xf32>
    %471 = math.exp %470 : vector<8x96xf32>
    %cst_77 = arith.constant 1.000000e+00 : f32
    %472 = vector.broadcast %cst_77 : f32 to vector<8x96xf32>
    %473 = arith.addf %472, %471 : vector<8x96xf32>
    %474 = arith.divf %472, %473 : vector<8x96xf32>
    %475 = vector.extract_strided_slice %468 {offsets = [0, 96], sizes = [8, 32], strides = [1, 1]} : vector<8x128xf32> to vector<8x32xf32>
    %476 = math.tanh %475 : vector<8x32xf32>
    %477 = vector.extract_strided_slice %474 {offsets = [0, 0], sizes = [8, 32], strides = [1, 1]} : vector<8x96xf32> to vector<8x32xf32>
    %478 = vector.extract_strided_slice %474 {offsets = [0, 32], sizes = [8, 32], strides = [1, 1]} : vector<8x96xf32> to vector<8x32xf32>
    %479 = vector.extract_strided_slice %474 {offsets = [0, 64], sizes = [8, 32], strides = [1, 1]} : vector<8x96xf32> to vector<8x32xf32>
    %480 = arith.mulf %478, %458 : vector<8x32xf32>
    %481 = arith.mulf %477, %476 : vector<8x32xf32>
    %482 = arith.addf %480, %481 : vector<8x32xf32>
    %483 = math.tanh %482 : vector<8x32xf32>
    %484 = arith.mulf %479, %483 : vector<8x32xf32>
    %c13_i32 = arith.constant 13 : i32
    %485 = arith.addi %5, %c13_i32 : i32
    %486 = vector.broadcast %485 : i32 to vector<8x1xi32>
    %487 = arith.cmpi slt, %486, %4 : vector<8x1xi32>
    %488 = vector.shape_cast %487 : vector<8x1xi1> to vector<8x1xi1>
    %489 = vector.broadcast %488 : vector<8x1xi1> to vector<8x32xi1>
    %490 = arith.select %489, %484, %455 : vector<8x32xi1>, vector<8x32xf32>
    %491 = vector.shape_cast %487 : vector<8x1xi1> to vector<8x1xi1>
    %492 = vector.broadcast %491 : vector<8x1xi1> to vector<8x32xi1>
    %493 = arith.select %492, %482, %458 : vector<8x32xi1>, vector<8x32xf32>
    %cst_78 = arith.constant 0.000000e+00 : f32
    %494 = vector.shape_cast %487 : vector<8x1xi1> to vector<8x1xi1>
    %495 = vector.broadcast %494 : vector<8x1xi1> to vector<8x32xi1>
    %496 = vector.broadcast %cst_78 : f32 to vector<8x32xf32>
    %497 = arith.select %495, %484, %496 : vector<8x32xi1>, vector<8x32xf32>
    %c14 = arith.constant 14 : index
    %c0_79 = arith.constant 0 : index
    %c0_80 = arith.constant 0 : index
    %498 = vector.load %arg3[%c14, %c0_79, %c0_80] : memref<16x8x128xbf16, #tpu.memory_space<vmem>>, vector<1x8x128xbf16>
    %499 = vector.shape_cast %498 : vector<1x8x128xbf16> to vector<8x128xbf16>
    %500 = arith.extf %499 : vector<8x128xbf16> to vector<8x128xf32>
    %501 = arith.truncf %490 : vector<8x32xf32> to vector<8x32xbf16>
    %cst_81 = arith.constant dense<0.000000e+00> : vector<8x128xf32>
    %502 = tpu.matmul %501, %3, %cst_81 {dimension_numbers = #tpu.dot_dimension_numbers<[1], [0], [0], [1], [0, 0, 1, 1], [], []>} : vector<8x32xbf16>, vector<32x128xbf16>, vector<8x128xf32> -> vector<8x128xf32>
    %503 = arith.addf %500, %502 : vector<8x128xf32>
    %504 = vector.extract_strided_slice %503 {offsets = [0, 0], sizes = [8, 96], strides = [1, 1]} : vector<8x128xf32> to vector<8x96xf32>
    %505 = arith.negf %504 : vector<8x96xf32>
    %506 = math.exp %505 : vector<8x96xf32>
    %cst_82 = arith.constant 1.000000e+00 : f32
    %507 = vector.broadcast %cst_82 : f32 to vector<8x96xf32>
    %508 = arith.addf %507, %506 : vector<8x96xf32>
    %509 = arith.divf %507, %508 : vector<8x96xf32>
    %510 = vector.extract_strided_slice %503 {offsets = [0, 96], sizes = [8, 32], strides = [1, 1]} : vector<8x128xf32> to vector<8x32xf32>
    %511 = math.tanh %510 : vector<8x32xf32>
    %512 = vector.extract_strided_slice %509 {offsets = [0, 0], sizes = [8, 32], strides = [1, 1]} : vector<8x96xf32> to vector<8x32xf32>
    %513 = vector.extract_strided_slice %509 {offsets = [0, 32], sizes = [8, 32], strides = [1, 1]} : vector<8x96xf32> to vector<8x32xf32>
    %514 = vector.extract_strided_slice %509 {offsets = [0, 64], sizes = [8, 32], strides = [1, 1]} : vector<8x96xf32> to vector<8x32xf32>
    %515 = arith.mulf %513, %493 : vector<8x32xf32>
    %516 = arith.mulf %512, %511 : vector<8x32xf32>
    %517 = arith.addf %515, %516 : vector<8x32xf32>
    %518 = math.tanh %517 : vector<8x32xf32>
    %519 = arith.mulf %514, %518 : vector<8x32xf32>
    %c14_i32 = arith.constant 14 : i32
    %520 = arith.addi %5, %c14_i32 : i32
    %521 = vector.broadcast %520 : i32 to vector<8x1xi32>
    %522 = arith.cmpi slt, %521, %4 : vector<8x1xi32>
    %523 = vector.shape_cast %522 : vector<8x1xi1> to vector<8x1xi1>
    %524 = vector.broadcast %523 : vector<8x1xi1> to vector<8x32xi1>
    %525 = arith.select %524, %519, %490 : vector<8x32xi1>, vector<8x32xf32>
    %526 = vector.shape_cast %522 : vector<8x1xi1> to vector<8x1xi1>
    %527 = vector.broadcast %526 : vector<8x1xi1> to vector<8x32xi1>
    %528 = arith.select %527, %517, %493 : vector<8x32xi1>, vector<8x32xf32>
    %cst_83 = arith.constant 0.000000e+00 : f32
    %529 = vector.shape_cast %522 : vector<8x1xi1> to vector<8x1xi1>
    %530 = vector.broadcast %529 : vector<8x1xi1> to vector<8x32xi1>
    %531 = vector.broadcast %cst_83 : f32 to vector<8x32xf32>
    %532 = arith.select %530, %519, %531 : vector<8x32xi1>, vector<8x32xf32>
    %c15 = arith.constant 15 : index
    %c0_84 = arith.constant 0 : index
    %c0_85 = arith.constant 0 : index
    %533 = vector.load %arg3[%c15, %c0_84, %c0_85] : memref<16x8x128xbf16, #tpu.memory_space<vmem>>, vector<1x8x128xbf16>
    %534 = vector.shape_cast %533 : vector<1x8x128xbf16> to vector<8x128xbf16>
    %535 = arith.extf %534 : vector<8x128xbf16> to vector<8x128xf32>
    %536 = arith.truncf %525 : vector<8x32xf32> to vector<8x32xbf16>
    %cst_86 = arith.constant dense<0.000000e+00> : vector<8x128xf32>
    %537 = tpu.matmul %536, %3, %cst_86 {dimension_numbers = #tpu.dot_dimension_numbers<[1], [0], [0], [1], [0, 0, 1, 1], [], []>} : vector<8x32xbf16>, vector<32x128xbf16>, vector<8x128xf32> -> vector<8x128xf32>
    %538 = arith.addf %535, %537 : vector<8x128xf32>
    %539 = vector.extract_strided_slice %538 {offsets = [0, 0], sizes = [8, 96], strides = [1, 1]} : vector<8x128xf32> to vector<8x96xf32>
    %540 = arith.negf %539 : vector<8x96xf32>
    %541 = math.exp %540 : vector<8x96xf32>
    %cst_87 = arith.constant 1.000000e+00 : f32
    %542 = vector.broadcast %cst_87 : f32 to vector<8x96xf32>
    %543 = arith.addf %542, %541 : vector<8x96xf32>
    %544 = arith.divf %542, %543 : vector<8x96xf32>
    %545 = vector.extract_strided_slice %538 {offsets = [0, 96], sizes = [8, 32], strides = [1, 1]} : vector<8x128xf32> to vector<8x32xf32>
    %546 = math.tanh %545 : vector<8x32xf32>
    %547 = vector.extract_strided_slice %544 {offsets = [0, 0], sizes = [8, 32], strides = [1, 1]} : vector<8x96xf32> to vector<8x32xf32>
    %548 = vector.extract_strided_slice %544 {offsets = [0, 32], sizes = [8, 32], strides = [1, 1]} : vector<8x96xf32> to vector<8x32xf32>
    %549 = vector.extract_strided_slice %544 {offsets = [0, 64], sizes = [8, 32], strides = [1, 1]} : vector<8x96xf32> to vector<8x32xf32>
    %550 = arith.mulf %548, %528 : vector<8x32xf32>
    %551 = arith.mulf %547, %546 : vector<8x32xf32>
    %552 = arith.addf %550, %551 : vector<8x32xf32>
    %553 = math.tanh %552 : vector<8x32xf32>
    %554 = arith.mulf %549, %553 : vector<8x32xf32>
    %c15_i32 = arith.constant 15 : i32
    %555 = arith.addi %5, %c15_i32 : i32
    %556 = vector.broadcast %555 : i32 to vector<8x1xi32>
    %557 = arith.cmpi slt, %556, %4 : vector<8x1xi32>
    %558 = vector.shape_cast %557 : vector<8x1xi1> to vector<8x1xi1>
    %559 = vector.broadcast %558 : vector<8x1xi1> to vector<8x32xi1>
    %560 = arith.select %559, %554, %525 : vector<8x32xi1>, vector<8x32xf32>
    %561 = vector.shape_cast %557 : vector<8x1xi1> to vector<8x1xi1>
    %562 = vector.broadcast %561 : vector<8x1xi1> to vector<8x32xi1>
    %563 = arith.select %562, %552, %528 : vector<8x32xi1>, vector<8x32xf32>
    %cst_88 = arith.constant 0.000000e+00 : f32
    %564 = vector.shape_cast %557 : vector<8x1xi1> to vector<8x1xi1>
    %565 = vector.broadcast %564 : vector<8x1xi1> to vector<8x32xi1>
    %566 = vector.broadcast %cst_88 : f32 to vector<8x32xf32>
    %567 = arith.select %565, %554, %566 : vector<8x32xi1>, vector<8x32xf32>
    %568 = tpu.concatenate %42, %77, %112, %147, %182, %217, %252, %287, %322, %357, %392, %427, %462, %497, %532, %567 in 1 : vector<8x32xf32>, vector<8x32xf32>, vector<8x32xf32>, vector<8x32xf32>, vector<8x32xf32>, vector<8x32xf32>, vector<8x32xf32>, vector<8x32xf32>, vector<8x32xf32>, vector<8x32xf32>, vector<8x32xf32>, vector<8x32xf32>, vector<8x32xf32>, vector<8x32xf32>, vector<8x32xf32>, vector<8x32xf32> -> vector<8x512xf32>
    %c0_89 = arith.constant 0 : index
    %c0_90 = arith.constant 0 : index
    %c0_91 = arith.constant 0 : index
    %569 = vector.load %arg5[%c0_89, %c0_90, %c0_91] : memref<1x8x512xf32, #tpu.memory_space<vmem>>, vector<1x8x512xf32>
    %570 = vector.shape_cast %569 : vector<1x8x512xf32> to vector<8x512xf32>
    %571 = vector.shape_cast %568 : vector<8x512xf32> to vector<1x8x512xf32>
    tpu.vector_store %arg5[%c0_89, %c0_90, %c0_91], %571 {strides = array<i32>} : memref<1x8x512xf32, #tpu.memory_space<vmem>>, vector<1x8x512xf32>,
    %c0_92 = arith.constant 0 : index
    %c0_93 = arith.constant 0 : index
    %572 = vector.load %arg6[%c0_92, %c0_93] : memref<8x32xf32, #tpu.memory_space<vmem>>, vector<8x32xf32>
    tpu.vector_store %arg6[%c0_92, %c0_93], %560 {strides = array<i32>} : memref<8x32xf32, #tpu.memory_space<vmem>>, vector<8x32xf32>,
    %c0_94 = arith.constant 0 : index
    %c0_95 = arith.constant 0 : index
    %573 = vector.load %arg7[%c0_94, %c0_95] : memref<8x32xf32, #tpu.memory_space<vmem>>, vector<8x32xf32>
    tpu.vector_store %arg7[%c0_94, %c0_95], %563 {strides = array<i32>} : memref<8x32xf32, #tpu.memory_space<vmem>>, vector<8x32xf32>,
    return
  }
  func.func @transform_0(%arg0: i32, %arg1: i32) -> (i32, i32) {
    %c0_i32 = arith.constant 0 : i32
    %c0_i32_0 = arith.constant 0 : i32
    return %arg0, %c0_i32 : i32, i32
  }
  func.func @transform_1(%arg0: i32, %arg1: i32) -> (i32, i32, i32) {
    %c0_i32 = arith.constant 0 : i32
    %c0_i32_0 = arith.constant 0 : i32
    return %arg1, %arg0, %c0_i32 : i32, i32, i32
  }
  func.func @transform_2(%arg0: i32, %arg1: i32) -> (i32, i32) {
    %c0_i32 = arith.constant 0 : i32
    %c0_i32_0 = arith.constant 0 : i32
    %c0_i32_1 = arith.constant 0 : i32
    return %c0_i32, %c0_i32_0 : i32, i32
  }
  func.func @transform_3(%arg0: i32, %arg1: i32) -> (i32, i32, i32) {
    %c0_i32 = arith.constant 0 : i32
    %c0_i32_0 = arith.constant 0 : i32
    return %arg1, %arg0, %c0_i32 : i32, i32, i32
  }
  func.func @transform_4(%arg0: i32, %arg1: i32) -> (i32, i32) {
    %c0_i32 = arith.constant 0 : i32
    %c0_i32_0 = arith.constant 0 : i32
    return %arg0, %c0_i32 : i32, i32
  }
  func.func @transform_5(%arg0: i32, %arg1: i32) -> (i32, i32) {
    %c0_i32 = arith.constant 0 : i32
    %c0_i32_0 = arith.constant 0 : i32
    return %arg0, %c0_i32 : i32, i32
  }
}

</mosaic_0001>

<llo_original>
// kernel: tpu_custom_call.1
$region0: #{tpu_custom_call.1}
  #allocation0 [shape = 'u32[]', space=smem, size = 0x4, offset = 0x4, fixed_abs, tag = 'smem constant byte address 0x4 - core index']
  #allocation1 [shape = 'u32[144,128]{1,0:T(1,128)}', space=vmem, size = 0x12000, scoped, tag = 'internal scratch']
  %s0 = inlined_call_operand.hbm [shape: s32[8,1], index: 0, kind: input, shape index: {}]
  %s1 = inlined_call_operand.hbm [shape: bf16[16,8,128], index: 1, kind: input, shape index: {}]
  %s2 = inlined_call_operand.hbm [shape: bf16[32,128], index: 2, kind: input, shape index: {}]
  %s3 = inlined_call_operand.hbm [shape: f32[1,8,512], index: 3, kind: output, shape index: {0}]
  %s4 = inlined_call_operand.hbm [shape: f32[8,32], index: 4, kind: output, shape index: {1}]
  %s5 = inlined_call_operand.hbm [shape: f32[8,32], index: 5, kind: output, shape index: {2}]
  %6 = xla_tuple %s3, %s4, %s5
  %s7 = sld [smem:[#allocation0]]
  $region54: #{tpu_custom_call.1} parent=0
    _
  %s9 = ssub.s32 1, %s7
  %s10 = scalar_select 0, %s9, %s7
  $region1: #{tpu_custom_call.1} parent=0
    #allocation2 [shape = 'u8[4096]{0}', space=vmem, size = 0x1000, scoped, tag = 'input window, operand 0, single buffered']
    #allocation3 [shape = 's32[1]{0}', space=sflag, size = 0x4, scoped, tag = 'scoped memory for tpu_custom_call.1']
    #allocation4 [shape = 's32[1]{0}', space=sflag, size = 0x4, scoped, tag = 'scoped memory for tpu_custom_call.1']
    #allocation5 [shape = 'u8[32768]{0}', space=vmem, size = 0x8000, scoped, tag = 'input window, operand 1, single buffered']
    #allocation6 [shape = 's32[1]{0}', space=sflag, size = 0x4, scoped, tag = 'scoped memory for tpu_custom_call.1']
    #allocation7 [shape = 'u8[8192]{0}', space=vmem, size = 0x2000, scoped, tag = 'input window, operand 2, single buffered']
    #allocation8 [shape = 'u8[16384]{0}', space=vmem, size = 0x4000, scoped, tag = 'output window, operand 0, single buffered']
    #allocation9 [shape = 'u8[4096]{0}', space=vmem, size = 0x1000, scoped, tag = 'output window, operand 1, single buffered']
    #allocation10 [shape = 's32[1]{0}', space=sflag, size = 0x4, scoped, tag = 'scoped memory for tpu_custom_call.1']
    #allocation11 [shape = 'u8[4096]{0}', space=vmem, size = 0x1000, scoped, tag = 'output window, operand 2, single buffered']
    %11 = vsyncpa [#allocation3], 0
    %12 = vsyncpa [#allocation6], 0
    %13 = vsyncpa [#allocation4], 0
    %14 = vsyncpa [#allocation10], 0
    // Predicated region
    $region2: #{tpu_custom_call.1} parent=1 // pred_check
      _
    $region3: #{tpu_custom_call.1} parent=1 // pred_check_branch
      %16 = sbr.rel (0) target = $region5
    $region4: #{tpu_custom_call.1} parent=1 // pred_region
      %s18 = ssub.s32 128, 128
      %19 = vsyncadd [#allocation3], %s18
      %s21 = sshll.u32 [#allocation2], 4
      %s22 = int_to_ptr.vmem [resolvable:$true] %s21
      %24 = dma.hbm_to_vmem [thread:$0]  %s0, 128, %s22, [#allocation3]
    $region5: #{tpu_custom_call.1} parent=1 // pred_fallthru
      _
    // Predicated region
    $region6: #{tpu_custom_call.1} parent=1 // pred_check
      _
    $region7: #{tpu_custom_call.1} parent=1 // pred_check_branch
      %26 = sbr.rel (0) target = $region9
    $region8: #{tpu_custom_call.1} parent=1 // pred_region
      %s28 = ssub.s32 1024, 1024
      %29 = vsyncadd [#allocation6], %s28
      %s30 = sshll.u32 [#allocation5], 4
      %s31 = int_to_ptr.vmem [resolvable:$true] %s30
      %36 = dma.hbm_to_vmem [thread:$0]  %s1, 1024, %s31, [#allocation6], 64, 64, 4
    $region9: #{tpu_custom_call.1} parent=1 // pred_fallthru
      _
    // Predicated region
    $region10: #{tpu_custom_call.1} parent=1 // pred_check
      _
    $region11: #{tpu_custom_call.1} parent=1 // pred_check_branch
      %38 = sbr.rel (0) target = $region13
    $region12: #{tpu_custom_call.1} parent=1 // pred_region
      %s40 = ssub.s32 256, 256
      %41 = vsyncadd [#allocation6], %s40
      %s42 = sshll.u32 [#allocation7], 4
      %s43 = int_to_ptr.vmem [resolvable:$true] %s42
      %48 = dma.hbm_to_vmem [thread:$0]  %s2, 256, %s43, [#allocation6], 64, 64, 4
    $region13: #{tpu_custom_call.1} parent=1 // pred_fallthru
      _
    // Predicated region
    $region14: #{tpu_custom_call.1} parent=1 // pred_check
      _
    $region15: #{tpu_custom_call.1} parent=1 // pred_check_branch
      %50 = sbr.rel (0) target = $region17
    $region16: #{tpu_custom_call.1} parent=1 // pred_region
      %51 = dma.done [#allocation3], 128
    $region17: #{tpu_custom_call.1} parent=1 // pred_fallthru
      _
    // Predicated region
    $region18: #{tpu_custom_call.1} parent=1 // pred_check
      _
    $region19: #{tpu_custom_call.1} parent=1 // pred_check_branch
      %53 = sbr.rel (0) target = $region21
    $region20: #{tpu_custom_call.1} parent=1 // pred_region
      %54 = dma.done [#allocation6], 1024
    $region21: #{tpu_custom_call.1} parent=1 // pred_fallthru
      _
    // Predicated region
    $region22: #{tpu_custom_call.1} parent=1 // pred_check
      _
    $region23: #{tpu_custom_call.1} parent=1 // pred_check_branch
      %56 = sbr.rel (0) target = $region25
    $region24: #{tpu_custom_call.1} parent=1 // pred_region
      %57 = dma.done [#allocation6], 256
    $region25: #{tpu_custom_call.1} parent=1 // pred_fallthru
      _
    %p59 = scmp.eq.s32.totalorder 0, 0
    // Predicated region
    $region26: #{tpu_custom_call.1} parent=1 // pred_check
      %p60 = pneg %p59
    $region27: #{tpu_custom_call.1} parent=1 // pred_check_branch
      %62 = sbr.rel (%p60) target = $region29
    $region28: #{tpu_custom_call.1} parent=1 // pred_region
      %vm63 = vcmask 261120
      %64 = vst.msk [vmem:[#allocation9] sm:$0xff] %vm63, 0.0
      %65 = vst.msk [vmem:[#allocation11] sm:$0xff] %vm63, 0.0
    $region29: #{tpu_custom_call.1} parent=1 // pred_fallthru
      _
    %v66 = vld [vmem:[#allocation7] sm:$0xf]
    %v67 = vld [vmem:[#allocation7 + $0x4] sm:$0xf]
    %v68 = vld [vmem:[#allocation7 + $0x8] sm:$0xf]
    %v69 = vld [vmem:[#allocation7 + $0xc] sm:$0xf]
    %v70 = vld [vmem:[#allocation2] sm:$0xff]
    %s71 = smul.u32 0, 16
    %v72 = vld [vmem:[#allocation9] sm:$0xff]
    %v73 = vld [vmem:[#allocation11] sm:$0xff]
    %v74 = vld [vmem:[#allocation5] sm:$0xf]
    %v75 = vunpack.c.l.bf16 %v74
    %v76 = vpack.c.bf16 %v72, %v72
    %v81 = vunpack.c.l.b16 %v66
    %v82 = vunpack.c.l.b16 %v67
    %v83 = vunpack.c.l.b16 %v68
    %v84 = vunpack.c.l.b16 %v69
    %v85 = vpack.c.b16 %v82, %v81
    %v86 = vpack.c.b16 %v84, %v83
    %vm89 = vcmask 261120
    %v91 = vsel %vm89, %v76, 0
    %93 = vmatprep.subr.bf16.mxu0 0
    %94 = vmatpush1.bf16.msra.mxu0 %v85
    %95 = vmatprep.subr.bf16.mxu0 0
    %96 = vmatpush1.bf16.msra.mxu0 %v86
    %97 = vmatprep.subr.bf16.mxu0 0
    %98 = vmatpush1.bf16.msra.mxu0 0
    %99 = vmatprep.subr.bf16.mxu0 0
    %100 = vmatpush1.bf16.msra.mxu0 0
    %101 = vmatprep.subr.bf16.mxu0 0
    %102 = vmatpush1.bf16.msra.mxu0 0
    %103 = vmatprep.subr.bf16.mxu0 0
    %104 = vmatpush1.bf16.msra.mxu0 0
    %105 = vmatprep.subr.bf16.mxu0 0
    %106 = vmatpush1.bf16.msra.mxu0 0
    %107 = vmatprep.subr.bf16.mxu0 0
    %108 = vmatpush1.bf16.msra.mxu0 0
    %109 = vmatprep.subr.bf16.mxu0 0
    %110 = vmatpush1.bf16.msra.mxu0 0
    %111 = vmatprep.subr.bf16.mxu0 0
    %112 = vmatpush1.bf16.msra.mxu0 0
    %113 = vmatprep.subr.bf16.mxu0 0
    %114 = vmatpush1.bf16.msra.mxu0 0
    %115 = vmatprep.subr.bf16.mxu0 0
    %116 = vmatpush1.bf16.msra.mxu0 0
    %117 = vmatprep.subr.bf16.mxu0 0
    %118 = vmatpush1.bf16.msra.mxu0 0
    %119 = vmatprep.subr.bf16.mxu0 0
    %120 = vmatpush1.bf16.msra.mxu0 0
    %121 = vmatprep.subr.bf16.mxu0 0
    %122 = vmatpush1.bf16.msra.mxu0 0
    %123 = vmatprep.subr.bf16.mxu0 0
    %124 = vmatpush1.bf16.msra.mxu0 0
    %125 = vmatprep.mubr.bf16.mxu0 0
    %126 = vmatmul.mubr.bf16.gmra.mrb[0].mxu0 %v91
    %v127 = vpop.f32.mrb[0].mxu0
    %v128 = vadd.f32 0.0, %v127
    %v129 = vpop.f32.mrb[0].mxu0
    %v130 = vpop.f32.mrb[0].mxu0
    %v131 = vpop.f32.mrb[0].mxu0
    %132 = vdwg.mxu0
    %v133 = vadd.f32 %v75, %v128
    %v134 = vxor.u32 %v133, 2147483648
    %v135 = vmul.f32 %v134, 1.442695
    %v136 = vpow.pop %v135
    %v137 = vadd.f32 %v136, 1.0
    %v138 = vrcp.pop %v137
    %v139 = vmul.f32 1.0, %v138
    %v140 = vtanh.pop %v133
    %142 = vrot.lane.b32.xlu0 %v73, 32
    %v143 = vpop.permute.xlu0 %142
    %v145 = vmul.f32 %v139, %v143
    %147 = vrot.lane.b32.xlu0 %v140, 32
    %v148 = vpop.permute.xlu0 %147
    %v150 = vmul.f32 %v139, %v148
    %152 = vrot.lane.b32.xlu0 %v150, 32
    %v153 = vpop.permute.xlu0 %152
    %v155 = vadd.f32 %v145, %v153
    %v156 = vtanh.pop %v155
    %158 = vrot.lane.b32.xlu0 %v156, 32
    %v159 = vpop.permute.xlu0 %158
    %v161 = vmul.f32 %v139, %v159
    %v162 = vstv %s71
    %vm163 = vcmp.lt.s32.totalorder %v162, %v70
    %v164 = vsel %vm163, 1, 0
    %165 = vset.pattern.permute.xlu0 0
    %166 = vperm.xlu0 %165, %v164
    %v167 = vpop.permute.xlu0 %166
    %vm168 = vcmp.eq.s32.totalorder %v167, 1
    %170 = vrot.lane.b32.xlu0 %v72, 64
    %v171 = vpop.permute.xlu0 %170
    %v173 = vsel %vm168, %v161, %v171
    %v174 = vsel %vm168, %v155, %v143
    %v175 = vsel %vm168, %v161, 0.0
    %s176 = scalar_lea.vmem [#allocation5], 4
    %v177 = vld [vmem:[%s176] sm:$0xf]
    %v178 = vunpack.c.l.bf16 %v177
    %v179 = vpack.c.bf16 %v173, %v173
    %181 = vrot.lane.b32.xlu0 %v179, 64
    %v182 = vpop.permute.xlu0 %181
    %v184 = vsel %vm89, %v182, 0
    %186 = vmatprep.subr.bf16.mxu0 0
    %187 = vmatpush1.bf16.msra.mxu0 %v85
    %188 = vmatprep.subr.bf16.mxu0 0
    %189 = vmatpush1.bf16.msra.mxu0 %v86
    %190 = vmatprep.subr.bf16.mxu0 0
    %191 = vmatpush1.bf16.msra.mxu0 0
    %192 = vmatprep.subr.bf16.mxu0 0
    %193 = vmatpush1.bf16.msra.mxu0 0
    %194 = vmatprep.subr.bf16.mxu0 0
    %195 = vmatpush1.bf16.msra.mxu0 0
    %196 = vmatprep.subr.bf16.mxu0 0
    %197 = vmatpush1.bf16.msra.mxu0 0
    %198 = vmatprep.subr.bf16.mxu0 0
    %199 = vmatpush1.bf16.msra.mxu0 0
    %200 = vmatprep.subr.bf16.mxu0 0
    %201 = vmatpush1.bf16.msra.mxu0 0
    %202 = vmatprep.subr.bf16.mxu0 0
    %203 = vmatpush1.bf16.msra.mxu0 0
    %204 = vmatprep.subr.bf16.mxu0 0
    %205 = vmatpush1.bf16.msra.mxu0 0
    %206 = vmatprep.subr.bf16.mxu0 0
    %207 = vmatpush1.bf16.msra.mxu0 0
    %208 = vmatprep.subr.bf16.mxu0 0
    %209 = vmatpush1.bf16.msra.mxu0 0
    %210 = vmatprep.subr.bf16.mxu0 0
    %211 = vmatpush1.bf16.msra.mxu0 0
    %212 = vmatprep.subr.bf16.mxu0 0
    %213 = vmatpush1.bf16.msra.mxu0 0
    %214 = vmatprep.subr.bf16.mxu0 0
    %215 = vmatpush1.bf16.msra.mxu0 0
    %216 = vmatprep.subr.bf16.mxu0 0
    %217 = vmatpush1.bf16.msra.mxu0 0
    %218 = vmatprep.mubr.bf16.mxu0 0
    %219 = vmatmul.mubr.bf16.gmra.mrb[0].mxu0 %v184
    %v220 = vpop.f32.mrb[0].mxu0
    %v221 = vadd.f32 0.0, %v220
    %v222 = vpop.f32.mrb[0].mxu0
    %v223 = vpop.f32.mrb[0].mxu0
    %v224 = vpop.f32.mrb[0].mxu0
    %225 = vdwg.mxu0
    %v226 = vadd.f32 %v178, %v221
    %v227 = vxor.u32 %v226, 2147483648
    %v228 = vmul.f32 %v227, 1.442695
    %v229 = vpow.pop %v228
    %v230 = vadd.f32 %v229, 1.0
    %v231 = vrcp.pop %v230
    %v232 = vmul.f32 1.0, %v231
    %v233 = vtanh.pop %v226
    %v234 = vmul.f32 %v232, %v174
    %236 = vrot.lane.b32.xlu0 %v233, 32
    %v237 = vpop.permute.xlu0 %236
    %v239 = vmul.f32 %v232, %v237
    %241 = vrot.lane.b32.xlu0 %v239, 32
    %v242 = vpop.permute.xlu0 %241
    %v244 = vadd.f32 %v234, %v242
    %v245 = vtanh.pop %v244
    %247 = vrot.lane.b32.xlu0 %v245, 32
    %v248 = vpop.permute.xlu0 %247
    %v250 = vmul.f32 %v232, %v248
    %s251 = sadd.s32 %s71, 1
    %v252 = vstv %s251
    %vm253 = vcmp.lt.s32.totalorder %v252, %v70
    %v254 = vsel %vm253, 1, 0
    %255 = vset.pattern.permute.xlu0 0
    %256 = vperm.xlu0 %255, %v254
    %v257 = vpop.permute.xlu0 %256
    %vm258 = vcmp.eq.s32.totalorder %v257, 1
    %v259 = vsel %vm258, %v250, %v173
    %v260 = vsel %vm258, %v244, %v174
    %v261 = vsel %vm258, %v250, 0.0
    %s262 = scalar_lea.vmem [#allocation5], 8
    %v263 = vld [vmem:[%s262] sm:$0xf]
    %v264 = vunpack.c.l.bf16 %v263
    %v265 = vpack.c.bf16 %v259, %v259
    %267 = vrot.lane.b32.xlu0 %v265, 64
    %v268 = vpop.permute.xlu0 %267
    %v270 = vsel %vm89, %v268, 0
    %272 = vmatprep.subr.bf16.mxu0 0
    %273 = vmatpush1.bf16.msra.mxu0 %v85
    %274 = vmatprep.subr.bf16.mxu0 0
    %275 = vmatpush1.bf16.msra.mxu0 %v86
    %276 = vmatprep.subr.bf16.mxu0 0
    %277 = vmatpush1.bf16.msra.mxu0 0
    %278 = vmatprep.subr.bf16.mxu0 0
    %279 = vmatpush1.bf16.msra.mxu0 0
    %280 = vmatprep.subr.bf16.mxu0 0
    %281 = vmatpush1.bf16.msra.mxu0 0
    %282 = vmatprep.subr.bf16.mxu0 0
    %283 = vmatpush1.bf16.msra.mxu0 0
    %284 = vmatprep.subr.bf16.mxu0 0
    %285 = vmatpush1.bf16.msra.mxu0 0
    %286 = vmatprep.subr.bf16.mxu0 0
    %287 = vmatpush1.bf16.msra.mxu0 0
    %288 = vmatprep.subr.bf16.mxu0 0
    %289 = vmatpush1.bf16.msra.mxu0 0
    %290 = vmatprep.subr.bf16.mxu0 0
    %291 = vmatpush1.bf16.msra.mxu0 0
    %292 = vmatprep.subr.bf16.mxu0 0
    %293 = vmatpush1.bf16.msra.mxu0 0
    %294 = vmatprep.subr.bf16.mxu0 0
    %295 = vmatpush1.bf16.msra.mxu0 0
    %296 = vmatprep.subr.bf16.mxu0 0
    %297 = vmatpush1.bf16.msra.mxu0 0
    %298 = vmatprep.subr.bf16.mxu0 0
    %299 = vmatpush1.bf16.msra.mxu0 0
    %300 = vmatprep.subr.bf16.mxu0 0
    %301 = vmatpush1.bf16.msra.mxu0 0
    %302 = vmatprep.subr.bf16.mxu0 0
    %303 = vmatpush1.bf16.msra.mxu0 0
    %304 = vmatprep.mubr.bf16.mxu0 0
    %305 = vmatmul.mubr.bf16.gmra.mrb[0].mxu0 %v270
    %v306 = vpop.f32.mrb[0].mxu0
    %v307 = vadd.f32 0.0, %v306
    %v308 = vpop.f32.mrb[0].mxu0
    %v309 = vpop.f32.mrb[0].mxu0
    %v310 = vpop.f32.mrb[0].mxu0
    %311 = vdwg.mxu0
    %v312 = vadd.f32 %v264, %v307
    %v313 = vxor.u32 %v312, 2147483648
    %v314 = vmul.f32 %v313, 1.442695
    %v315 = vpow.pop %v314
    %v316 = vadd.f32 %v315, 1.0
    %v317 = vrcp.pop %v316
    %v318 = vmul.f32 1.0, %v317
    %v319 = vtanh.pop %v312
    %v320 = vmul.f32 %v318, %v260
    %322 = vrot.lane.b32.xlu0 %v319, 32
    %v323 = vpop.permute.xlu0 %322
    %v325 = vmul.f32 %v318, %v323
    %327 = vrot.lane.b32.xlu0 %v325, 32
    %v328 = vpop.permute.xlu0 %327
    %v330 = vadd.f32 %v320, %v328
    %v331 = vtanh.pop %v330
    %333 = vrot.lane.b32.xlu0 %v331, 32
    %v334 = vpop.permute.xlu0 %333
    %v336 = vmul.f32 %v318, %v334
    %s337 = sadd.s32 %s71, 2
    %v338 = vstv %s337
    %vm339 = vcmp.lt.s32.totalorder %v338, %v70
    %v340 = vsel %vm339, 1, 0
    %341 = vset.pattern.permute.xlu0 0
    %342 = vperm.xlu0 %341, %v340
    %v343 = vpop.permute.xlu0 %342
    %vm344 = vcmp.eq.s32.totalorder %v343, 1
    %v345 = vsel %vm344, %v336, %v259
    %v346 = vsel %vm344, %v330, %v260
    %v347 = vsel %vm344, %v336, 0.0
    %s348 = scalar_lea.vmem [#allocation5], 12
    %v349 = vld [vmem:[%s348] sm:$0xf]
    %v350 = vunpack.c.l.bf16 %v349
    %v351 = vpack.c.bf16 %v345, %v345
    %353 = vrot.lane.b32.xlu0 %v351, 64
    %v354 = vpop.permute.xlu0 %353
    %v356 = vsel %vm89, %v354, 0
    %358 = vmatprep.subr.bf16.mxu0 0
    %359 = vmatpush1.bf16.msra.mxu0 %v85
    %360 = vmatprep.subr.bf16.mxu0 0
    %361 = vmatpush1.bf16.msra.mxu0 %v86
    %362 = vmatprep.subr.bf16.mxu0 0
    %363 = vmatpush1.bf16.msra.mxu0 0
    %364 = vmatprep.subr.bf16.mxu0 0
    %365 = vmatpush1.bf16.msra.mxu0 0
    %366 = vmatprep.subr.bf16.mxu0 0
    %367 = vmatpush1.bf16.msra.mxu0 0
    %368 = vmatprep.subr.bf16.mxu0 0
    %369 = vmatpush1.bf16.msra.mxu0 0
    %370 = vmatprep.subr.bf16.mxu0 0
    %371 = vmatpush1.bf16.msra.mxu0 0
    %372 = vmatprep.subr.bf16.mxu0 0
    %373 = vmatpush1.bf16.msra.mxu0 0
    %374 = vmatprep.subr.bf16.mxu0 0
    %375 = vmatpush1.bf16.msra.mxu0 0
    %376 = vmatprep.subr.bf16.mxu0 0
    %377 = vmatpush1.bf16.msra.mxu0 0
    %378 = vmatprep.subr.bf16.mxu0 0
    %379 = vmatpush1.bf16.msra.mxu0 0
    %380 = vmatprep.subr.bf16.mxu0 0
    %381 = vmatpush1.bf16.msra.mxu0 0
    %382 = vmatprep.subr.bf16.mxu0 0
    %383 = vmatpush1.bf16.msra.mxu0 0
    %384 = vmatprep.subr.bf16.mxu0 0
    %385 = vmatpush1.bf16.msra.mxu0 0
    %386 = vmatprep.subr.bf16.mxu0 0
    %387 = vmatpush1.bf16.msra.mxu0 0
    %388 = vmatprep.subr.bf16.mxu0 0
    %389 = vmatpush1.bf16.msra.mxu0 0
    %390 = vmatprep.mubr.bf16.mxu0 0
    %391 = vmatmul.mubr.bf16.gmra.mrb[0].mxu0 %v356
    %v392 = vpop.f32.mrb[0].mxu0
    %v393 = vadd.f32 0.0, %v392
    %v394 = vpop.f32.mrb[0].mxu0
    %v395 = vpop.f32.mrb[0].mxu0
    %v396 = vpop.f32.mrb[0].mxu0
    %397 = vdwg.mxu0
    %v398 = vadd.f32 %v350, %v393
    %v399 = vxor.u32 %v398, 2147483648
    %v400 = vmul.f32 %v399, 1.442695
    %v401 = vpow.pop %v400
    %v402 = vadd.f32 %v401, 1.0
    %v403 = vrcp.pop %v402
    %v404 = vmul.f32 1.0, %v403
    %v405 = vtanh.pop %v398
    %v406 = vmul.f32 %v404, %v346
    %408 = vrot.lane.b32.xlu0 %v405, 32
    %v409 = vpop.permute.xlu0 %408
    %v411 = vmul.f32 %v404, %v409
    %413 = vrot.lane.b32.xlu0 %v411, 32
    %v414 = vpop.permute.xlu0 %413
    %v416 = vadd.f32 %v406, %v414
    %v417 = vtanh.pop %v416
    %419 = vrot.lane.b32.xlu0 %v417, 32
    %v420 = vpop.permute.xlu0 %419
    %v422 = vmul.f32 %v404, %v420
    %s423 = sadd.s32 %s71, 3
    %v424 = vstv %s423
    %vm425 = vcmp.lt.s32.totalorder %v424, %v70
    %v426 = vsel %vm425, 1, 0
    %427 = vset.pattern.permute.xlu0 0
    %428 = vperm.xlu0 %427, %v426
    %v429 = vpop.permute.xlu0 %428
    %vm430 = vcmp.eq.s32.totalorder %v429, 1
    %v431 = vsel %vm430, %v422, %v345
    %v432 = vsel %vm430, %v416, %v346
    %v433 = vsel %vm430, %v422, 0.0
    %s434 = scalar_lea.vmem [#allocation5], 16
    %v435 = vld [vmem:[%s434] sm:$0xf]
    %v436 = vunpack.c.l.bf16 %v435
    %v437 = vpack.c.bf16 %v431, %v431
    %439 = vrot.lane.b32.xlu0 %v437, 64
    %v440 = vpop.permute.xlu0 %439
    %v442 = vsel %vm89, %v440, 0
    %444 = vmatprep.subr.bf16.mxu0 0
    %445 = vmatpush1.bf16.msra.mxu0 %v85
    %446 = vmatprep.subr.bf16.mxu0 0
    %447 = vmatpush1.bf16.msra.mxu0 %v86
    %448 = vmatprep.subr.bf16.mxu0 0
    %449 = vmatpush1.bf16.msra.mxu0 0
    %450 = vmatprep.subr.bf16.mxu0 0
    %451 = vmatpush1.bf16.msra.mxu0 0
    %452 = vmatprep.subr.bf16.mxu0 0
    %453 = vmatpush1.bf16.msra.mxu0 0
    %454 = vmatprep.subr.bf16.mxu0 0
    %455 = vmatpush1.bf16.msra.mxu0 0
    %456 = vmatprep.subr.bf16.mxu0 0
    %457 = vmatpush1.bf16.msra.mxu0 0
    %458 = vmatprep.subr.bf16.mxu0 0
    %459 = vmatpush1.bf16.msra.mxu0 0
    %460 = vmatprep.subr.bf16.mxu0 0
    %461 = vmatpush1.bf16.msra.mxu0 0
    %462 = vmatprep.subr.bf16.mxu0 0
    %463 = vmatpush1.bf16.msra.mxu0 0
    %464 = vmatprep.subr.bf16.mxu0 0
    %465 = vmatpush1.bf16.msra.mxu0 0
    %466 = vmatprep.subr.bf16.mxu0 0
    %467 = vmatpush1.bf16.msra.mxu0 0
    %468 = vmatprep.subr.bf16.mxu0 0
    %469 = vmatpush1.bf16.msra.mxu0 0
    %470 = vmatprep.subr.bf16.mxu0 0
    %471 = vmatpush1.bf16.msra.mxu0 0
    %472 = vmatprep.subr.bf16.mxu0 0
    %473 = vmatpush1.bf16.msra.mxu0 0
    %474 = vmatprep.subr.bf16.mxu0 0
    %475 = vmatpush1.bf16.msra.mxu0 0
    %476 = vmatprep.mubr.bf16.mxu0 0
    %477 = vmatmul.mubr.bf16.gmra.mrb[0].mxu0 %v442
    %v478 = vpop.f32.mrb[0].mxu0
    %v479 = vadd.f32 0.0, %v478
    %v480 = vpop.f32.mrb[0].mxu0
    %v481 = vpop.f32.mrb[0].mxu0
    %v482 = vpop.f32.mrb[0].mxu0
    %483 = vdwg.mxu0
    %v484 = vadd.f32 %v436, %v479
    %v485 = vxor.u32 %v484, 2147483648
    %v486 = vmul.f32 %v485, 1.442695
    %v487 = vpow.pop %v486
    %v488 = vadd.f32 %v487, 1.0
    %v489 = vrcp.pop %v488
    %v490 = vmul.f32 1.0, %v489
    %v491 = vtanh.pop %v484
    %v492 = vmul.f32 %v490, %v432
    %494 = vrot.lane.b32.xlu0 %v491, 32
    %v495 = vpop.permute.xlu0 %494
    %v497 = vmul.f32 %v490, %v495
    %499 = vrot.lane.b32.xlu0 %v497, 32
    %v500 = vpop.permute.xlu0 %499
    %v502 = vadd.f32 %v492, %v500
    %v503 = vtanh.pop %v502
    %505 = vrot.lane.b32.xlu0 %v503, 32
    %v506 = vpop.permute.xlu0 %505
    %v508 = vmul.f32 %v490, %v506
    %s509 = sadd.s32 %s71, 4
    %v510 = vstv %s509
    %vm511 = vcmp.lt.s32.totalorder %v510, %v70
    %v512 = vsel %vm511, 1, 0
    %513 = vset.pattern.permute.xlu0 0
    %514 = vperm.xlu0 %513, %v512
    %v515 = vpop.permute.xlu0 %514
    %vm516 = vcmp.eq.s32.totalorder %v515, 1
    %v517 = vsel %vm516, %v508, %v431
    %v518 = vsel %vm516, %v502, %v432
    %v519 = vsel %vm516, %v508, 0.0
    %s520 = scalar_lea.vmem [#allocation5], 20
    %v521 = vld [vmem:[%s520] sm:$0xf]
    %v522 = vunpack.c.l.bf16 %v521
    %v523 = vpack.c.bf16 %v517, %v517
    %525 = vrot.lane.b32.xlu0 %v523, 64
    %v526 = vpop.permute.xlu0 %525
    %v528 = vsel %vm89, %v526, 0
    %530 = vmatprep.subr.bf16.mxu0 0
    %531 = vmatpush1.bf16.msra.mxu0 %v85
    %532 = vmatprep.subr.bf16.mxu0 0
    %533 = vmatpush1.bf16.msra.mxu0 %v86
    %534 = vmatprep.subr.bf16.mxu0 0
    %535 = vmatpush1.bf16.msra.mxu0 0
    %536 = vmatprep.subr.bf16.mxu0 0
    %537 = vmatpush1.bf16.msra.mxu0 0
    %538 = vmatprep.subr.bf16.mxu0 0
    %539 = vmatpush1.bf16.msra.mxu0 0
    %540 = vmatprep.subr.bf16.mxu0 0
    %541 = vmatpush1.bf16.msra.mxu0 0
    %542 = vmatprep.subr.bf16.mxu0 0
    %543 = vmatpush1.bf16.msra.mxu0 0
    %544 = vmatprep.subr.bf16.mxu0 0
    %545 = vmatpush1.bf16.msra.mxu0 0
    %546 = vmatprep.subr.bf16.mxu0 0
    %547 = vmatpush1.bf16.msra.mxu0 0
    %548 = vmatprep.subr.bf16.mxu0 0
    %549 = vmatpush1.bf16.msra.mxu0 0
    %550 = vmatprep.subr.bf16.mxu0 0
    %551 = vmatpush1.bf16.msra.mxu0 0
    %552 = vmatprep.subr.bf16.mxu0 0
    %553 = vmatpush1.bf16.msra.mxu0 0
    %554 = vmatprep.subr.bf16.mxu0 0
    %555 = vmatpush1.bf16.msra.mxu0 0
    %556 = vmatprep.subr.bf16.mxu0 0
    %557 = vmatpush1.bf16.msra.mxu0 0
    %558 = vmatprep.subr.bf16.mxu0 0
    %559 = vmatpush1.bf16.msra.mxu0 0
    %560 = vmatprep.subr.bf16.mxu0 0
    %561 = vmatpush1.bf16.msra.mxu0 0
    %562 = vmatprep.mubr.bf16.mxu0 0
    %563 = vmatmul.mubr.bf16.gmra.mrb[0].mxu0 %v528
    %v564 = vpop.f32.mrb[0].mxu0
    %v565 = vadd.f32 0.0, %v564
    %v566 = vpop.f32.mrb[0].mxu0
    %v567 = vpop.f32.mrb[0].mxu0
    %v568 = vpop.f32.mrb[0].mxu0
    %569 = vdwg.mxu0
    %v570 = vadd.f32 %v522, %v565
    %v571 = vxor.u32 %v570, 2147483648
    %v572 = vmul.f32 %v571, 1.442695
    %v573 = vpow.pop %v572
    %v574 = vadd.f32 %v573, 1.0
    %v575 = vrcp.pop %v574
    %v576 = vmul.f32 1.0, %v575
    %v577 = vtanh.pop %v570
    %v578 = vmul.f32 %v576, %v518
    %580 = vrot.lane.b32.xlu0 %v577, 32
    %v581 = vpop.permute.xlu0 %580
    %v583 = vmul.f32 %v576, %v581
    %585 = vrot.lane.b32.xlu0 %v583, 32
    %v586 = vpop.permute.xlu0 %585
    %v588 = vadd.f32 %v578, %v586
    %v589 = vtanh.pop %v588
    %591 = vrot.lane.b32.xlu0 %v589, 32
    %v592 = vpop.permute.xlu0 %591
    %v594 = vmul.f32 %v576, %v592
    %s595 = sadd.s32 %s71, 5
    %v596 = vstv %s595
    %vm597 = vcmp.lt.s32.totalorder %v596, %v70
    %v598 = vsel %vm597, 1, 0
    %599 = vset.pattern.permute.xlu0 0
    %600 = vperm.xlu0 %599, %v598
    %v601 = vpop.permute.xlu0 %600
    %vm602 = vcmp.eq.s32.totalorder %v601, 1
    %v603 = vsel %vm602, %v594, %v517
    %v604 = vsel %vm602, %v588, %v518
    %v605 = vsel %vm602, %v594, 0.0
    %s606 = scalar_lea.vmem [#allocation5], 24
    %v607 = vld [vmem:[%s606] sm:$0xf]
    %v608 = vunpack.c.l.bf16 %v607
    %v609 = vpack.c.bf16 %v603, %v603
    %611 = vrot.lane.b32.xlu0 %v609, 64
    %v612 = vpop.permute.xlu0 %611
    %v614 = vsel %vm89, %v612, 0
    %616 = vmatprep.subr.bf16.mxu0 0
    %617 = vmatpush1.bf16.msra.mxu0 %v85
    %618 = vmatprep.subr.bf16.mxu0 0
    %619 = vmatpush1.bf16.msra.mxu0 %v86
    %620 = vmatprep.subr.bf16.mxu0 0
    %621 = vmatpush1.bf16.msra.mxu0 0
    %622 = vmatprep.subr.bf16.mxu0 0
    %623 = vmatpush1.bf16.msra.mxu0 0
    %624 = vmatprep.subr.bf16.mxu0 0
    %625 = vmatpush1.bf16.msra.mxu0 0
    %626 = vmatprep.subr.bf16.mxu0 0
    %627 = vmatpush1.bf16.msra.mxu0 0
    %628 = vmatprep.subr.bf16.mxu0 0
    %629 = vmatpush1.bf16.msra.mxu0 0
    %630 = vmatprep.subr.bf16.mxu0 0
    %631 = vmatpush1.bf16.msra.mxu0 0
    %632 = vmatprep.subr.bf16.mxu0 0
    %633 = vmatpush1.bf16.msra.mxu0 0
    %634 = vmatprep.subr.bf16.mxu0 0
    %635 = vmatpush1.bf16.msra.mxu0 0
    %636 = vmatprep.subr.bf16.mxu0 0
    %637 = vmatpush1.bf16.msra.mxu0 0
    %638 = vmatprep.subr.bf16.mxu0 0
    %639 = vmatpush1.bf16.msra.mxu0 0
    %640 = vmatprep.subr.bf16.mxu0 0
    %641 = vmatpush1.bf16.msra.mxu0 0
    %642 = vmatprep.subr.bf16.mxu0 0
    %643 = vmatpush1.bf16.msra.mxu0 0
    %644 = vmatprep.subr.bf16.mxu0 0
    %645 = vmatpush1.bf16.msra.mxu0 0
    %646 = vmatprep.subr.bf16.mxu0 0
    %647 = vmatpush1.bf16.msra.mxu0 0
    %648 = vmatprep.mubr.bf16.mxu0 0
    %649 = vmatmul.mubr.bf16.gmra.mrb[0].mxu0 %v614
    %v650 = vpop.f32.mrb[0].mxu0
    %v651 = vadd.f32 0.0, %v650
    %v652 = vpop.f32.mrb[0].mxu0
    %v653 = vpop.f32.mrb[0].mxu0
    %v654 = vpop.f32.mrb[0].mxu0
    %655 = vdwg.mxu0
    %v656 = vadd.f32 %v608, %v651
    %v657 = vxor.u32 %v656, 2147483648
    %v658 = vmul.f32 %v657, 1.442695
    %v659 = vpow.pop %v658
    %v660 = vadd.f32 %v659, 1.0
    %v661 = vrcp.pop %v660
    %v662 = vmul.f32 1.0, %v661
    %v663 = vtanh.pop %v656
    %v664 = vmul.f32 %v662, %v604
    %666 = vrot.lane.b32.xlu0 %v663, 32
    %v667 = vpop.permute.xlu0 %666
    %v669 = vmul.f32 %v662, %v667
    %671 = vrot.lane.b32.xlu0 %v669, 32
    %v672 = vpop.permute.xlu0 %671
    %v674 = vadd.f32 %v664, %v672
    %v675 = vtanh.pop %v674
    %677 = vrot.lane.b32.xlu0 %v675, 32
    %v678 = vpop.permute.xlu0 %677
    %v680 = vmul.f32 %v662, %v678
    %s681 = sadd.s32 %s71, 6
    %v682 = vstv %s681
    %vm683 = vcmp.lt.s32.totalorder %v682, %v70
    %v684 = vsel %vm683, 1, 0
    %685 = vset.pattern.permute.xlu0 0
    %686 = vperm.xlu0 %685, %v684
    %v687 = vpop.permute.xlu0 %686
    %vm688 = vcmp.eq.s32.totalorder %v687, 1
    %v689 = vsel %vm688, %v680, %v603
    %v690 = vsel %vm688, %v674, %v604
    %v691 = vsel %vm688, %v680, 0.0
    %s692 = scalar_lea.vmem [#allocation5], 28
    %v693 = vld [vmem:[%s692] sm:$0xf]
    %v694 = vunpack.c.l.bf16 %v693
    %v695 = vpack.c.bf16 %v689, %v689
    %697 = vrot.lane.b32.xlu0 %v695, 64
    %v698 = vpop.permute.xlu0 %697
    %v700 = vsel %vm89, %v698, 0
    %702 = vmatprep.subr.bf16.mxu0 0
    %703 = vmatpush1.bf16.msra.mxu0 %v85
    %704 = vmatprep.subr.bf16.mxu0 0
    %705 = vmatpush1.bf16.msra.mxu0 %v86
    %706 = vmatprep.subr.bf16.mxu0 0
    %707 = vmatpush1.bf16.msra.mxu0 0
    %708 = vmatprep.subr.bf16.mxu0 0
    %709 = vmatpush1.bf16.msra.mxu0 0
    %710 = vmatprep.subr.bf16.mxu0 0
    %711 = vmatpush1.bf16.msra.mxu0 0
    %712 = vmatprep.subr.bf16.mxu0 0
    %713 = vmatpush1.bf16.msra.mxu0 0
    %714 = vmatprep.subr.bf16.mxu0 0
    %715 = vmatpush1.bf16.msra.mxu0 0
    %716 = vmatprep.subr.bf16.mxu0 0
    %717 = vmatpush1.bf16.msra.mxu0 0
    %718 = vmatprep.subr.bf16.mxu0 0
    %719 = vmatpush1.bf16.msra.mxu0 0
    %720 = vmatprep.subr.bf16.mxu0 0
    %721 = vmatpush1.bf16.msra.mxu0 0
    %722 = vmatprep.subr.bf16.mxu0 0
    %723 = vmatpush1.bf16.msra.mxu0 0
    %724 = vmatprep.subr.bf16.mxu0 0
    %725 = vmatpush1.bf16.msra.mxu0 0
    %726 = vmatprep.subr.bf16.mxu0 0
    %727 = vmatpush1.bf16.msra.mxu0 0
    %728 = vmatprep.subr.bf16.mxu0 0
    %729 = vmatpush1.bf16.msra.mxu0 0
    %730 = vmatprep.subr.bf16.mxu0 0
    %731 = vmatpush1.bf16.msra.mxu0 0
    %732 = vmatprep.subr.bf16.mxu0 0
    %733 = vmatpush1.bf16.msra.mxu0 0
    %734 = vmatprep.mubr.bf16.mxu0 0
    %735 = vmatmul.mubr.bf16.gmra.mrb[0].mxu0 %v700
    %v736 = vpop.f32.mrb[0].mxu0
    %v737 = vadd.f32 0.0, %v736
    %v738 = vpop.f32.mrb[0].mxu0
    %v739 = vpop.f32.mrb[0].mxu0
    %v740 = vpop.f32.mrb[0].mxu0
    %741 = vdwg.mxu0
    %v742 = vadd.f32 %v694, %v737
    %v743 = vxor.u32 %v742, 2147483648
    %v744 = vmul.f32 %v743, 1.442695
    %v745 = vpow.pop %v744
    %v746 = vadd.f32 %v745, 1.0
    %v747 = vrcp.pop %v746
    %v748 = vmul.f32 1.0, %v747
    %v749 = vtanh.pop %v742
    %v750 = vmul.f32 %v748, %v690
    %752 = vrot.lane.b32.xlu0 %v749, 32
    %v753 = vpop.permute.xlu0 %752
    %v755 = vmul.f32 %v748, %v753
    %757 = vrot.lane.b32.xlu0 %v755, 32
    %v758 = vpop.permute.xlu0 %757
    %v760 = vadd.f32 %v750, %v758
    %v761 = vtanh.pop %v760
    %763 = vrot.lane.b32.xlu0 %v761, 32
    %v764 = vpop.permute.xlu0 %763
    %v766 = vmul.f32 %v748, %v764
    %s767 = sadd.s32 %s71, 7
    %v768 = vstv %s767
    %vm769 = vcmp.lt.s32.totalorder %v768, %v70
    %v770 = vsel %vm769, 1, 0
    %771 = vset.pattern.permute.xlu0 0
    %772 = vperm.xlu0 %771, %v770
    %v773 = vpop.permute.xlu0 %772
    %vm774 = vcmp.eq.s32.totalorder %v773, 1
    %v775 = vsel %vm774, %v766, %v689
    %v776 = vsel %vm774, %v760, %v690
    %v777 = vsel %vm774, %v766, 0.0
    %s778 = scalar_lea.vmem [#allocation5], 32
    %v779 = vld [vmem:[%s778] sm:$0xf]
    %v780 = vunpack.c.l.bf16 %v779
    %v781 = vpack.c.bf16 %v775, %v775
    %783 = vrot.lane.b32.xlu0 %v781, 64
    %v784 = vpop.permute.xlu0 %783
    %v786 = vsel %vm89, %v784, 0
    %788 = vmatprep.subr.bf16.mxu0 0
    %789 = vmatpush1.bf16.msra.mxu0 %v85
    %790 = vmatprep.subr.bf16.mxu0 0
    %791 = vmatpush1.bf16.msra.mxu0 %v86
    %792 = vmatprep.subr.bf16.mxu0 0
    %793 = vmatpush1.bf16.msra.mxu0 0
    %794 = vmatprep.subr.bf16.mxu0 0
    %795 = vmatpush1.bf16.msra.mxu0 0
    %796 = vmatprep.subr.bf16.mxu0 0
    %797 = vmatpush1.bf16.msra.mxu0 0
    %798 = vmatprep.subr.bf16.mxu0 0
    %799 = vmatpush1.bf16.msra.mxu0 0
    %800 = vmatprep.subr.bf16.mxu0 0
    %801 = vmatpush1.bf16.msra.mxu0 0
    %802 = vmatprep.subr.bf16.mxu0 0
    %803 = vmatpush1.bf16.msra.mxu0 0
    %804 = vmatprep.subr.bf16.mxu0 0
    %805 = vmatpush1.bf16.msra.mxu0 0
    %806 = vmatprep.subr.bf16.mxu0 0
    %807 = vmatpush1.bf16.msra.mxu0 0
    %808 = vmatprep.subr.bf16.mxu0 0
    %809 = vmatpush1.bf16.msra.mxu0 0
    %810 = vmatprep.subr.bf16.mxu0 0
    %811 = vmatpush1.bf16.msra.mxu0 0
    %812 = vmatprep.subr.bf16.mxu0 0
    %813 = vmatpush1.bf16.msra.mxu0 0
    %814 = vmatprep.subr.bf16.mxu0 0
    %815 = vmatpush1.bf16.msra.mxu0 0
    %816 = vmatprep.subr.bf16.mxu0 0
    %817 = vmatpush1.bf16.msra.mxu0 0
    %818 = vmatprep.subr.bf16.mxu0 0
    %819 = vmatpush1.bf16.msra.mxu0 0
    %820 = vmatprep.mubr.bf16.mxu0 0
    %821 = vmatmul.mubr.bf16.gmra.mrb[0].mxu0 %v786
    %v822 = vpop.f32.mrb[0].mxu0
    %v823 = vadd.f32 0.0, %v822
    %v824 = vpop.f32.mrb[0].mxu0
    %v825 = vpop.f32.mrb[0].mxu0
    %v826 = vpop.f32.mrb[0].mxu0
    %827 = vdwg.mxu0
    %v828 = vadd.f32 %v780, %v823
    %v829 = vxor.u32 %v828, 2147483648
    %v830 = vmul.f32 %v829, 1.442695
    %v831 = vpow.pop %v830
    %v832 = vadd.f32 %v831, 1.0
    %v833 = vrcp.pop %v832
    %v834 = vmul.f32 1.0, %v833
    %v835 = vtanh.pop %v828
    %v836 = vmul.f32 %v834, %v776
    %838 = vrot.lane.b32.xlu0 %v835, 32
    %v839 = vpop.permute.xlu0 %838
    %v841 = vmul.f32 %v834, %v839
    %843 = vrot.lane.b32.xlu0 %v841, 32
    %v844 = vpop.permute.xlu0 %843
    %v846 = vadd.f32 %v836, %v844
    %v847 = vtanh.pop %v846
    %849 = vrot.lane.b32.xlu0 %v847, 32
    %v850 = vpop.permute.xlu0 %849
    %v852 = vmul.f32 %v834, %v850
    %s853 = sadd.s32 %s71, 8
    %v854 = vstv %s853
    %vm855 = vcmp.lt.s32.totalorder %v854, %v70
    %v856 = vsel %vm855, 1, 0
    %857 = vset.pattern.permute.xlu0 0
    %858 = vperm.xlu0 %857, %v856
    %v859 = vpop.permute.xlu0 %858
    %vm860 = vcmp.eq.s32.totalorder %v859, 1
    %v861 = vsel %vm860, %v852, %v775
    %v862 = vsel %vm860, %v846, %v776
    %v863 = vsel %vm860, %v852, 0.0
    %s864 = scalar_lea.vmem [#allocation5], 36
    %v865 = vld [vmem:[%s864] sm:$0xf]
    %v866 = vunpack.c.l.bf16 %v865
    %v867 = vpack.c.bf16 %v861, %v861
    %869 = vrot.lane.b32.xlu0 %v867, 64
    %v870 = vpop.permute.xlu0 %869
    %v872 = vsel %vm89, %v870, 0
    %874 = vmatprep.subr.bf16.mxu0 0
    %875 = vmatpush1.bf16.msra.mxu0 %v85
    %876 = vmatprep.subr.bf16.mxu0 0
    %877 = vmatpush1.bf16.msra.mxu0 %v86
    %878 = vmatprep.subr.bf16.mxu0 0
    %879 = vmatpush1.bf16.msra.mxu0 0
    %880 = vmatprep.subr.bf16.mxu0 0
    %881 = vmatpush1.bf16.msra.mxu0 0
    %882 = vmatprep.subr.bf16.mxu0 0
    %883 = vmatpush1.bf16.msra.mxu0 0
    %884 = vmatprep.subr.bf16.mxu0 0
    %885 = vmatpush1.bf16.msra.mxu0 0
    %886 = vmatprep.subr.bf16.mxu0 0
    %887 = vmatpush1.bf16.msra.mxu0 0
    %888 = vmatprep.subr.bf16.mxu0 0
    %889 = vmatpush1.bf16.msra.mxu0 0
    %890 = vmatprep.subr.bf16.mxu0 0
    %891 = vmatpush1.bf16.msra.mxu0 0
    %892 = vmatprep.subr.bf16.mxu0 0
    %893 = vmatpush1.bf16.msra.mxu0 0
    %894 = vmatprep.subr.bf16.mxu0 0
    %895 = vmatpush1.bf16.msra.mxu0 0
    %896 = vmatprep.subr.bf16.mxu0 0
    %897 = vmatpush1.bf16.msra.mxu0 0
    %898 = vmatprep.subr.bf16.mxu0 0
    %899 = vmatpush1.bf16.msra.mxu0 0
    %900 = vmatprep.subr.bf16.mxu0 0
    %901 = vmatpush1.bf16.msra.mxu0 0
    %902 = vmatprep.subr.bf16.mxu0 0
    %903 = vmatpush1.bf16.msra.mxu0 0
    %904 = vmatprep.subr.bf16.mxu0 0
    %905 = vmatpush1.bf16.msra.mxu0 0
    %906 = vmatprep.mubr.bf16.mxu0 0
    %907 = vmatmul.mubr.bf16.gmra.mrb[0].mxu0 %v872
    %v908 = vpop.f32.mrb[0].mxu0
    %v909 = vadd.f32 0.0, %v908
    %v910 = vpop.f32.mrb[0].mxu0
    %v911 = vpop.f32.mrb[0].mxu0
    %v912 = vpop.f32.mrb[0].mxu0
    %913 = vdwg.mxu0
    %v914 = vadd.f32 %v866, %v909
    %v915 = vxor.u32 %v914, 2147483648
    %v916 = vmul.f32 %v915, 1.442695
    %v917 = vpow.pop %v916
    %v918 = vadd.f32 %v917, 1.0
    %v919 = vrcp.pop %v918
    %v920 = vmul.f32 1.0, %v919
    %v921 = vtanh.pop %v914
    %v922 = vmul.f32 %v920, %v862
    %924 = vrot.lane.b32.xlu0 %v921, 32
    %v925 = vpop.permute.xlu0 %924
    %v927 = vmul.f32 %v920, %v925
    %929 = vrot.lane.b32.xlu0 %v927, 32
    %v930 = vpop.permute.xlu0 %929
    %v932 = vadd.f32 %v922, %v930
    %v933 = vtanh.pop %v932
    %935 = vrot.lane.b32.xlu0 %v933, 32
    %v936 = vpop.permute.xlu0 %935
    %v938 = vmul.f32 %v920, %v936
    %s939 = sadd.s32 %s71, 9
    %v940 = vstv %s939
    %vm941 = vcmp.lt.s32.totalorder %v940, %v70
    %v942 = vsel %vm941, 1, 0
    %943 = vset.pattern.permute.xlu0 0
    %944 = vperm.xlu0 %943, %v942
    %v945 = vpop.permute.xlu0 %944
    %vm946 = vcmp.eq.s32.totalorder %v945, 1
    %v947 = vsel %vm946, %v938, %v861
    %v948 = vsel %vm946, %v932, %v862
    %v949 = vsel %vm946, %v938, 0.0
    %s950 = scalar_lea.vmem [#allocation5], 40
    %v951 = vld [vmem:[%s950] sm:$0xf]
    %v952 = vunpack.c.l.bf16 %v951
    %v953 = vpack.c.bf16 %v947, %v947
    %955 = vrot.lane.b32.xlu0 %v953, 64
    %v956 = vpop.permute.xlu0 %955
    %v958 = vsel %vm89, %v956, 0
    %960 = vmatprep.subr.bf16.mxu0 0
    %961 = vmatpush1.bf16.msra.mxu0 %v85
    %962 = vmatprep.subr.bf16.mxu0 0
    %963 = vmatpush1.bf16.msra.mxu0 %v86
    %964 = vmatprep.subr.bf16.mxu0 0
    %965 = vmatpush1.bf16.msra.mxu0 0
    %966 = vmatprep.subr.bf16.mxu0 0
    %967 = vmatpush1.bf16.msra.mxu0 0
    %968 = vmatprep.subr.bf16.mxu0 0
    %969 = vmatpush1.bf16.msra.mxu0 0
    %970 = vmatprep.subr.bf16.mxu0 0
    %971 = vmatpush1.bf16.msra.mxu0 0
    %972 = vmatprep.subr.bf16.mxu0 0
    %973 = vmatpush1.bf16.msra.mxu0 0
    %974 = vmatprep.subr.bf16.mxu0 0
    %975 = vmatpush1.bf16.msra.mxu0 0
    %976 = vmatprep.subr.bf16.mxu0 0
    %977 = vmatpush1.bf16.msra.mxu0 0
    %978 = vmatprep.subr.bf16.mxu0 0
    %979 = vmatpush1.bf16.msra.mxu0 0
    %980 = vmatprep.subr.bf16.mxu0 0
    %981 = vmatpush1.bf16.msra.mxu0 0
    %982 = vmatprep.subr.bf16.mxu0 0
    %983 = vmatpush1.bf16.msra.mxu0 0
    %984 = vmatprep.subr.bf16.mxu0 0
    %985 = vmatpush1.bf16.msra.mxu0 0
    %986 = vmatprep.subr.bf16.mxu0 0
    %987 = vmatpush1.bf16.msra.mxu0 0
    %988 = vmatprep.subr.bf16.mxu0 0
    %989 = vmatpush1.bf16.msra.mxu0 0
    %990 = vmatprep.subr.bf16.mxu0 0
    %991 = vmatpush1.bf16.msra.mxu0 0
    %992 = vmatprep.mubr.bf16.mxu0 0
    %993 = vmatmul.mubr.bf16.gmra.mrb[0].mxu0 %v958
    %v994 = vpop.f32.mrb[0].mxu0
    %v995 = vadd.f32 0.0, %v994
    %v996 = vpop.f32.mrb[0].mxu0
    %v997 = vpop.f32.mrb[0].mxu0
    %v998 = vpop.f32.mrb[0].mxu0
    %999 = vdwg.mxu0
    %v1000 = vadd.f32 %v952, %v995
    %v1001 = vxor.u32 %v1000, 2147483648
    %v1002 = vmul.f32 %v1001, 1.442695
    %v1003 = vpow.pop %v1002
    %v1004 = vadd.f32 %v1003, 1.0
    %v1005 = vrcp.pop %v1004
    %v1006 = vmul.f32 1.0, %v1005
    %v1007 = vtanh.pop %v1000
    %v1008 = vmul.f32 %v1006, %v948
    %1010 = vrot.lane.b32.xlu0 %v1007, 32
    %v1011 = vpop.permute.xlu0 %1010
    %v1013 = vmul.f32 %v1006, %v1011
    %1015 = vrot.lane.b32.xlu0 %v1013, 32
    %v1016 = vpop.permute.xlu0 %1015
    %v1018 = vadd.f32 %v1008, %v1016
    %v1019 = vtanh.pop %v1018
    %1021 = vrot.lane.b32.xlu0 %v1019, 32
    %v1022 = vpop.permute.xlu0 %1021
    %v1024 = vmul.f32 %v1006, %v1022
    %s1025 = sadd.s32 %s71, 10
    %v1026 = vstv %s1025
    %vm1027 = vcmp.lt.s32.totalorder %v1026, %v70
    %v1028 = vsel %vm1027, 1, 0
    %1029 = vset.pattern.permute.xlu0 0
    %1030 = vperm.xlu0 %1029, %v1028
    %v1031 = vpop.permute.xlu0 %1030
    %vm1032 = vcmp.eq.s32.totalorder %v1031, 1
    %v1033 = vsel %vm1032, %v1024, %v947
    %v1034 = vsel %vm1032, %v1018, %v948
    %v1035 = vsel %vm1032, %v1024, 0.0
    %s1036 = scalar_lea.vmem [#allocation5], 44
    %v1037 = vld [vmem:[%s1036] sm:$0xf]
    %v1038 = vunpack.c.l.bf16 %v1037
    %v1039 = vpack.c.bf16 %v1033, %v1033
    %1041 = vrot.lane.b32.xlu0 %v1039, 64
    %v1042 = vpop.permute.xlu0 %1041
    %v1044 = vsel %vm89, %v1042, 0
    %1046 = vmatprep.subr.bf16.mxu0 0
    %1047 = vmatpush1.bf16.msra.mxu0 %v85
    %1048 = vmatprep.subr.bf16.mxu0 0
    %1049 = vmatpush1.bf16.msra.mxu0 %v86
    %1050 = vmatprep.subr.bf16.mxu0 0
    %1051 = vmatpush1.bf16.msra.mxu0 0
    %1052 = vmatprep.subr.bf16.mxu0 0
    %1053 = vmatpush1.bf16.msra.mxu0 0
    %1054 = vmatprep.subr.bf16.mxu0 0
    %1055 = vmatpush1.bf16.msra.mxu0 0
    %1056 = vmatprep.subr.bf16.mxu0 0
    %1057 = vmatpush1.bf16.msra.mxu0 0
    %1058 = vmatprep.subr.bf16.mxu0 0
    %1059 = vmatpush1.bf16.msra.mxu0 0
    %1060 = vmatprep.subr.bf16.mxu0 0
    %1061 = vmatpush1.bf16.msra.mxu0 0
    %1062 = vmatprep.subr.bf16.mxu0 0
    %1063 = vmatpush1.bf16.msra.mxu0 0
    %1064 = vmatprep.subr.bf16.mxu0 0
    %1065 = vmatpush1.bf16.msra.mxu0 0
    %1066 = vmatprep.subr.bf16.mxu0 0
    %1067 = vmatpush1.bf16.msra.mxu0 0
    %1068 = vmatprep.subr.bf16.mxu0 0
    %1069 = vmatpush1.bf16.msra.mxu0 0
    %1070 = vmatprep.subr.bf16.mxu0 0
    %1071 = vmatpush1.bf16.msra.mxu0 0
    %1072 = vmatprep.subr.bf16.mxu0 0
    %1073 = vmatpush1.bf16.msra.mxu0 0
    %1074 = vmatprep.subr.bf16.mxu0 0
    %1075 = vmatpush1.bf16.msra.mxu0 0
    %1076 = vmatprep.subr.bf16.mxu0 0
    %1077 = vmatpush1.bf16.msra.mxu0 0
    %1078 = vmatprep.mubr.bf16.mxu0 0
    %1079 = vmatmul.mubr.bf16.gmra.mrb[0].mxu0 %v1044
    %v1080 = vpop.f32.mrb[0].mxu0
    %v1081 = vadd.f32 0.0, %v1080
    %v1082 = vpop.f32.mrb[0].mxu0
    %v1083 = vpop.f32.mrb[0].mxu0
    %v1084 = vpop.f32.mrb[0].mxu0
    %1085 = vdwg.mxu0
    %v1086 = vadd.f32 %v1038, %v1081
    %v1087 = vxor.u32 %v1086, 2147483648
    %v1088 = vmul.f32 %v1087, 1.442695
    %v1089 = vpow.pop %v1088
    %v1090 = vadd.f32 %v1089, 1.0
    %v1091 = vrcp.pop %v1090
    %v1092 = vmul.f32 1.0, %v1091
    %v1093 = vtanh.pop %v1086
    %v1094 = vmul.f32 %v1092, %v1034
    %1096 = vrot.lane.b32.xlu0 %v1093, 32
    %v1097 = vpop.permute.xlu0 %1096
    %v1099 = vmul.f32 %v1092, %v1097
    %1101 = vrot.lane.b32.xlu0 %v1099, 32
    %v1102 = vpop.permute.xlu0 %1101
    %v1104 = vadd.f32 %v1094, %v1102
    %v1105 = vtanh.pop %v1104
    %1107 = vrot.lane.b32.xlu0 %v1105, 32
    %v1108 = vpop.permute.xlu0 %1107
    %v1110 = vmul.f32 %v1092, %v1108
    %s1111 = sadd.s32 %s71, 11
    %v1112 = vstv %s1111
    %vm1113 = vcmp.lt.s32.totalorder %v1112, %v70
    %v1114 = vsel %vm1113, 1, 0
    %1115 = vset.pattern.permute.xlu0 0
    %1116 = vperm.xlu0 %1115, %v1114
    %v1117 = vpop.permute.xlu0 %1116
    %vm1118 = vcmp.eq.s32.totalorder %v1117, 1
    %v1119 = vsel %vm1118, %v1110, %v1033
    %v1120 = vsel %vm1118, %v1104, %v1034
    %v1121 = vsel %vm1118, %v1110, 0.0
    %s1122 = scalar_lea.vmem [#allocation5], 48
    %v1123 = vld [vmem:[%s1122] sm:$0xf]
    %v1124 = vunpack.c.l.bf16 %v1123
    %v1125 = vpack.c.bf16 %v1119, %v1119
    %1127 = vrot.lane.b32.xlu0 %v1125, 64
    %v1128 = vpop.permute.xlu0 %1127
    %v1130 = vsel %vm89, %v1128, 0
    %1132 = vmatprep.subr.bf16.mxu0 0
    %1133 = vmatpush1.bf16.msra.mxu0 %v85
    %1134 = vmatprep.subr.bf16.mxu0 0
    %1135 = vmatpush1.bf16.msra.mxu0 %v86
    %1136 = vmatprep.subr.bf16.mxu0 0
    %1137 = vmatpush1.bf16.msra.mxu0 0
    %1138 = vmatprep.subr.bf16.mxu0 0
    %1139 = vmatpush1.bf16.msra.mxu0 0
    %1140 = vmatprep.subr.bf16.mxu0 0
    %1141 = vmatpush1.bf16.msra.mxu0 0
    %1142 = vmatprep.subr.bf16.mxu0 0
    %1143 = vmatpush1.bf16.msra.mxu0 0
    %1144 = vmatprep.subr.bf16.mxu0 0
    %1145 = vmatpush1.bf16.msra.mxu0 0
    %1146 = vmatprep.subr.bf16.mxu0 0
    %1147 = vmatpush1.bf16.msra.mxu0 0
    %1148 = vmatprep.subr.bf16.mxu0 0
    %1149 = vmatpush1.bf16.msra.mxu0 0
    %1150 = vmatprep.subr.bf16.mxu0 0
    %1151 = vmatpush1.bf16.msra.mxu0 0
    %1152 = vmatprep.subr.bf16.mxu0 0
    %1153 = vmatpush1.bf16.msra.mxu0 0
    %1154 = vmatprep.subr.bf16.mxu0 0
    %1155 = vmatpush1.bf16.msra.mxu0 0
    %1156 = vmatprep.subr.bf16.mxu0 0
    %1157 = vmatpush1.bf16.msra.mxu0 0
    %1158 = vmatprep.subr.bf16.mxu0 0
    %1159 = vmatpush1.bf16.msra.mxu0 0
    %1160 = vmatprep.subr.bf16.mxu0 0
    %1161 = vmatpush1.bf16.msra.mxu0 0
    %1162 = vmatprep.subr.bf16.mxu0 0
    %1163 = vmatpush1.bf16.msra.mxu0 0
    %1164 = vmatprep.mubr.bf16.mxu0 0
    %1165 = vmatmul.mubr.bf16.gmra.mrb[0].mxu0 %v1130
    %v1166 = vpop.f32.mrb[0].mxu0
    %v1167 = vadd.f32 0.0, %v1166
    %v1168 = vpop.f32.mrb[0].mxu0
    %v1169 = vpop.f32.mrb[0].mxu0
    %v1170 = vpop.f32.mrb[0].mxu0
    %1171 = vdwg.mxu0
    %v1172 = vadd.f32 %v1124, %v1167
    %v1173 = vxor.u32 %v1172, 2147483648
    %v1174 = vmul.f32 %v1173, 1.442695
    %v1175 = vpow.pop %v1174
    %v1176 = vadd.f32 %v1175, 1.0
    %v1177 = vrcp.pop %v1176
    %v1178 = vmul.f32 1.0, %v1177
    %v1179 = vtanh.pop %v1172
    %v1180 = vmul.f32 %v1178, %v1120
    %1182 = vrot.lane.b32.xlu0 %v1179, 32
    %v1183 = vpop.permute.xlu0 %1182
    %v1185 = vmul.f32 %v1178, %v1183
    %1187 = vrot.lane.b32.xlu0 %v1185, 32
    %v1188 = vpop.permute.xlu0 %1187
    %v1190 = vadd.f32 %v1180, %v1188
    %v1191 = vtanh.pop %v1190
    %1193 = vrot.lane.b32.xlu0 %v1191, 32
    %v1194 = vpop.permute.xlu0 %1193
    %v1196 = vmul.f32 %v1178, %v1194
    %s1197 = sadd.s32 %s71, 12
    %v1198 = vstv %s1197
    %vm1199 = vcmp.lt.s32.totalorder %v1198, %v70
    %v1200 = vsel %vm1199, 1, 0
    %1201 = vset.pattern.permute.xlu0 0
    %1202 = vperm.xlu0 %1201, %v1200
    %v1203 = vpop.permute.xlu0 %1202
    %vm1204 = vcmp.eq.s32.totalorder %v1203, 1
    %v1205 = vsel %vm1204, %v1196, %v1119
    %v1206 = vsel %vm1204, %v1190, %v1120
    %v1207 = vsel %vm1204, %v1196, 0.0
    %s1208 = scalar_lea.vmem [#allocation5], 52
    %v1209 = vld [vmem:[%s1208] sm:$0xf]
    %v1210 = vunpack.c.l.bf16 %v1209
    %v1211 = vpack.c.bf16 %v1205, %v1205
    %1213 = vrot.lane.b32.xlu0 %v1211, 64
    %v1214 = vpop.permute.xlu0 %1213
    %v1216 = vsel %vm89, %v1214, 0
    %1218 = vmatprep.subr.bf16.mxu0 0
    %1219 = vmatpush1.bf16.msra.mxu0 %v85
    %1220 = vmatprep.subr.bf16.mxu0 0
    %1221 = vmatpush1.bf16.msra.mxu0 %v86
    %1222 = vmatprep.subr.bf16.mxu0 0
    %1223 = vmatpush1.bf16.msra.mxu0 0
    %1224 = vmatprep.subr.bf16.mxu0 0
    %1225 = vmatpush1.bf16.msra.mxu0 0
    %1226 = vmatprep.subr.bf16.mxu0 0
    %1227 = vmatpush1.bf16.msra.mxu0 0
    %1228 = vmatprep.subr.bf16.mxu0 0
    %1229 = vmatpush1.bf16.msra.mxu0 0
    %1230 = vmatprep.subr.bf16.mxu0 0
    %1231 = vmatpush1.bf16.msra.mxu0 0
    %1232 = vmatprep.subr.bf16.mxu0 0
    %1233 = vmatpush1.bf16.msra.mxu0 0
    %1234 = vmatprep.subr.bf16.mxu0 0
    %1235 = vmatpush1.bf16.msra.mxu0 0
    %1236 = vmatprep.subr.bf16.mxu0 0
    %1237 = vmatpush1.bf16.msra.mxu0 0
    %1238 = vmatprep.subr.bf16.mxu0 0
    %1239 = vmatpush1.bf16.msra.mxu0 0
    %1240 = vmatprep.subr.bf16.mxu0 0
    %1241 = vmatpush1.bf16.msra.mxu0 0
    %1242 = vmatprep.subr.bf16.mxu0 0
    %1243 = vmatpush1.bf16.msra.mxu0 0
    %1244 = vmatprep.subr.bf16.mxu0 0
    %1245 = vmatpush1.bf16.msra.mxu0 0
    %1246 = vmatprep.subr.bf16.mxu0 0
    %1247 = vmatpush1.bf16.msra.mxu0 0
    %1248 = vmatprep.subr.bf16.mxu0 0
    %1249 = vmatpush1.bf16.msra.mxu0 0
    %1250 = vmatprep.mubr.bf16.mxu0 0
    %1251 = vmatmul.mubr.bf16.gmra.mrb[0].mxu0 %v1216
    %v1252 = vpop.f32.mrb[0].mxu0
    %v1253 = vadd.f32 0.0, %v1252
    %v1254 = vpop.f32.mrb[0].mxu0
    %v1255 = vpop.f32.mrb[0].mxu0
    %v1256 = vpop.f32.mrb[0].mxu0
    %1257 = vdwg.mxu0
    %v1258 = vadd.f32 %v1210, %v1253
    %v1259 = vxor.u32 %v1258, 2147483648
    %v1260 = vmul.f32 %v1259, 1.442695
    %v1261 = vpow.pop %v1260
    %v1262 = vadd.f32 %v1261, 1.0
    %v1263 = vrcp.pop %v1262
    %v1264 = vmul.f32 1.0, %v1263
    %v1265 = vtanh.pop %v1258
    %v1266 = vmul.f32 %v1264, %v1206
    %1268 = vrot.lane.b32.xlu0 %v1265, 32
    %v1269 = vpop.permute.xlu0 %1268
    %v1271 = vmul.f32 %v1264, %v1269
    %1273 = vrot.lane.b32.xlu0 %v1271, 32
    %v1274 = vpop.permute.xlu0 %1273
    %v1276 = vadd.f32 %v1266, %v1274
    %v1277 = vtanh.pop %v1276
    %1279 = vrot.lane.b32.xlu0 %v1277, 32
    %v1280 = vpop.permute.xlu0 %1279
    %v1282 = vmul.f32 %v1264, %v1280
    %s1283 = sadd.s32 %s71, 13
    %v1284 = vstv %s1283
    %vm1285 = vcmp.lt.s32.totalorder %v1284, %v70
    %v1286 = vsel %vm1285, 1, 0
    %1287 = vset.pattern.permute.xlu0 0
    %1288 = vperm.xlu0 %1287, %v1286
    %v1289 = vpop.permute.xlu0 %1288
    %vm1290 = vcmp.eq.s32.totalorder %v1289, 1
    %v1291 = vsel %vm1290, %v1282, %v1205
    %v1292 = vsel %vm1290, %v1276, %v1206
    %v1293 = vsel %vm1290, %v1282, 0.0
    %s1294 = scalar_lea.vmem [#allocation5], 56
    %v1295 = vld [vmem:[%s1294] sm:$0xf]
    %v1296 = vunpack.c.l.bf16 %v1295
    %v1297 = vpack.c.bf16 %v1291, %v1291
    %1299 = vrot.lane.b32.xlu0 %v1297, 64
    %v1300 = vpop.permute.xlu0 %1299
    %v1302 = vsel %vm89, %v1300, 0
    %1304 = vmatprep.subr.bf16.mxu0 0
    %1305 = vmatpush1.bf16.msra.mxu0 %v85
    %1306 = vmatprep.subr.bf16.mxu0 0
    %1307 = vmatpush1.bf16.msra.mxu0 %v86
    %1308 = vmatprep.subr.bf16.mxu0 0
    %1309 = vmatpush1.bf16.msra.mxu0 0
    %1310 = vmatprep.subr.bf16.mxu0 0
    %1311 = vmatpush1.bf16.msra.mxu0 0
    %1312 = vmatprep.subr.bf16.mxu0 0
    %1313 = vmatpush1.bf16.msra.mxu0 0
    %1314 = vmatprep.subr.bf16.mxu0 0
    %1315 = vmatpush1.bf16.msra.mxu0 0
    %1316 = vmatprep.subr.bf16.mxu0 0
    %1317 = vmatpush1.bf16.msra.mxu0 0
    %1318 = vmatprep.subr.bf16.mxu0 0
    %1319 = vmatpush1.bf16.msra.mxu0 0
    %1320 = vmatprep.subr.bf16.mxu0 0
    %1321 = vmatpush1.bf16.msra.mxu0 0
    %1322 = vmatprep.subr.bf16.mxu0 0
    %1323 = vmatpush1.bf16.msra.mxu0 0
    %1324 = vmatprep.subr.bf16.mxu0 0
    %1325 = vmatpush1.bf16.msra.mxu0 0
    %1326 = vmatprep.subr.bf16.mxu0 0
    %1327 = vmatpush1.bf16.msra.mxu0 0
    %1328 = vmatprep.subr.bf16.mxu0 0
    %1329 = vmatpush1.bf16.msra.mxu0 0
    %1330 = vmatprep.subr.bf16.mxu0 0
    %1331 = vmatpush1.bf16.msra.mxu0 0
    %1332 = vmatprep.subr.bf16.mxu0 0
    %1333 = vmatpush1.bf16.msra.mxu0 0
    %1334 = vmatprep.subr.bf16.mxu0 0
    %1335 = vmatpush1.bf16.msra.mxu0 0
    %1336 = vmatprep.mubr.bf16.mxu0 0
    %1337 = vmatmul.mubr.bf16.gmra.mrb[0].mxu0 %v1302
    %v1338 = vpop.f32.mrb[0].mxu0
    %v1339 = vadd.f32 0.0, %v1338
    %v1340 = vpop.f32.mrb[0].mxu0
    %v1341 = vpop.f32.mrb[0].mxu0
    %v1342 = vpop.f32.mrb[0].mxu0
    %1343 = vdwg.mxu0
    %v1344 = vadd.f32 %v1296, %v1339
    %v1345 = vxor.u32 %v1344, 2147483648
    %v1346 = vmul.f32 %v1345, 1.442695
    %v1347 = vpow.pop %v1346
    %v1348 = vadd.f32 %v1347, 1.0
    %v1349 = vrcp.pop %v1348
    %v1350 = vmul.f32 1.0, %v1349
    %v1351 = vtanh.pop %v1344
    %v1352 = vmul.f32 %v1350, %v1292
    %1354 = vrot.lane.b32.xlu0 %v1351, 32
    %v1355 = vpop.permute.xlu0 %1354
    %v1357 = vmul.f32 %v1350, %v1355
    %1359 = vrot.lane.b32.xlu0 %v1357, 32
    %v1360 = vpop.permute.xlu0 %1359
    %v1362 = vadd.f32 %v1352, %v1360
    %v1363 = vtanh.pop %v1362
    %1365 = vrot.lane.b32.xlu0 %v1363, 32
    %v1366 = vpop.permute.xlu0 %1365
    %v1368 = vmul.f32 %v1350, %v1366
    %s1369 = sadd.s32 %s71, 14
    %v1370 = vstv %s1369
    %vm1371 = vcmp.lt.s32.totalorder %v1370, %v70
    %v1372 = vsel %vm1371, 1, 0
    %1373 = vset.pattern.permute.xlu0 0
    %1374 = vperm.xlu0 %1373, %v1372
    %v1375 = vpop.permute.xlu0 %1374
    %vm1376 = vcmp.eq.s32.totalorder %v1375, 1
    %v1377 = vsel %vm1376, %v1368, %v1291
    %v1378 = vsel %vm1376, %v1362, %v1292
    %v1379 = vsel %vm1376, %v1368, 0.0
    %s1380 = scalar_lea.vmem [#allocation5], 60
    %v1381 = vld [vmem:[%s1380] sm:$0xf]
    %v1382 = vunpack.c.l.bf16 %v1381
    %v1383 = vpack.c.bf16 %v1377, %v1377
    %1385 = vrot.lane.b32.xlu0 %v1383, 64
    %v1386 = vpop.permute.xlu0 %1385
    %v1388 = vsel %vm89, %v1386, 0
    %1390 = vmatprep.subr.bf16.mxu0 0
    %1391 = vmatpush1.bf16.msra.mxu0 %v85
    %1392 = vmatprep.subr.bf16.mxu0 0
    %1393 = vmatpush1.bf16.msra.mxu0 %v86
    %1394 = vmatprep.subr.bf16.mxu0 0
    %1395 = vmatpush1.bf16.msra.mxu0 0
    %1396 = vmatprep.subr.bf16.mxu0 0
    %1397 = vmatpush1.bf16.msra.mxu0 0
    %1398 = vmatprep.subr.bf16.mxu0 0
    %1399 = vmatpush1.bf16.msra.mxu0 0
    %1400 = vmatprep.subr.bf16.mxu0 0
    %1401 = vmatpush1.bf16.msra.mxu0 0
    %1402 = vmatprep.subr.bf16.mxu0 0
    %1403 = vmatpush1.bf16.msra.mxu0 0
    %1404 = vmatprep.subr.bf16.mxu0 0
    %1405 = vmatpush1.bf16.msra.mxu0 0
    %1406 = vmatprep.subr.bf16.mxu0 0
    %1407 = vmatpush1.bf16.msra.mxu0 0
    %1408 = vmatprep.subr.bf16.mxu0 0
    %1409 = vmatpush1.bf16.msra.mxu0 0
    %1410 = vmatprep.subr.bf16.mxu0 0
    %1411 = vmatpush1.bf16.msra.mxu0 0
    %1412 = vmatprep.subr.bf16.mxu0 0
    %1413 = vmatpush1.bf16.msra.mxu0 0
    %1414 = vmatprep.subr.bf16.mxu0 0
    %1415 = vmatpush1.bf16.msra.mxu0 0
    %1416 = vmatprep.subr.bf16.mxu0 0
    %1417 = vmatpush1.bf16.msra.mxu0 0
    %1418 = vmatprep.subr.bf16.mxu0 0
    %1419 = vmatpush1.bf16.msra.mxu0 0
    %1420 = vmatprep.subr.bf16.mxu0 0
    %1421 = vmatpush1.bf16.msra.mxu0 0
    %1422 = vmatprep.mubr.bf16.mxu0 0
    %1423 = vmatmul.mubr.bf16.gmra.mrb[0].mxu0 %v1388
    %v1424 = vpop.f32.mrb[0].mxu0
    %v1425 = vadd.f32 0.0, %v1424
    %v1426 = vpop.f32.mrb[0].mxu0
    %v1427 = vpop.f32.mrb[0].mxu0
    %v1428 = vpop.f32.mrb[0].mxu0
    %1429 = vdwg.mxu0
    %v1430 = vadd.f32 %v1382, %v1425
    %v1431 = vxor.u32 %v1430, 2147483648
    %v1432 = vmul.f32 %v1431, 1.442695
    %v1433 = vpow.pop %v1432
    %v1434 = vadd.f32 %v1433, 1.0
    %v1435 = vrcp.pop %v1434
    %v1436 = vmul.f32 1.0, %v1435
    %v1437 = vtanh.pop %v1430
    %v1438 = vmul.f32 %v1436, %v1378
    %1440 = vrot.lane.b32.xlu0 %v1437, 32
    %v1441 = vpop.permute.xlu0 %1440
    %v1443 = vmul.f32 %v1436, %v1441
    %1445 = vrot.lane.b32.xlu0 %v1443, 32
    %v1446 = vpop.permute.xlu0 %1445
    %v1448 = vadd.f32 %v1438, %v1446
    %v1449 = vtanh.pop %v1448
    %1451 = vrot.lane.b32.xlu0 %v1449, 32
    %v1452 = vpop.permute.xlu0 %1451
    %v1454 = vmul.f32 %v1436, %v1452
    %s1455 = sadd.s32 %s71, 15
    %v1456 = vstv %s1455
    %vm1457 = vcmp.lt.s32.totalorder %v1456, %v70
    %v1458 = vsel %vm1457, 1, 0
    %1459 = vset.pattern.permute.xlu0 0
    %1460 = vperm.xlu0 %1459, %v1458
    %v1461 = vpop.permute.xlu0 %1460
    %vm1462 = vcmp.eq.s32.totalorder %v1461, 1
    %v1463 = vsel %vm1462, %v1454, %v1377
    %v1464 = vsel %vm1462, %v1448, %v1378
    %v1465 = vsel %vm1462, %v1454, 0.0
    %1467 = vrot.lane.b32.xlu0 %v175, 64
    %v1468 = vpop.permute.xlu0 %1467
    %1471 = vrot.lane.b32.xlu0 %v261, 96
    %v1472 = vpop.permute.xlu0 %1471
    %1475 = vrot.lane.b32.xlu0 %v433, 32
    %v1476 = vpop.permute.xlu0 %1475
    %1479 = vrot.lane.b32.xlu0 %v519, 64
    %v1480 = vpop.permute.xlu0 %1479
    %1483 = vrot.lane.b32.xlu0 %v605, 96
    %v1484 = vpop.permute.xlu0 %1483
    %1487 = vrot.lane.b32.xlu0 %v777, 32
    %v1488 = vpop.permute.xlu0 %1487
    %1491 = vrot.lane.b32.xlu0 %v863, 64
    %v1492 = vpop.permute.xlu0 %1491
    %1495 = vrot.lane.b32.xlu0 %v949, 96
    %v1496 = vpop.permute.xlu0 %1495
    %1499 = vrot.lane.b32.xlu0 %v1121, 32
    %v1500 = vpop.permute.xlu0 %1499
    %1503 = vrot.lane.b32.xlu0 %v1207, 64
    %v1504 = vpop.permute.xlu0 %1503
    %1507 = vrot.lane.b32.xlu0 %v1293, 96
    %v1508 = vpop.permute.xlu0 %1507
    %1511 = vrot.lane.b32.xlu0 %v1465, 32
    %v1512 = vpop.permute.xlu0 %1511
    %v1514 = vsel %vm89, %v1468, %v1472
    %vm1515 = vcmask 523264
    %v1516 = vsel %vm1515, %v1514, %v347
    %vm1517 = vcmask 785408
    %v1518 = vsel %vm1517, %v1516, %v1476
    %v1519 = vsel %vm89, %v1480, %v1484
    %v1520 = vsel %vm1515, %v1519, %v691
    %v1521 = vsel %vm1517, %v1520, %v1488
    %v1522 = vsel %vm89, %v1492, %v1496
    %v1523 = vsel %vm1515, %v1522, %v1035
    %v1524 = vsel %vm1517, %v1523, %v1500
    %v1525 = vsel %vm89, %v1504, %v1508
    %v1526 = vsel %vm1515, %v1525, %v1379
    %v1527 = vsel %vm1517, %v1526, %v1512
    %1528 = vst [vmem:[#allocation8] sm:$0xff] %v1518
    %1529 = vst [vmem:[#allocation8 + $0x8] sm:$0xff] %v1521
    %1530 = vst [vmem:[#allocation8 + $0x10] sm:$0xff] %v1524
    %1531 = vst [vmem:[#allocation8 + $0x18] sm:$0xff] %v1527
    %1533 = vrot.lane.b32.xlu0 %v1463, 64
    %v1534 = vpop.permute.xlu0 %1533
    %1536 = vst.msk [vmem:[#allocation9] sm:$0xff] %vm89, %v1534
    %1538 = vrot.lane.b32.xlu0 %v1464, 96
    %v1539 = vpop.permute.xlu0 %1538
    %1541 = vst.msk [vmem:[#allocation11] sm:$0xff] %vm89, %v1539
    // Predicated region
    $region30: #{tpu_custom_call.1} parent=1 // pred_check
      _
    $region31: #{tpu_custom_call.1} parent=1 // pred_check_branch
      %1543 = sbr.rel (0) target = $region33
    $region32: #{tpu_custom_call.1} parent=1 // pred_region
      %s1545 = ssub.s32 512, 512
      %1546 = vsyncadd [#allocation4], %s1545
      %s1548 = sshll.u32 [#allocation8], 4
      %s1549 = int_to_ptr.vmem [resolvable:$true] %s1548
      %1551 = dma.vmem_to_hbm [thread:$0]  %s1549, 512, %s3, [#allocation4]
    $region33: #{tpu_custom_call.1} parent=1 // pred_fallthru
      _
    // Predicated region
    $region34: #{tpu_custom_call.1} parent=1 // pred_check
      _
    $region35: #{tpu_custom_call.1} parent=1 // pred_check_branch
      %1553 = sbr.rel (0) target = $region37
    $region36: #{tpu_custom_call.1} parent=1 // pred_region
      %s1555 = ssub.s32 128, 128
      %1556 = vsyncadd [#allocation10], %s1555
      %s1558 = sshll.u32 [#allocation9], 4
      %s1559 = int_to_ptr.vmem [resolvable:$true] %s1558
      %1561 = dma.vmem_to_hbm [thread:$0]  %s1559, 128, %s4, [#allocation10]
    $region37: #{tpu_custom_call.1} parent=1 // pred_fallthru
      _
    // Predicated region
    $region38: #{tpu_custom_call.1} parent=1 // pred_check
      _
    $region39: #{tpu_custom_call.1} parent=1 // pred_check_branch
      %1563 = sbr.rel (0) target = $region41
    $region40: #{tpu_custom_call.1} parent=1 // pred_region
      %s1565 = ssub.s32 128, 128
      %1566 = vsyncadd [#allocation10], %s1565
      %s1568 = sshll.u32 [#allocation11], 4
      %s1569 = int_to_ptr.vmem [resolvable:$true] %s1568
      %1571 = dma.vmem_to_hbm [thread:$0]  %s1569, 128, %s5, [#allocation10]
    $region41: #{tpu_custom_call.1} parent=1 // pred_fallthru
      _
    // Predicated region
    $region42: #{tpu_custom_call.1} parent=1 // pred_check
      _
    $region43: #{tpu_custom_call.1} parent=1 // pred_check_branch
      %1573 = sbr.rel (0) target = $region45
    $region44: #{tpu_custom_call.1} parent=1 // pred_region
      %1574 = dma.done [#allocation4], 512
    $region45: #{tpu_custom_call.1} parent=1 // pred_fallthru
      _
    // Predicated region
    $region46: #{tpu_custom_call.1} parent=1 // pred_check
      _
    $region47: #{tpu_custom_call.1} parent=1 // pred_check_branch
      %1576 = sbr.rel (0) target = $region49
    $region48: #{tpu_custom_call.1} parent=1 // pred_region
      %1577 = dma.done [#allocation10], 128
    $region49: #{tpu_custom_call.1} parent=1 // pred_fallthru
      _
    // Predicated region
    $region50: #{tpu_custom_call.1} parent=1 // pred_check
      _
    $region51: #{tpu_custom_call.1} parent=1 // pred_check_branch
      %1579 = sbr.rel (0) target = $region53
    $region52: #{tpu_custom_call.1} parent=1 // pred_region
      %1580 = dma.done [#allocation10], 128
    $region53: #{tpu_custom_call.1} parent=1 // pred_fallthru
      _
    %1581 = vsyncpa [#allocation3], 1
    %1582 = vsyncpa [#allocation6], 1
    %1583 = vsyncpa [#allocation4], 1
    %1584 = vsyncpa [#allocation10], 1

// kernel: tpu_custom_call.1
$region0: #{tpu_custom_call.1}
  #allocation0 [shape = 'u32[]', space=smem, size = 0x4, offset = 0x4, fixed_abs, tag = 'smem constant byte address 0x4 - core index']
  #allocation1 [shape = 'u32[144,128]{1,0:T(1,128)}', space=vmem, size = 0x12000, scoped, tag = 'internal scratch']
  %s0 = inlined_call_operand.hbm [shape: s32[8,1], index: 0, kind: input, shape index: {}]
  %s1 = inlined_call_operand.hbm [shape: bf16[16,8,128], index: 1, kind: input, shape index: {}]
  %s2 = inlined_call_operand.hbm [shape: bf16[32,128], index: 2, kind: input, shape index: {}]
  %s3 = inlined_call_operand.hbm [shape: f32[1,8,512], index: 3, kind: output, shape index: {0}]
  %s4 = inlined_call_operand.hbm [shape: f32[8,32], index: 4, kind: output, shape index: {1}]
  %s5 = inlined_call_operand.hbm [shape: f32[8,32], index: 5, kind: output, shape index: {2}]
  %6 = xla_tuple %s3, %s4, %s5
  %s7 = sld [smem:[#allocation0]]
  $region54: #{tpu_custom_call.1} parent=0
    _
  %s9 = ssub.s32 1, %s7
  %s10 = scalar_select 0, %s9, %s7
  $region1: #{tpu_custom_call.1} parent=0
    #allocation2 [shape = 'u8[4096]{0}', space=vmem, size = 0x1000, scoped, tag = 'input window, operand 0, single buffered']
    #allocation3 [shape = 's32[1]{0}', space=sflag, size = 0x4, scoped, tag = 'scoped memory for tpu_custom_call.1']
    #allocation4 [shape = 's32[1]{0}', space=sflag, size = 0x4, scoped, tag = 'scoped memory for tpu_custom_call.1']
    #allocation5 [shape = 'u8[32768]{0}', space=vmem, size = 0x8000, scoped, tag = 'input window, operand 1, single buffered']
    #allocation6 [shape = 's32[1]{0}', space=sflag, size = 0x4, scoped, tag = 'scoped memory for tpu_custom_call.1']
    #allocation7 [shape = 'u8[8192]{0}', space=vmem, size = 0x2000, scoped, tag = 'input window, operand 2, single buffered']
    #allocation8 [shape = 'u8[16384]{0}', space=vmem, size = 0x4000, scoped, tag = 'output window, operand 0, single buffered']
    #allocation9 [shape = 'u8[4096]{0}', space=vmem, size = 0x1000, scoped, tag = 'output window, operand 1, single buffered']
    #allocation10 [shape = 's32[1]{0}', space=sflag, size = 0x4, scoped, tag = 'scoped memory for tpu_custom_call.1']
    #allocation11 [shape = 'u8[4096]{0}', space=vmem, size = 0x1000, scoped, tag = 'output window, operand 2, single buffered']
    %11 = vsyncpa [#allocation3], 0
    %12 = vsyncpa [#allocation6], 0
    %13 = vsyncpa [#allocation4], 0
    %14 = vsyncpa [#allocation10], 0
    // Predicated region
    $region2: #{tpu_custom_call.1} parent=1 // pred_check
      _
    $region3: #{tpu_custom_call.1} parent=1 // pred_check_branch
      %16 = sbr.rel (0) target = $region5
    $region4: #{tpu_custom_call.1} parent=1 // pred_region
      %s18 = ssub.s32 128, 128
      %19 = vsyncadd [#allocation3], %s18
      %s21 = sshll.u32 [#allocation2], 4
      %s22 = int_to_ptr.vmem [resolvable:$true] %s21
      %24 = dma.hbm_to_vmem [thread:$0]  %s0, 128, %s22, [#allocation3]
    $region5: #{tpu_custom_call.1} parent=1 // pred_fallthru
      _
    // Predicated region
    $region6: #{tpu_custom_call.1} parent=1 // pred_check
      _
    $region7: #{tpu_custom_call.1} parent=1 // pred_check_branch
      %26 = sbr.rel (0) target = $region9
    $region8: #{tpu_custom_call.1} parent=1 // pred_region
      %s28 = ssub.s32 1024, 1024
      %29 = vsyncadd [#allocation6], %s28
      %s30 = sshll.u32 [#allocation5], 4
      %s31 = int_to_ptr.vmem [resolvable:$true] %s30
      %36 = dma.hbm_to_vmem [thread:$0]  %s1, 1024, %s31, [#allocation6], 64, 64, 4
    $region9: #{tpu_custom_call.1} parent=1 // pred_fallthru
      _
    // Predicated region
    $region10: #{tpu_custom_call.1} parent=1 // pred_check
      _
    $region11: #{tpu_custom_call.1} parent=1 // pred_check_branch
      %38 = sbr.rel (0) target = $region13
    $region12: #{tpu_custom_call.1} parent=1 // pred_region
      %s40 = ssub.s32 256, 256
      %41 = vsyncadd [#allocation6], %s40
      %s42 = sshll.u32 [#allocation7], 4
      %s43 = int_to_ptr.vmem [resolvable:$true] %s42
      %48 = dma.hbm_to_vmem [thread:$0]  %s2, 256, %s43, [#allocation6], 64, 64, 4
    $region13: #{tpu_custom_call.1} parent=1 // pred_fallthru
      _
    // Predicated region
    $region14: #{tpu_custom_call.1} parent=1 // pred_check
      _
    $region15: #{tpu_custom_call.1} parent=1 // pred_check_branch
      %50 = sbr.rel (0) target = $region17
    $region16: #{tpu_custom_call.1} parent=1 // pred_region
      %51 = dma.done [#allocation3], 128
    $region17: #{tpu_custom_call.1} parent=1 // pred_fallthru
      _
    // Predicated region
    $region18: #{tpu_custom_call.1} parent=1 // pred_check
      _
    $region19: #{tpu_custom_call.1} parent=1 // pred_check_branch
      %53 = sbr.rel (0) target = $region21
    $region20: #{tpu_custom_call.1} parent=1 // pred_region
      %54 = dma.done [#allocation6], 1024
    $region21: #{tpu_custom_call.1} parent=1 // pred_fallthru
      _
    // Predicated region
    $region22: #{tpu_custom_call.1} parent=1 // pred_check
      _
    $region23: #{tpu_custom_call.1} parent=1 // pred_check_branch
      %56 = sbr.rel (0) target = $region25
    $region24: #{tpu_custom_call.1} parent=1 // pred_region
      %57 = dma.done [#allocation6], 256
    $region25: #{tpu_custom_call.1} parent=1 // pred_fallthru
      _
    %p59 = scmp.eq.s32.totalorder 0, 0
    // Predicated region
    $region26: #{tpu_custom_call.1} parent=1 // pred_check
      %p60 = pneg %p59
    $region27: #{tpu_custom_call.1} parent=1 // pred_check_branch
      %62 = sbr.rel (%p60) target = $region29
    $region28: #{tpu_custom_call.1} parent=1 // pred_region
      %vm63 = vcmask 261120
      %64 = vst.msk [vmem:[#allocation9] sm:$0xff] %vm63, 0.0
      %65 = vst.msk [vmem:[#allocation11] sm:$0xff] %vm63, 0.0
    $region29: #{tpu_custom_call.1} parent=1 // pred_fallthru
      _
    %v66 = vld [vmem:[#allocation7] sm:$0xf]
    %v67 = vld [vmem:[#allocation7 + $0x4] sm:$0xf]
    %v68 = vld [vmem:[#allocation7 + $0x8] sm:$0xf]
    %v69 = vld [vmem:[#allocation7 + $0xc] sm:$0xf]
    %v70 = vld [vmem:[#allocation2] sm:$0xff]
    %s71 = smul.u32 0, 16
    %v72 = vld [vmem:[#allocation9] sm:$0xff]
    %v73 = vld [vmem:[#allocation11] sm:$0xff]
    %v74 = vld [vmem:[#allocation5] sm:$0xf]
    %v75 = vunpack.c.l.bf16 %v74
    %v76 = vpack.c.bf16 %v72, %v72
    %v81 = vunpack.c.l.b16 %v66
    %v82 = vunpack.c.l.b16 %v67
    %v83 = vunpack.c.l.b16 %v68
    %v84 = vunpack.c.l.b16 %v69
    %v85 = vpack.c.b16 %v82, %v81
    %v86 = vpack.c.b16 %v84, %v83
    %vm89 = vcmask 261120
    %v91 = vsel %vm89, %v76, 0
    %93 = vmatprep.subr.bf16.mxu0 0
    %94 = vmatpush1.bf16.msra.mxu0 %v85
    %95 = vmatprep.subr.bf16.mxu0 0
    %96 = vmatpush1.bf16.msra.mxu0 %v86
    %97 = vmatprep.subr.bf16.mxu0 0
    %98 = vmatpush1.bf16.msra.mxu0 0
    %99 = vmatprep.subr.bf16.mxu0 0
    %100 = vmatpush1.bf16.msra.mxu0 0
    %101 = vmatprep.subr.bf16.mxu0 0
    %102 = vmatpush1.bf16.msra.mxu0 0
    %103 = vmatprep.subr.bf16.mxu0 0
    %104 = vmatpush1.bf16.msra.mxu0 0
    %105 = vmatprep.subr.bf16.mxu0 0
    %106 = vmatpush1.bf16.msra.mxu0 0
    %107 = vmatprep.subr.bf16.mxu0 0
    %108 = vmatpush1.bf16.msra.mxu0 0
    %109 = vmatprep.subr.bf16.mxu0 0
    %110 = vmatpush1.bf16.msra.mxu0 0
    %111 = vmatprep.subr.bf16.mxu0 0
    %112 = vmatpush1.bf16.msra.mxu0 0
    %113 = vmatprep.subr.bf16.mxu0 0
    %114 = vmatpush1.bf16.msra.mxu0 0
    %115 = vmatprep.subr.bf16.mxu0 0
    %116 = vmatpush1.bf16.msra.mxu0 0
    %117 = vmatprep.subr.bf16.mxu0 0
    %118 = vmatpush1.bf16.msra.mxu0 0
    %119 = vmatprep.subr.bf16.mxu0 0
    %120 = vmatpush1.bf16.msra.mxu0 0
    %121 = vmatprep.subr.bf16.mxu0 0
    %122 = vmatpush1.bf16.msra.mxu0 0
    %123 = vmatprep.subr.bf16.mxu0 0
    %124 = vmatpush1.bf16.msra.mxu0 0
    %125 = vmatprep.mubr.bf16.mxu0 0
    %126 = vmatmul.mubr.bf16.gmra.mrb[0].mxu0 %v91
    %v127 = vpop.f32.mrb[0].mxu0
    %v128 = vadd.f32 0.0, %v127
    %v129 = vpop.f32.mrb[0].mxu0
    %v130 = vpop.f32.mrb[0].mxu0
    %v131 = vpop.f32.mrb[0].mxu0
    %132 = vdwg.mxu0
    %v133 = vadd.f32 %v75, %v128
    %v134 = vxor.u32 %v133, 2147483648
    %v135 = vmul.f32 %v134, 1.442695
    %v136 = vpow.pop %v135
    %v137 = vadd.f32 %v136, 1.0
    %v138 = vrcp.pop %v137
    %v139 = vmul.f32 1.0, %v138
    %v140 = vtanh.pop %v133
    %142 = vrot.lane.b32.xlu0 %v73, 32
    %v143 = vpop.permute.xlu0 %142
    %v145 = vmul.f32 %v139, %v143
    %147 = vrot.lane.b32.xlu0 %v140, 32
    %v148 = vpop.permute.xlu0 %147
    %v150 = vmul.f32 %v139, %v148
    %152 = vrot.lane.b32.xlu0 %v150, 32
    %v153 = vpop.permute.xlu0 %152
    %v155 = vadd.f32 %v145, %v153
    %v156 = vtanh.pop %v155
    %158 = vrot.lane.b32.xlu0 %v156, 32
    %v159 = vpop.permute.xlu0 %158
    %v161 = vmul.f32 %v139, %v159
    %v162 = vstv %s71
    %vm163 = vcmp.lt.s32.totalorder %v162, %v70
    %v164 = vsel %vm163, 1, 0
    %165 = vset.pattern.permute.xlu0 0
    %166 = vperm.xlu0 %165, %v164
    %v167 = vpop.permute.xlu0 %166
    %vm168 = vcmp.eq.s32.totalorder %v167, 1
    %170 = vrot.lane.b32.xlu0 %v72, 64
    %v171 = vpop.permute.xlu0 %170
    %v173 = vsel %vm168, %v161, %v171
    %v174 = vsel %vm168, %v155, %v143
    %v175 = vsel %vm168, %v161, 0.0
    %s176 = scalar_lea.vmem [#allocation5], 4
    %v177 = vld [vmem:[%s176] sm:$0xf]
    %v178 = vunpack.c.l.bf16 %v177
    %v179 = vpack.c.bf16 %v173, %v173
    %181 = vrot.lane.b32.xlu0 %v179, 64
    %v182 = vpop.permute.xlu0 %181
    %v184 = vsel %vm89, %v182, 0
    %186 = vmatprep.subr.bf16.mxu0 0
    %187 = vmatpush1.bf16.msra.mxu0 %v85
    %188 = vmatprep.subr.bf16.mxu0 0
    %189 = vmatpush1.bf16.msra.mxu0 %v86
    %190 = vmatprep.subr.bf16.mxu0 0
    %191 = vmatpush1.bf16.msra.mxu0 0
    %192 = vmatprep.subr.bf16.mxu0 0
    %193 = vmatpush1.bf16.msra.mxu0 0
    %194 = vmatprep.subr.bf16.mxu0 0
    %195 = vmatpush1.bf16.msra.mxu0 0
    %196 = vmatprep.subr.bf16.mxu0 0
    %197 = vmatpush1.bf16.msra.mxu0 0
    %198 = vmatprep.subr.bf16.mxu0 0
    %199 = vmatpush1.bf16.msra.mxu0 0
    %200 = vmatprep.subr.bf16.mxu0 0
    %201 = vmatpush1.bf16.msra.mxu0 0
    %202 = vmatprep.subr.bf16.mxu0 0
    %203 = vmatpush1.bf16.msra.mxu0 0
    %204 = vmatprep.subr.bf16.mxu0 0
    %205 = vmatpush1.bf16.msra.mxu0 0
    %206 = vmatprep.subr.bf16.mxu0 0
    %207 = vmatpush1.bf16.msra.mxu0 0
    %208 = vmatprep.subr.bf16.mxu0 0
    %209 = vmatpush1.bf16.msra.mxu0 0
    %210 = vmatprep.subr.bf16.mxu0 0
    %211 = vmatpush1.bf16.msra.mxu0 0
    %212 = vmatprep.subr.bf16.mxu0 0
    %213 = vmatpush1.bf16.msra.mxu0 0
    %214 = vmatprep.subr.bf16.mxu0 0
    %215 = vmatpush1.bf16.msra.mxu0 0
    %216 = vmatprep.subr.bf16.mxu0 0
    %217 = vmatpush1.bf16.msra.mxu0 0
    %218 = vmatprep.mubr.bf16.mxu0 0
    %219 = vmatmul.mubr.bf16.gmra.mrb[0].mxu0 %v184
    %v220 = vpop.f32.mrb[0].mxu0
    %v221 = vadd.f32 0.0, %v220
    %v222 = vpop.f32.mrb[0].mxu0
    %v223 = vpop.f32.mrb[0].mxu0
    %v224 = vpop.f32.mrb[0].mxu0
    %225 = vdwg.mxu0
    %v226 = vadd.f32 %v178, %v221
    %v227 = vxor.u32 %v226, 2147483648
    %v228 = vmul.f32 %v227, 1.442695
    %v229 = vpow.pop %v228
    %v230 = vadd.f32 %v229, 1.0
    %v231 = vrcp.pop %v230
    %v232 = vmul.f32 1.0, %v231
    %v233 = vtanh.pop %v226
    %v234 = vmul.f32 %v232, %v174
    %236 = vrot.lane.b32.xlu0 %v233, 32
    %v237 = vpop.permute.xlu0 %236
    %v239 = vmul.f32 %v232, %v237
    %241 = vrot.lane.b32.xlu0 %v239, 32
    %v242 = vpop.permute.xlu0 %241
    %v244 = vadd.f32 %v234, %v242
    %v245 = vtanh.pop %v244
    %247 = vrot.lane.b32.xlu0 %v245, 32
    %v248 = vpop.permute.xlu0 %247
    %v250 = vmul.f32 %v232, %v248
    %s251 = sadd.s32 %s71, 1
    %v252 = vstv %s251
    %vm253 = vcmp.lt.s32.totalorder %v252, %v70
    %v254 = vsel %vm253, 1, 0
    %255 = vset.pattern.permute.xlu0 0
    %256 = vperm.xlu0 %255, %v254
    %v257 = vpop.permute.xlu0 %256
    %vm258 = vcmp.eq.s32.totalorder %v257, 1
    %v259 = vsel %vm258, %v250, %v173
    %v260 = vsel %vm258, %v244, %v174
    %v261 = vsel %vm258, %v250, 0.0
    %s262 = scalar_lea.vmem [#allocation5], 8
    %v263 = vld [vmem:[%s262] sm:$0xf]
    %v264 = vunpack.c.l.bf16 %v263
    %v265 = vpack.c.bf16 %v259, %v259
    %267 = vrot.lane.b32.xlu0 %v265, 64
    %v268 = vpop.permute.xlu0 %267
    %v270 = vsel %vm89, %v268, 0
    %272 = vmatprep.subr.bf16.mxu0 0
    %273 = vmatpush1.bf16.msra.mxu0 %v85
    %274 = vmatprep.subr.bf16.mxu0 0
    %275 = vmatpush1.bf16.msra.mxu0 %v86
    %276 = vmatprep.subr.bf16.mxu0 0
    %277 = vmatpush1.bf16.msra.mxu0 0
    %278 = vmatprep.subr.bf16.mxu0 0
    %279 = vmatpush1.bf16.msra.mxu0 0
    %280 = vmatprep.subr.bf16.mxu0 0
    %281 = vmatpush1.bf16.msra.mxu0 0
    %282 = vmatprep.subr.bf16.mxu0 0
    %283 = vmatpush1.bf16.msra.mxu0 0
    %284 = vmatprep.subr.bf16.mxu0 0
    %285 = vmatpush1.bf16.msra.mxu0 0
    %286 = vmatprep.subr.bf16.mxu0 0
    %287 = vmatpush1.bf16.msra.mxu0 0
    %288 = vmatprep.subr.bf16.mxu0 0
    %289 = vmatpush1.bf16.msra.mxu0 0
    %290 = vmatprep.subr.bf16.mxu0 0
    %291 = vmatpush1.bf16.msra.mxu0 0
    %292 = vmatprep.subr.bf16.mxu0 0
    %293 = vmatpush1.bf16.msra.mxu0 0
    %294 = vmatprep.subr.bf16.mxu0 0
    %295 = vmatpush1.bf16.msra.mxu0 0
    %296 = vmatprep.subr.bf16.mxu0 0
    %297 = vmatpush1.bf16.msra.mxu0 0
    %298 = vmatprep.subr.bf16.mxu0 0
    %299 = vmatpush1.bf16.msra.mxu0 0
    %300 = vmatprep.subr.bf16.mxu0 0
    %301 = vmatpush1.bf16.msra.mxu0 0
    %302 = vmatprep.subr.bf16.mxu0 0
    %303 = vmatpush1.bf16.msra.mxu0 0
    %304 = vmatprep.mubr.bf16.mxu0 0
    %305 = vmatmul.mubr.bf16.gmra.mrb[0].mxu0 %v270
    %v306 = vpop.f32.mrb[0].mxu0
    %v307 = vadd.f32 0.0, %v306
    %v308 = vpop.f32.mrb[0].mxu0
    %v309 = vpop.f32.mrb[0].mxu0
    %v310 = vpop.f32.mrb[0].mxu0
    %311 = vdwg.mxu0
    %v312 = vadd.f32 %v264, %v307
    %v313 = vxor.u32 %v312, 2147483648
    %v314 = vmul.f32 %v313, 1.442695
    %v315 = vpow.pop %v314
    %v316 = vadd.f32 %v315, 1.0
    %v317 = vrcp.pop %v316
    %v318 = vmul.f32 1.0, %v317
    %v319 = vtanh.pop %v312
    %v320 = vmul.f32 %v318, %v260
    %322 = vrot.lane.b32.xlu0 %v319, 32
    %v323 = vpop.permute.xlu0 %322
    %v325 = vmul.f32 %v318, %v323
    %327 = vrot.lane.b32.xlu0 %v325, 32
    %v328 = vpop.permute.xlu0 %327
    %v330 = vadd.f32 %v320, %v328
    %v331 = vtanh.pop %v330
    %333 = vrot.lane.b32.xlu0 %v331, 32
    %v334 = vpop.permute.xlu0 %333
    %v336 = vmul.f32 %v318, %v334
    %s337 = sadd.s32 %s71, 2
    %v338 = vstv %s337
    %vm339 = vcmp.lt.s32.totalorder %v338, %v70
    %v340 = vsel %vm339, 1, 0
    %341 = vset.pattern.permute.xlu0 0
    %342 = vperm.xlu0 %341, %v340
    %v343 = vpop.permute.xlu0 %342
    %vm344 = vcmp.eq.s32.totalorder %v343, 1
    %v345 = vsel %vm344, %v336, %v259
    %v346 = vsel %vm344, %v330, %v260
    %v347 = vsel %vm344, %v336, 0.0
    %s348 = scalar_lea.vmem [#allocation5], 12
    %v349 = vld [vmem:[%s348] sm:$0xf]
    %v350 = vunpack.c.l.bf16 %v349
    %v351 = vpack.c.bf16 %v345, %v345
    %353 = vrot.lane.b32.xlu0 %v351, 64
    %v354 = vpop.permute.xlu0 %353
    %v356 = vsel %vm89, %v354, 0
    %358 = vmatprep.subr.bf16.mxu0 0
    %359 = vmatpush1.bf16.msra.mxu0 %v85
    %360 = vmatprep.subr.bf16.mxu0 0
    %361 = vmatpush1.bf16.msra.mxu0 %v86
    %362 = vmatprep.subr.bf16.mxu0 0
    %363 = vmatpush1.bf16.msra.mxu0 0
    %364 = vmatprep.subr.bf16.mxu0 0
    %365 = vmatpush1.bf16.msra.mxu0 0
    %366 = vmatprep.subr.bf16.mxu0 0
    %367 = vmatpush1.bf16.msra.mxu0 0
    %368 = vmatprep.subr.bf16.mxu0 0
    %369 = vmatpush1.bf16.msra.mxu0 0
    %370 = vmatprep.subr.bf16.mxu0 0
    %371 = vmatpush1.bf16.msra.mxu0 0
    %372 = vmatprep.subr.bf16.mxu0 0
    %373 = vmatpush1.bf16.msra.mxu0 0
    %374 = vmatprep.subr.bf16.mxu0 0
    %375 = vmatpush1.bf16.msra.mxu0 0
    %376 = vmatprep.subr.bf16.mxu0 0
    %377 = vmatpush1.bf16.msra.mxu0 0
    %378 = vmatprep.subr.bf16.mxu0 0
    %379 = vmatpush1.bf16.msra.mxu0 0
    %380 = vmatprep.subr.bf16.mxu0 0
    %381 = vmatpush1.bf16.msra.mxu0 0
    %382 = vmatprep.subr.bf16.mxu0 0
    %383 = vmatpush1.bf16.msra.mxu0 0
    %384 = vmatprep.subr.bf16.mxu0 0
    %385 = vmatpush1.bf16.msra.mxu0 0
    %386 = vmatprep.subr.bf16.mxu0 0
    %387 = vmatpush1.bf16.msra.mxu0 0
    %388 = vmatprep.subr.bf16.mxu0 0
    %389 = vmatpush1.bf16.msra.mxu0 0
    %390 = vmatprep.mubr.bf16.mxu0 0
    %391 = vmatmul.mubr.bf16.gmra.mrb[0].mxu0 %v356
    %v392 = vpop.f32.mrb[0].mxu0
    %v393 = vadd.f32 0.0, %v392
    %v394 = vpop.f32.mrb[0].mxu0
    %v395 = vpop.f32.mrb[0].mxu0
    %v396 = vpop.f32.mrb[0].mxu0
    %397 = vdwg.mxu0
    %v398 = vadd.f32 %v350, %v393
    %v399 = vxor.u32 %v398, 2147483648
    %v400 = vmul.f32 %v399, 1.442695
    %v401 = vpow.pop %v400
    %v402 = vadd.f32 %v401, 1.0
    %v403 = vrcp.pop %v402
    %v404 = vmul.f32 1.0, %v403
    %v405 = vtanh.pop %v398
    %v406 = vmul.f32 %v404, %v346
    %408 = vrot.lane.b32.xlu0 %v405, 32
    %v409 = vpop.permute.xlu0 %408
    %v411 = vmul.f32 %v404, %v409
    %413 = vrot.lane.b32.xlu0 %v411, 32
    %v414 = vpop.permute.xlu0 %413
    %v416 = vadd.f32 %v406, %v414
    %v417 = vtanh.pop %v416
    %419 = vrot.lane.b32.xlu0 %v417, 32
    %v420 = vpop.permute.xlu0 %419
    %v422 = vmul.f32 %v404, %v420
    %s423 = sadd.s32 %s71, 3
    %v424 = vstv %s423
    %vm425 = vcmp.lt.s32.totalorder %v424, %v70
    %v426 = vsel %vm425, 1, 0
    %427 = vset.pattern.permute.xlu0 0
    %428 = vperm.xlu0 %427, %v426
    %v429 = vpop.permute.xlu0 %428
    %vm430 = vcmp.eq.s32.totalorder %v429, 1
    %v431 = vsel %vm430, %v422, %v345
    %v432 = vsel %vm430, %v416, %v346
    %v433 = vsel %vm430, %v422, 0.0
    %s434 = scalar_lea.vmem [#allocation5], 16
    %v435 = vld [vmem:[%s434] sm:$0xf]
    %v436 = vunpack.c.l.bf16 %v435
    %v437 = vpack.c.bf16 %v431, %v431
    %439 = vrot.lane.b32.xlu0 %v437, 64
    %v440 = vpop.permute.xlu0 %439
    %v442 = vsel %vm89, %v440, 0
    %444 = vmatprep.subr.bf16.mxu0 0
    %445 = vmatpush1.bf16.msra.mxu0 %v85
    %446 = vmatprep.subr.bf16.mxu0 0
    %447 = vmatpush1.bf16.msra.mxu0 %v86
    %448 = vmatprep.subr.bf16.mxu0 0
    %449 = vmatpush1.bf16.msra.mxu0 0
    %450 = vmatprep.subr.bf16.mxu0 0
    %451 = vmatpush1.bf16.msra.mxu0 0
    %452 = vmatprep.subr.bf16.mxu0 0
    %453 = vmatpush1.bf16.msra.mxu0 0
    %454 = vmatprep.subr.bf16.mxu0 0
    %455 = vmatpush1.bf16.msra.mxu0 0
    %456 = vmatprep.subr.bf16.mxu0 0
    %457 = vmatpush1.bf16.msra.mxu0 0
    %458 = vmatprep.subr.bf16.mxu0 0
    %459 = vmatpush1.bf16.msra.mxu0 0
    %460 = vmatprep.subr.bf16.mxu0 0
    %461 = vmatpush1.bf16.msra.mxu0 0
    %462 = vmatprep.subr.bf16.mxu0 0
    %463 = vmatpush1.bf16.msra.mxu0 0
    %464 = vmatprep.subr.bf16.mxu0 0
    %465 = vmatpush1.bf16.msra.mxu0 0
    %466 = vmatprep.subr.bf16.mxu0 0
    %467 = vmatpush1.bf16.msra.mxu0 0
    %468 = vmatprep.subr.bf16.mxu0 0
    %469 = vmatpush1.bf16.msra.mxu0 0
    %470 = vmatprep.subr.bf16.mxu0 0
    %471 = vmatpush1.bf16.msra.mxu0 0
    %472 = vmatprep.subr.bf16.mxu0 0
    %473 = vmatpush1.bf16.msra.mxu0 0
    %474 = vmatprep.subr.bf16.mxu0 0
    %475 = vmatpush1.bf16.msra.mxu0 0
    %476 = vmatprep.mubr.bf16.mxu0 0
    %477 = vmatmul.mubr.bf16.gmra.mrb[0].mxu0 %v442
    %v478 = vpop.f32.mrb[0].mxu0
    %v479 = vadd.f32 0.0, %v478
    %v480 = vpop.f32.mrb[0].mxu0
    %v481 = vpop.f32.mrb[0].mxu0
    %v482 = vpop.f32.mrb[0].mxu0
    %483 = vdwg.mxu0
    %v484 = vadd.f32 %v436, %v479
    %v485 = vxor.u32 %v484, 2147483648
    %v486 = vmul.f32 %v485, 1.442695
    %v487 = vpow.pop %v486
    %v488 = vadd.f32 %v487, 1.0
    %v489 = vrcp.pop %v488
    %v490 = vmul.f32 1.0, %v489
    %v491 = vtanh.pop %v484
    %v492 = vmul.f32 %v490, %v432
    %494 = vrot.lane.b32.xlu0 %v491, 32
    %v495 = vpop.permute.xlu0 %494
    %v497 = vmul.f32 %v490, %v495
    %499 = vrot.lane.b32.xlu0 %v497, 32
    %v500 = vpop.permute.xlu0 %499
    %v502 = vadd.f32 %v492, %v500
    %v503 = vtanh.pop %v502
    %505 = vrot.lane.b32.xlu0 %v503, 32
    %v506 = vpop.permute.xlu0 %505
    %v508 = vmul.f32 %v490, %v506
    %s509 = sadd.s32 %s71, 4
    %v510 = vstv %s509
    %vm511 = vcmp.lt.s32.totalorder %v510, %v70
    %v512 = vsel %vm511, 1, 0
    %513 = vset.pattern.permute.xlu0 0
    %514 = vperm.xlu0 %513, %v512
    %v515 = vpop.permute.xlu0 %514
    %vm516 = vcmp.eq.s32.totalorder %v515, 1
    %v517 = vsel %vm516, %v508, %v431
    %v518 = vsel %vm516, %v502, %v432
    %v519 = vsel %vm516, %v508, 0.0
    %s520 = scalar_lea.vmem [#allocation5], 20
    %v521 = vld [vmem:[%s520] sm:$0xf]
    %v522 = vunpack.c.l.bf16 %v521
    %v523 = vpack.c.bf16 %v517, %v517
    %525 = vrot.lane.b32.xlu0 %v523, 64
    %v526 = vpop.permute.xlu0 %525
    %v528 = vsel %vm89, %v526, 0
    %530 = vmatprep.subr.bf16.mxu0 0
    %531 = vmatpush1.bf16.msra.mxu0 %v85
    %532 = vmatprep.subr.bf16.mxu0 0
    %533 = vmatpush1.bf16.msra.mxu0 %v86
    %534 = vmatprep.subr.bf16.mxu0 0
    %535 = vmatpush1.bf16.msra.mxu0 0
    %536 = vmatprep.subr.bf16.mxu0 0
    %537 = vmatpush1.bf16.msra.mxu0 0
    %538 = vmatprep.subr.bf16.mxu0 0
    %539 = vmatpush1.bf16.msra.mxu0 0
    %540 = vmatprep.subr.bf16.mxu0 0
    %541 = vmatpush1.bf16.msra.mxu0 0
    %542 = vmatprep.subr.bf16.mxu0 0
    %543 = vmatpush1.bf16.msra.mxu0 0
    %544 = vmatprep.subr.bf16.mxu0 0
    %545 = vmatpush1.bf16.msra.mxu0 0
    %546 = vmatprep.subr.bf16.mxu0 0
    %547 = vmatpush1.bf16.msra.mxu0 0
    %548 = vmatprep.subr.bf16.mxu0 0
    %549 = vmatpush1.bf16.msra.mxu0 0
    %550 = vmatprep.subr.bf16.mxu0 0
    %551 = vmatpush1.bf16.msra.mxu0 0
    %552 = vmatprep.subr.bf16.mxu0 0
    %553 = vmatpush1.bf16.msra.mxu0 0
    %554 = vmatprep.subr.bf16.mxu0 0
    %555 = vmatpush1.bf16.msra.mxu0 0
    %556 = vmatprep.subr.bf16.mxu0 0
    %557 = vmatpush1.bf16.msra.mxu0 0
    %558 = vmatprep.subr.bf16.mxu0 0
    %559 = vmatpush1.bf16.msra.mxu0 0
    %560 = vmatprep.subr.bf16.mxu0 0
    %561 = vmatpush1.bf16.msra.mxu0 0
    %562 = vmatprep.mubr.bf16.mxu0 0
    %563 = vmatmul.mubr.bf16.gmra.mrb[0].mxu0 %v528
    %v564 = vpop.f32.mrb[0].mxu0
    %v565 = vadd.f32 0.0, %v564
    %v566 = vpop.f32.mrb[0].mxu0
    %v567 = vpop.f32.mrb[0].mxu0
    %v568 = vpop.f32.mrb[0].mxu0
    %569 = vdwg.mxu0
    %v570 = vadd.f32 %v522, %v565
    %v571 = vxor.u32 %v570, 2147483648
    %v572 = vmul.f32 %v571, 1.442695
    %v573 = vpow.pop %v572
    %v574 = vadd.f32 %v573, 1.0
    %v575 = vrcp.pop %v574
    %v576 = vmul.f32 1.0, %v575
    %v577 = vtanh.pop %v570
    %v578 = vmul.f32 %v576, %v518
    %580 = vrot.lane.b32.xlu0 %v577, 32
    %v581 = vpop.permute.xlu0 %580
    %v583 = vmul.f32 %v576, %v581
    %585 = vrot.lane.b32.xlu0 %v583, 32
    %v586 = vpop.permute.xlu0 %585
    %v588 = vadd.f32 %v578, %v586
    %v589 = vtanh.pop %v588
    %591 = vrot.lane.b32.xlu0 %v589, 32
    %v592 = vpop.permute.xlu0 %591
    %v594 = vmul.f32 %v576, %v592
    %s595 = sadd.s32 %s71, 5
    %v596 = vstv %s595
    %vm597 = vcmp.lt.s32.totalorder %v596, %v70
    %v598 = vsel %vm597, 1, 0
    %599 = vset.pattern.permute.xlu0 0
    %600 = vperm.xlu0 %599, %v598
    %v601 = vpop.permute.xlu0 %600
    %vm602 = vcmp.eq.s32.totalorder %v601, 1
    %v603 = vsel %vm602, %v594, %v517
    %v604 = vsel %vm602, %v588, %v518
    %v605 = vsel %vm602, %v594, 0.0
    %s606 = scalar_lea.vmem [#allocation5], 24
    %v607 = vld [vmem:[%s606] sm:$0xf]
    %v608 = vunpack.c.l.bf16 %v607
    %v609 = vpack.c.bf16 %v603, %v603
    %611 = vrot.lane.b32.xlu0 %v609, 64
    %v612 = vpop.permute.xlu0 %611
    %v614 = vsel %vm89, %v612, 0
    %616 = vmatprep.subr.bf16.mxu0 0
    %617 = vmatpush1.bf16.msra.mxu0 %v85
    %618 = vmatprep.subr.bf16.mxu0 0
    %619 = vmatpush1.bf16.msra.mxu0 %v86
    %620 = vmatprep.subr.bf16.mxu0 0
    %621 = vmatpush1.bf16.msra.mxu0 0
    %622 = vmatprep.subr.bf16.mxu0 0
    %623 = vmatpush1.bf16.msra.mxu0 0
    %624 = vmatprep.subr.bf16.mxu0 0
    %625 = vmatpush1.bf16.msra.mxu0 0
    %626 = vmatprep.subr.bf16.mxu0 0
    %627 = vmatpush1.bf16.msra.mxu0 0
    %628 = vmatprep.subr.bf16.mxu0 0
    %629 = vmatpush1.bf16.msra.mxu0 0
    %630 = vmatprep.subr.bf16.mxu0 0
    %631 = vmatpush1.bf16.msra.mxu0 0
    %632 = vmatprep.subr.bf16.mxu0 0
    %633 = vmatpush1.bf16.msra.mxu0 0
    %634 = vmatprep.subr.bf16.mxu0 0
    %635 = vmatpush1.bf16.msra.mxu0 0
    %636 = vmatprep.subr.bf16.mxu0 0
    %637 = vmatpush1.bf16.msra.mxu0 0
    %638 = vmatprep.subr.bf16.mxu0 0
    %639 = vmatpush1.bf16.msra.mxu0 0
    %640 = vmatprep.subr.bf16.mxu0 0
    %641 = vmatpush1.bf16.msra.mxu0 0
    %642 = vmatprep.subr.bf16.mxu0 0
    %643 = vmatpush1.bf16.msra.mxu0 0
    %644 = vmatprep.subr.bf16.mxu0 0
    %645 = vmatpush1.bf16.msra.mxu0 0
    %646 = vmatprep.subr.bf16.mxu0 0
    %647 = vmatpush1.bf16.msra.mxu0 0
    %648 = vmatprep.mubr.bf16.mxu0 0
    %649 = vmatmul.mubr.bf16.gmra.mrb[0].mxu0 %v614
    %v650 = vpop.f32.mrb[0].mxu0
    %v651 = vadd.f32 0.0, %v650
    %v652 = vpop.f32.mrb[0].mxu0
    %v653 = vpop.f32.mrb[0].mxu0
    %v654 = vpop.f32.mrb[0].mxu0
    %655 = vdwg.mxu0
    %v656 = vadd.f32 %v608, %v651
    %v657 = vxor.u32 %v656, 2147483648
    %v658 = vmul.f32 %v657, 1.442695
    %v659 = vpow.pop %v658
    %v660 = vadd.f32 %v659, 1.0
    %v661 = vrcp.pop %v660
    %v662 = vmul.f32 1.0, %v661
    %v663 = vtanh.pop %v656
    %v664 = vmul.f32 %v662, %v604
    %666 = vrot.lane.b32.xlu0 %v663, 32
    %v667 = vpop.permute.xlu0 %666
    %v669 = vmul.f32 %v662, %v667
    %671 = vrot.lane.b32.xlu0 %v669, 32
    %v672 = vpop.permute.xlu0 %671
    %v674 = vadd.f32 %v664, %v672
    %v675 = vtanh.pop %v674
    %677 = vrot.lane.b32.xlu0 %v675, 32
    %v678 = vpop.permute.xlu0 %677
    %v680 = vmul.f32 %v662, %v678
    %s681 = sadd.s32 %s71, 6
    %v682 = vstv %s681
    %vm683 = vcmp.lt.s32.totalorder %v682, %v70
    %v684 = vsel %vm683, 1, 0
    %685 = vset.pattern.permute.xlu0 0
    %686 = vperm.xlu0 %685, %v684
    %v687 = vpop.permute.xlu0 %686
    %vm688 = vcmp.eq.s32.totalorder %v687, 1
    %v689 = vsel %vm688, %v680, %v603
    %v690 = vsel %vm688, %v674, %v604
    %v691 = vsel %vm688, %v680, 0.0
    %s692 = scalar_lea.vmem [#allocation5], 28
    %v693 = vld [vmem:[%s692] sm:$0xf]
    %v694 = vunpack.c.l.bf16 %v693
    %v695 = vpack.c.bf16 %v689, %v689
    %697 = vrot.lane.b32.xlu0 %v695, 64
    %v698 = vpop.permute.xlu0 %697
    %v700 = vsel %vm89, %v698, 0
    %702 = vmatprep.subr.bf16.mxu0 0
    %703 = vmatpush1.bf16.msra.mxu0 %v85
    %704 = vmatprep.subr.bf16.mxu0 0
    %705 = vmatpush1.bf16.msra.mxu0 %v86
    %706 = vmatprep.subr.bf16.mxu0 0
    %707 = vmatpush1.bf16.msra.mxu0 0
    %708 = vmatprep.subr.bf16.mxu0 0
    %709 = vmatpush1.bf16.msra.mxu0 0
    %710 = vmatprep.subr.bf16.mxu0 0
    %711 = vmatpush1.bf16.msra.mxu0 0
    %712 = vmatprep.subr.bf16.mxu0 0
    %713 = vmatpush1.bf16.msra.mxu0 0
    %714 = vmatprep.subr.bf16.mxu0 0
    %715 = vmatpush1.bf16.msra.mxu0 0
    %716 = vmatprep.subr.bf16.mxu0 0
    %717 = vmatpush1.bf16.msra.mxu0 0
    %718 = vmatprep.subr.bf16.mxu0 0
    %719 = vmatpush1.bf16.msra.mxu0 0
    %720 = vmatprep.subr.bf16.mxu0 0
    %721 = vmatpush1.bf16.msra.mxu0 0
    %722 = vmatprep.subr.bf16.mxu0 0
    %723 = vmatpush1.bf16.msra.mxu0 0
    %724 = vmatprep.subr.bf16.mxu0 0
    %725 = vmatpush1.bf16.msra.mxu0 0
    %726 = vmatprep.subr.bf16.mxu0 0
    %727 = vmatpush1.bf16.msra.mxu0 0
    %728 = vmatprep.subr.bf16.mxu0 0
    %729 = vmatpush1.bf16.msra.mxu0 0
    %730 = vmatprep.subr.bf16.mxu0 0
    %731 = vmatpush1.bf16.msra.mxu0 0
    %732 = vmatprep.subr.bf16.mxu0 0
    %733 = vmatpush1.bf16.msra.mxu0 0
    %734 = vmatprep.mubr.bf16.mxu0 0
    %735 = vmatmul.mubr.bf16.gmra.mrb[0].mxu0 %v700
    %v736 = vpop.f32.mrb[0].mxu0
    %v737 = vadd.f32 0.0, %v736
    %v738 = vpop.f32.mrb[0].mxu0
    %v739 = vpop.f32.mrb[0].mxu0
    %v740 = vpop.f32.mrb[0].mxu0
    %741 = vdwg.mxu0
    %v742 = vadd.f32 %v694, %v737
    %v743 = vxor.u32 %v742, 2147483648
    %v744 = vmul.f32 %v743, 1.442695
    %v745 = vpow.pop %v744
    %v746 = vadd.f32 %v745, 1.0
    %v747 = vrcp.pop %v746
    %v748 = vmul.f32 1.0, %v747
    %v749 = vtanh.pop %v742
    %v750 = vmul.f32 %v748, %v690
    %752 = vrot.lane.b32.xlu0 %v749, 32
    %v753 = vpop.permute.xlu0 %752
    %v755 = vmul.f32 %v748, %v753
    %757 = vrot.lane.b32.xlu0 %v755, 32
    %v758 = vpop.permute.xlu0 %757
    %v760 = vadd.f32 %v750, %v758
    %v761 = vtanh.pop %v760
    %763 = vrot.lane.b32.xlu0 %v761, 32
    %v764 = vpop.permute.xlu0 %763
    %v766 = vmul.f32 %v748, %v764
    %s767 = sadd.s32 %s71, 7
    %v768 = vstv %s767
    %vm769 = vcmp.lt.s32.totalorder %v768, %v70
    %v770 = vsel %vm769, 1, 0
    %771 = vset.pattern.permute.xlu0 0
    %772 = vperm.xlu0 %771, %v770
    %v773 = vpop.permute.xlu0 %772
    %vm774 = vcmp.eq.s32.totalorder %v773, 1
    %v775 = vsel %vm774, %v766, %v689
    %v776 = vsel %vm774, %v760, %v690
    %v777 = vsel %vm774, %v766, 0.0
    %s778 = scalar_lea.vmem [#allocation5], 32
    %v779 = vld [vmem:[%s778] sm:$0xf]
    %v780 = vunpack.c.l.bf16 %v779
    %v781 = vpack.c.bf16 %v775, %v775
    %783 = vrot.lane.b32.xlu0 %v781, 64
    %v784 = vpop.permute.xlu0 %783
    %v786 = vsel %vm89, %v784, 0
    %788 = vmatprep.subr.bf16.mxu0 0
    %789 = vmatpush1.bf16.msra.mxu0 %v85
    %790 = vmatprep.subr.bf16.mxu0 0
    %791 = vmatpush1.bf16.msra.mxu0 %v86
    %792 = vmatprep.subr.bf16.mxu0 0
    %793 = vmatpush1.bf16.msra.mxu0 0
    %794 = vmatprep.subr.bf16.mxu0 0
    %795 = vmatpush1.bf16.msra.mxu0 0
    %796 = vmatprep.subr.bf16.mxu0 0
    %797 = vmatpush1.bf16.msra.mxu0 0
    %798 = vmatprep.subr.bf16.mxu0 0
    %799 = vmatpush1.bf16.msra.mxu0 0
    %800 = vmatprep.subr.bf16.mxu0 0
    %801 = vmatpush1.bf16.msra.mxu0 0
    %802 = vmatprep.subr.bf16.mxu0 0
    %803 = vmatpush1.bf16.msra.mxu0 0
    %804 = vmatprep.subr.bf16.mxu0 0
    %805 = vmatpush1.bf16.msra.mxu0 0
    %806 = vmatprep.subr.bf16.mxu0 0
    %807 = vmatpush1.bf16.msra.mxu0 0
    %808 = vmatprep.subr.bf16.mxu0 0
    %809 = vmatpush1.bf16.msra.mxu0 0
    %810 = vmatprep.subr.bf16.mxu0 0
    %811 = vmatpush1.bf16.msra.mxu0 0
    %812 = vmatprep.subr.bf16.mxu0 0
    %813 = vmatpush1.bf16.msra.mxu0 0
    %814 = vmatprep.subr.bf16.mxu0 0
    %815 = vmatpush1.bf16.msra.mxu0 0
    %816 = vmatprep.subr.bf16.mxu0 0
    %817 = vmatpush1.bf16.msra.mxu0 0
    %818 = vmatprep.subr.bf16.mxu0 0
    %819 = vmatpush1.bf16.msra.mxu0 0
    %820 = vmatprep.mubr.bf16.mxu0 0
    %821 = vmatmul.mubr.bf16.gmra.mrb[0].mxu0 %v786
    %v822 = vpop.f32.mrb[0].mxu0
    %v823 = vadd.f32 0.0, %v822
    %v824 = vpop.f32.mrb[0].mxu0
    %v825 = vpop.f32.mrb[0].mxu0
    %v826 = vpop.f32.mrb[0].mxu0
    %827 = vdwg.mxu0
    %v828 = vadd.f32 %v780, %v823
    %v829 = vxor.u32 %v828, 2147483648
    %v830 = vmul.f32 %v829, 1.442695
    %v831 = vpow.pop %v830
    %v832 = vadd.f32 %v831, 1.0
    %v833 = vrcp.pop %v832
    %v834 = vmul.f32 1.0, %v833
    %v835 = vtanh.pop %v828
    %v836 = vmul.f32 %v834, %v776
    %838 = vrot.lane.b32.xlu0 %v835, 32
    %v839 = vpop.permute.xlu0 %838
    %v841 = vmul.f32 %v834, %v839
    %843 = vrot.lane.b32.xlu0 %v841, 32
    %v844 = vpop.permute.xlu0 %843
    %v846 = vadd.f32 %v836, %v844
    %v847 = vtanh.pop %v846
    %849 = vrot.lane.b32.xlu0 %v847, 32
    %v850 = vpop.permute.xlu0 %849
    %v852 = vmul.f32 %v834, %v850
    %s853 = sadd.s32 %s71, 8
    %v854 = vstv %s853
    %vm855 = vcmp.lt.s32.totalorder %v854, %v70
    %v856 = vsel %vm855, 1, 0
    %857 = vset.pattern.permute.xlu0 0
    %858 = vperm.xlu0 %857, %v856
    %v859 = vpop.permute.xlu0 %858
    %vm860 = vcmp.eq.s32.totalorder %v859, 1
    %v861 = vsel %vm860, %v852, %v775
    %v862 = vsel %vm860, %v846, %v776
    %v863 = vsel %vm860, %v852, 0.0
    %s864 = scalar_lea.vmem [#allocation5], 36
    %v865 = vld [vmem:[%s864] sm:$0xf]
    %v866 = vunpack.c.l.bf16 %v865
    %v867 = vpack.c.bf16 %v861, %v861
    %869 = vrot.lane.b32.xlu0 %v867, 64
    %v870 = vpop.permute.xlu0 %869
    %v872 = vsel %vm89, %v870, 0
    %874 = vmatprep.subr.bf16.mxu0 0
    %875 = vmatpush1.bf16.msra.mxu0 %v85
    %876 = vmatprep.subr.bf16.mxu0 0
    %877 = vmatpush1.bf16.msra.mxu0 %v86
    %878 = vmatprep.subr.bf16.mxu0 0
    %879 = vmatpush1.bf16.msra.mxu0 0
    %880 = vmatprep.subr.bf16.mxu0 0
    %881 = vmatpush1.bf16.msra.mxu0 0
    %882 = vmatprep.subr.bf16.mxu0 0
    %883 = vmatpush1.bf16.msra.mxu0 0
    %884 = vmatprep.subr.bf16.mxu0 0
    %885 = vmatpush1.bf16.msra.mxu0 0
    %886 = vmatprep.subr.bf16.mxu0 0
    %887 = vmatpush1.bf16.msra.mxu0 0
    %888 = vmatprep.subr.bf16.mxu0 0
    %889 = vmatpush1.bf16.msra.mxu0 0
    %890 = vmatprep.subr.bf16.mxu0 0
    %891 = vmatpush1.bf16.msra.mxu0 0
    %892 = vmatprep.subr.bf16.mxu0 0
    %893 = vmatpush1.bf16.msra.mxu0 0
    %894 = vmatprep.subr.bf16.mxu0 0
    %895 = vmatpush1.bf16.msra.mxu0 0
    %896 = vmatprep.subr.bf16.mxu0 0
    %897 = vmatpush1.bf16.msra.mxu0 0
    %898 = vmatprep.subr.bf16.mxu0 0
    %899 = vmatpush1.bf16.msra.mxu0 0
    %900 = vmatprep.subr.bf16.mxu0 0
    %901 = vmatpush1.bf16.msra.mxu0 0
    %902 = vmatprep.subr.bf16.mxu0 0
    %903 = vmatpush1.bf16.msra.mxu0 0
    %904 = vmatprep.subr.bf16.mxu0 0
    %905 = vmatpush1.bf16.msra.mxu0 0
    %906 = vmatprep.mubr.bf16.mxu0 0
    %907 = vmatmul.mubr.bf16.gmra.mrb[0].mxu0 %v872
    %v908 = vpop.f32.mrb[0].mxu0
    %v909 = vadd.f32 0.0, %v908
    %v910 = vpop.f32.mrb[0].mxu0
    %v911 = vpop.f32.mrb[0].mxu0
    %v912 = vpop.f32.mrb[0].mxu0
    %913 = vdwg.mxu0
    %v914 = vadd.f32 %v866, %v909
    %v915 = vxor.u32 %v914, 2147483648
    %v916 = vmul.f32 %v915, 1.442695
    %v917 = vpow.pop %v916
    %v918 = vadd.f32 %v917, 1.0
    %v919 = vrcp.pop %v918
    %v920 = vmul.f32 1.0, %v919
    %v921 = vtanh.pop %v914
    %v922 = vmul.f32 %v920, %v862
    %924 = vrot.lane.b32.xlu0 %v921, 32
    %v925 = vpop.permute.xlu0 %924
    %v927 = vmul.f32 %v920, %v925
    %929 = vrot.lane.b32.xlu0 %v927, 32
    %v930 = vpop.permute.xlu0 %929
    %v932 = vadd.f32 %v922, %v930
    %v933 = vtanh.pop %v932
    %935 = vrot.lane.b32.xlu0 %v933, 32
    %v936 = vpop.permute.xlu0 %935
    %v938 = vmul.f32 %v920, %v936
    %s939 = sadd.s32 %s71, 9
    %v940 = vstv %s939
    %vm941 = vcmp.lt.s32.totalorder %v940, %v70
    %v942 = vsel %vm941, 1, 0
    %943 = vset.pattern.permute.xlu0 0
    %944 = vperm.xlu0 %943, %v942
    %v945 = vpop.permute.xlu0 %944
    %vm946 = vcmp.eq.s32.totalorder %v945, 1
    %v947 = vsel %vm946, %v938, %v861
    %v948 = vsel %vm946, %v932, %v862
    %v949 = vsel %vm946, %v938, 0.0
    %s950 = scalar_lea.vmem [#allocation5], 40
    %v951 = vld [vmem:[%s950] sm:$0xf]
    %v952 = vunpack.c.l.bf16 %v951
    %v953 = vpack.c.bf16 %v947, %v947
    %955 = vrot.lane.b32.xlu0 %v953, 64
    %v956 = vpop.permute.xlu0 %955
    %v958 = vsel %vm89, %v956, 0
    %960 = vmatprep.subr.bf16.mxu0 0
    %961 = vmatpush1.bf16.msra.mxu0 %v85
    %962 = vmatprep.subr.bf16.mxu0 0
    %963 = vmatpush1.bf16.msra.mxu0 %v86
    %964 = vmatprep.subr.bf16.mxu0 0
    %965 = vmatpush1.bf16.msra.mxu0 0
    %966 = vmatprep.subr.bf16.mxu0 0
    %967 = vmatpush1.bf16.msra.mxu0 0
    %968 = vmatprep.subr.bf16.mxu0 0
    %969 = vmatpush1.bf16.msra.mxu0 0
    %970 = vmatprep.subr.bf16.mxu0 0
    %971 = vmatpush1.bf16.msra.mxu0 0
    %972 = vmatprep.subr.bf16.mxu0 0
    %973 = vmatpush1.bf16.msra.mxu0 0
    %974 = vmatprep.subr.bf16.mxu0 0
    %975 = vmatpush1.bf16.msra.mxu0 0
    %976 = vmatprep.subr.bf16.mxu0 0
    %977 = vmatpush1.bf16.msra.mxu0 0
    %978 = vmatprep.subr.bf16.mxu0 0
    %979 = vmatpush1.bf16.msra.mxu0 0
    %980 = vmatprep.subr.bf16.mxu0 0
    %981 = vmatpush1.bf16.msra.mxu0 0
    %982 = vmatprep.subr.bf16.mxu0 0
    %983 = vmatpush1.bf16.msra.mxu0 0
    %984 = vmatprep.subr.bf16.mxu0 0
    %985 = vmatpush1.bf16.msra.mxu0 0
    %986 = vmatprep.subr.bf16.mxu0 0
    %987 = vmatpush1.bf16.msra.mxu0 0
    %988 = vmatprep.subr.bf16.mxu0 0
    %989 = vmatpush1.bf16.msra.mxu0 0
    %990 = vmatprep.subr.bf16.mxu0 0
    %991 = vmatpush1.bf16.msra.mxu0 0
    %992 = vmatprep.mubr.bf16.mxu0 0
    %993 = vmatmul.mubr.bf16.gmra.mrb[0].mxu0 %v958
    %v994 = vpop.f32.mrb[0].mxu0
    %v995 = vadd.f32 0.0, %v994
    %v996 = vpop.f32.mrb[0].mxu0
    %v997 = vpop.f32.mrb[0].mxu0
    %v998 = vpop.f32.mrb[0].mxu0
    %999 = vdwg.mxu0
    %v1000 = vadd.f32 %v952, %v995
    %v1001 = vxor.u32 %v1000, 2147483648
    %v1002 = vmul.f32 %v1001, 1.442695
    %v1003 = vpow.pop %v1002
    %v1004 = vadd.f32 %v1003, 1.0
    %v1005 = vrcp.pop %v1004
    %v1006 = vmul.f32 1.0, %v1005
    %v1007 = vtanh.pop %v1000
    %v1008 = vmul.f32 %v1006, %v948
    %1010 = vrot.lane.b32.xlu0 %v1007, 32
    %v1011 = vpop.permute.xlu0 %1010
    %v1013 = vmul.f32 %v1006, %v1011
    %1015 = vrot.lane.b32.xlu0 %v1013, 32
    %v1016 = vpop.permute.xlu0 %1015
    %v1018 = vadd.f32 %v1008, %v1016
    %v1019 = vtanh.pop %v1018
    %1021 = vrot.lane.b32.xlu0 %v1019, 32
    %v1022 = vpop.permute.xlu0 %1021
    %v1024 = vmul.f32 %v1006, %v1022
    %s1025 = sadd.s32 %s71, 10
    %v1026 = vstv %s1025
    %vm1027 = vcmp.lt.s32.totalorder %v1026, %v70
    %v1028 = vsel %vm1027, 1, 0
    %1029 = vset.pattern.permute.xlu0 0
    %1030 = vperm.xlu0 %1029, %v1028
    %v1031 = vpop.permute.xlu0 %1030
    %vm1032 = vcmp.eq.s32.totalorder %v1031, 1
    %v1033 = vsel %vm1032, %v1024, %v947
    %v1034 = vsel %vm1032, %v1018, %v948
    %v1035 = vsel %vm1032, %v1024, 0.0
    %s1036 = scalar_lea.vmem [#allocation5], 44
    %v1037 = vld [vmem:[%s1036] sm:$0xf]
    %v1038 = vunpack.c.l.bf16 %v1037
    %v1039 = vpack.c.bf16 %v1033, %v1033
    %1041 = vrot.lane.b32.xlu0 %v1039, 64
    %v1042 = vpop.permute.xlu0 %1041
    %v1044 = vsel %vm89, %v1042, 0
    %1046 = vmatprep.subr.bf16.mxu0 0
    %1047 = vmatpush1.bf16.msra.mxu0 %v85
    %1048 = vmatprep.subr.bf16.mxu0 0
    %1049 = vmatpush1.bf16.msra.mxu0 %v86
    %1050 = vmatprep.subr.bf16.mxu0 0
    %1051 = vmatpush1.bf16.msra.mxu0 0
    %1052 = vmatprep.subr.bf16.mxu0 0
    %1053 = vmatpush1.bf16.msra.mxu0 0
    %1054 = vmatprep.subr.bf16.mxu0 0
    %1055 = vmatpush1.bf16.msra.mxu0 0
    %1056 = vmatprep.subr.bf16.mxu0 0
    %1057 = vmatpush1.bf16.msra.mxu0 0
    %1058 = vmatprep.subr.bf16.mxu0 0
    %1059 = vmatpush1.bf16.msra.mxu0 0
    %1060 = vmatprep.subr.bf16.mxu0 0
    %1061 = vmatpush1.bf16.msra.mxu0 0
    %1062 = vmatprep.subr.bf16.mxu0 0
    %1063 = vmatpush1.bf16.msra.mxu0 0
    %1064 = vmatprep.subr.bf16.mxu0 0
    %1065 = vmatpush1.bf16.msra.mxu0 0
    %1066 = vmatprep.subr.bf16.mxu0 0
    %1067 = vmatpush1.bf16.msra.mxu0 0
    %1068 = vmatprep.subr.bf16.mxu0 0
    %1069 = vmatpush1.bf16.msra.mxu0 0
    %1070 = vmatprep.subr.bf16.mxu0 0
    %1071 = vmatpush1.bf16.msra.mxu0 0
    %1072 = vmatprep.subr.bf16.mxu0 0
    %1073 = vmatpush1.bf16.msra.mxu0 0
    %1074 = vmatprep.subr.bf16.mxu0 0
    %1075 = vmatpush1.bf16.msra.mxu0 0
    %1076 = vmatprep.subr.bf16.mxu0 0
    %1077 = vmatpush1.bf16.msra.mxu0 0
    %1078 = vmatprep.mubr.bf16.mxu0 0
    %1079 = vmatmul.mubr.bf16.gmra.mrb[0].mxu0 %v1044
    %v1080 = vpop.f32.mrb[0].mxu0
    %v1081 = vadd.f32 0.0, %v1080
    %v1082 = vpop.f32.mrb[0].mxu0
    %v1083 = vpop.f32.mrb[0].mxu0
    %v1084 = vpop.f32.mrb[0].mxu0
    %1085 = vdwg.mxu0
    %v1086 = vadd.f32 %v1038, %v1081
    %v1087 = vxor.u32 %v1086, 2147483648
    %v1088 = vmul.f32 %v1087, 1.442695
    %v1089 = vpow.pop %v1088
    %v1090 = vadd.f32 %v1089, 1.0
    %v1091 = vrcp.pop %v1090
    %v1092 = vmul.f32 1.0, %v1091
    %v1093 = vtanh.pop %v1086
    %v1094 = vmul.f32 %v1092, %v1034
    %1096 = vrot.lane.b32.xlu0 %v1093, 32
    %v1097 = vpop.permute.xlu0 %1096
    %v1099 = vmul.f32 %v1092, %v1097
    %1101 = vrot.lane.b32.xlu0 %v1099, 32
    %v1102 = vpop.permute.xlu0 %1101
    %v1104 = vadd.f32 %v1094, %v1102
    %v1105 = vtanh.pop %v1104
    %1107 = vrot.lane.b32.xlu0 %v1105, 32
    %v1108 = vpop.permute.xlu0 %1107
    %v1110 = vmul.f32 %v1092, %v1108
    %s1111 = sadd.s32 %s71, 11
    %v1112 = vstv %s1111
    %vm1113 = vcmp.lt.s32.totalorder %v1112, %v70
    %v1114 = vsel %vm1113, 1, 0
    %1115 = vset.pattern.permute.xlu0 0
    %1116 = vperm.xlu0 %1115, %v1114
    %v1117 = vpop.permute.xlu0 %1116
    %vm1118 = vcmp.eq.s32.totalorder %v1117, 1
    %v1119 = vsel %vm1118, %v1110, %v1033
    %v1120 = vsel %vm1118, %v1104, %v1034
    %v1121 = vsel %vm1118, %v1110, 0.0
    %s1122 = scalar_lea.vmem [#allocation5], 48
    %v1123 = vld [vmem:[%s1122] sm:$0xf]
    %v1124 = vunpack.c.l.bf16 %v1123
    %v1125 = vpack.c.bf16 %v1119, %v1119
    %1127 = vrot.lane.b32.xlu0 %v1125, 64
    %v1128 = vpop.permute.xlu0 %1127
    %v1130 = vsel %vm89, %v1128, 0
    %1132 = vmatprep.subr.bf16.mxu0 0
    %1133 = vmatpush1.bf16.msra.mxu0 %v85
    %1134 = vmatprep.subr.bf16.mxu0 0
    %1135 = vmatpush1.bf16.msra.mxu0 %v86
    %1136 = vmatprep.subr.bf16.mxu0 0
    %1137 = vmatpush1.bf16.msra.mxu0 0
    %1138 = vmatprep.subr.bf16.mxu0 0
    %1139 = vmatpush1.bf16.msra.mxu0 0
    %1140 = vmatprep.subr.bf16.mxu0 0
    %1141 = vmatpush1.bf16.msra.mxu0 0
    %1142 = vmatprep.subr.bf16.mxu0 0
    %1143 = vmatpush1.bf16.msra.mxu0 0
    %1144 = vmatprep.subr.bf16.mxu0 0
    %1145 = vmatpush1.bf16.msra.mxu0 0
    %1146 = vmatprep.subr.bf16.mxu0 0
    %1147 = vmatpush1.bf16.msra.mxu0 0
    %1148 = vmatprep.subr.bf16.mxu0 0
    %1149 = vmatpush1.bf16.msra.mxu0 0
    %1150 = vmatprep.subr.bf16.mxu0 0
    %1151 = vmatpush1.bf16.msra.mxu0 0
    %1152 = vmatprep.subr.bf16.mxu0 0
    %1153 = vmatpush1.bf16.msra.mxu0 0
    %1154 = vmatprep.subr.bf16.mxu0 0
    %1155 = vmatpush1.bf16.msra.mxu0 0
    %1156 = vmatprep.subr.bf16.mxu0 0
    %1157 = vmatpush1.bf16.msra.mxu0 0
    %1158 = vmatprep.subr.bf16.mxu0 0
    %1159 = vmatpush1.bf16.msra.mxu0 0
    %1160 = vmatprep.subr.bf16.mxu0 0
    %1161 = vmatpush1.bf16.msra.mxu0 0
    %1162 = vmatprep.subr.bf16.mxu0 0
    %1163 = vmatpush1.bf16.msra.mxu0 0
    %1164 = vmatprep.mubr.bf16.mxu0 0
    %1165 = vmatmul.mubr.bf16.gmra.mrb[0].mxu0 %v1130
    %v1166 = vpop.f32.mrb[0].mxu0
    %v1167 = vadd.f32 0.0, %v1166
    %v1168 = vpop.f32.mrb[0].mxu0
    %v1169 = vpop.f32.mrb[0].mxu0
    %v1170 = vpop.f32.mrb[0].mxu0
    %1171 = vdwg.mxu0
    %v1172 = vadd.f32 %v1124, %v1167
    %v1173 = vxor.u32 %v1172, 2147483648
    %v1174 = vmul.f32 %v1173, 1.442695
    %v1175 = vpow.pop %v1174
    %v1176 = vadd.f32 %v1175, 1.0
    %v1177 = vrcp.pop %v1176
    %v1178 = vmul.f32 1.0, %v1177
    %v1179 = vtanh.pop %v1172
    %v1180 = vmul.f32 %v1178, %v1120
    %1182 = vrot.lane.b32.xlu0 %v1179, 32
    %v1183 = vpop.permute.xlu0 %1182
    %v1185 = vmul.f32 %v1178, %v1183
    %1187 = vrot.lane.b32.xlu0 %v1185, 32
    %v1188 = vpop.permute.xlu0 %1187
    %v1190 = vadd.f32 %v1180, %v1188
    %v1191 = vtanh.pop %v1190
    %1193 = vrot.lane.b32.xlu0 %v1191, 32
    %v1194 = vpop.permute.xlu0 %1193
    %v1196 = vmul.f32 %v1178, %v1194
    %s1197 = sadd.s32 %s71, 12
    %v1198 = vstv %s1197
    %vm1199 = vcmp.lt.s32.totalorder %v1198, %v70
    %v1200 = vsel %vm1199, 1, 0
    %1201 = vset.pattern.permute.xlu0 0
    %1202 = vperm.xlu0 %1201, %v1200
    %v1203 = vpop.permute.xlu0 %1202
    %vm1204 = vcmp.eq.s32.totalorder %v1203, 1
    %v1205 = vsel %vm1204, %v1196, %v1119
    %v1206 = vsel %vm1204, %v1190, %v1120
    %v1207 = vsel %vm1204, %v1196, 0.0
    %s1208 = scalar_lea.vmem [#allocation5], 52
    %v1209 = vld [vmem:[%s1208] sm:$0xf]
    %v1210 = vunpack.c.l.bf16 %v1209
    %v1211 = vpack.c.bf16 %v1205, %v1205
    %1213 = vrot.lane.b32.xlu0 %v1211, 64
    %v1214 = vpop.permute.xlu0 %1213
    %v1216 = vsel %vm89, %v1214, 0
    %1218 = vmatprep.subr.bf16.mxu0 0
    %1219 = vmatpush1.bf16.msra.mxu0 %v85
    %1220 = vmatprep.subr.bf16.mxu0 0
    %1221 = vmatpush1.bf16.msra.mxu0 %v86
    %1222 = vmatprep.subr.bf16.mxu0 0
    %1223 = vmatpush1.bf16.msra.mxu0 0
    %1224 = vmatprep.subr.bf16.mxu0 0
    %1225 = vmatpush1.bf16.msra.mxu0 0
    %1226 = vmatprep.subr.bf16.mxu0 0
    %1227 = vmatpush1.bf16.msra.mxu0 0
    %1228 = vmatprep.subr.bf16.mxu0 0
    %1229 = vmatpush1.bf16.msra.mxu0 0
    %1230 = vmatprep.subr.bf16.mxu0 0
    %1231 = vmatpush1.bf16.msra.mxu0 0
    %1232 = vmatprep.subr.bf16.mxu0 0
    %1233 = vmatpush1.bf16.msra.mxu0 0
    %1234 = vmatprep.subr.bf16.mxu0 0
    %1235 = vmatpush1.bf16.msra.mxu0 0
    %1236 = vmatprep.subr.bf16.mxu0 0
    %1237 = vmatpush1.bf16.msra.mxu0 0
    %1238 = vmatprep.subr.bf16.mxu0 0
    %1239 = vmatpush1.bf16.msra.mxu0 0
    %1240 = vmatprep.subr.bf16.mxu0 0
    %1241 = vmatpush1.bf16.msra.mxu0 0
    %1242 = vmatprep.subr.bf16.mxu0 0
    %1243 = vmatpush1.bf16.msra.mxu0 0
    %1244 = vmatprep.subr.bf16.mxu0 0
    %1245 = vmatpush1.bf16.msra.mxu0 0
    %1246 = vmatprep.subr.bf16.mxu0 0
    %1247 = vmatpush1.bf16.msra.mxu0 0
    %1248 = vmatprep.subr.bf16.mxu0 0
    %1249 = vmatpush1.bf16.msra.mxu0 0
    %1250 = vmatprep.mubr.bf16.mxu0 0
    %1251 = vmatmul.mubr.bf16.gmra.mrb[0].mxu0 %v1216
    %v1252 = vpop.f32.mrb[0].mxu0
    %v1253 = vadd.f32 0.0, %v1252
    %v1254 = vpop.f32.mrb[0].mxu0
    %v1255 = vpop.f32.mrb[0].mxu0
    %v1256 = vpop.f32.mrb[0].mxu0
    %1257 = vdwg.mxu0
    %v1258 = vadd.f32 %v1210, %v1253
    %v1259 = vxor.u32 %v1258, 2147483648
    %v1260 = vmul.f32 %v1259, 1.442695
    %v1261 = vpow.pop %v1260
    %v1262 = vadd.f32 %v1261, 1.0
    %v1263 = vrcp.pop %v1262
    %v1264 = vmul.f32 1.0, %v1263
    %v1265 = vtanh.pop %v1258
    %v1266 = vmul.f32 %v1264, %v1206
    %1268 = vrot.lane.b32.xlu0 %v1265, 32
    %v1269 = vpop.permute.xlu0 %1268
    %v1271 = vmul.f32 %v1264, %v1269
    %1273 = vrot.lane.b32.xlu0 %v1271, 32
    %v1274 = vpop.permute.xlu0 %1273
    %v1276 = vadd.f32 %v1266, %v1274
    %v1277 = vtanh.pop %v1276
    %1279 = vrot.lane.b32.xlu0 %v1277, 32
    %v1280 = vpop.permute.xlu0 %1279
    %v1282 = vmul.f32 %v1264, %v1280
    %s1283 = sadd.s32 %s71, 13
    %v1284 = vstv %s1283
    %vm1285 = vcmp.lt.s32.totalorder %v1284, %v70
    %v1286 = vsel %vm1285, 1, 0
    %1287 = vset.pattern.permute.xlu0 0
    %1288 = vperm.xlu0 %1287, %v1286
    %v1289 = vpop.permute.xlu0 %1288
    %vm1290 = vcmp.eq.s32.totalorder %v1289, 1
    %v1291 = vsel %vm1290, %v1282, %v1205
    %v1292 = vsel %vm1290, %v1276, %v1206
    %v1293 = vsel %vm1290, %v1282, 0.0
    %s1294 = scalar_lea.vmem [#allocation5], 56
    %v1295 = vld [vmem:[%s1294] sm:$0xf]
    %v1296 = vunpack.c.l.bf16 %v1295
    %v1297 = vpack.c.bf16 %v1291, %v1291
    %1299 = vrot.lane.b32.xlu0 %v1297, 64
    %v1300 = vpop.permute.xlu0 %1299
    %v1302 = vsel %vm89, %v1300, 0
    %1304 = vmatprep.subr.bf16.mxu0 0
    %1305 = vmatpush1.bf16.msra.mxu0 %v85
    %1306 = vmatprep.subr.bf16.mxu0 0
    %1307 = vmatpush1.bf16.msra.mxu0 %v86
    %1308 = vmatprep.subr.bf16.mxu0 0
    %1309 = vmatpush1.bf16.msra.mxu0 0
    %1310 = vmatprep.subr.bf16.mxu0 0
    %1311 = vmatpush1.bf16.msra.mxu0 0
    %1312 = vmatprep.subr.bf16.mxu0 0
    %1313 = vmatpush1.bf16.msra.mxu0 0
    %1314 = vmatprep.subr.bf16.mxu0 0
    %1315 = vmatpush1.bf16.msra.mxu0 0
    %1316 = vmatprep.subr.bf16.mxu0 0
    %1317 = vmatpush1.bf16.msra.mxu0 0
    %1318 = vmatprep.subr.bf16.mxu0 0
    %1319 = vmatpush1.bf16.msra.mxu0 0
    %1320 = vmatprep.subr.bf16.mxu0 0
    %1321 = vmatpush1.bf16.msra.mxu0 0
    %1322 = vmatprep.subr.bf16.mxu0 0
    %1323 = vmatpush1.bf16.msra.mxu0 0
    %1324 = vmatprep.subr.bf16.mxu0 0
    %1325 = vmatpush1.bf16.msra.mxu0 0
    %1326 = vmatprep.subr.bf16.mxu0 0
    %1327 = vmatpush1.bf16.msra.mxu0 0
    %1328 = vmatprep.subr.bf16.mxu0 0
    %1329 = vmatpush1.bf16.msra.mxu0 0
    %1330 = vmatprep.subr.bf16.mxu0 0
    %1331 = vmatpush1.bf16.msra.mxu0 0
    %1332 = vmatprep.subr.bf16.mxu0 0
    %1333 = vmatpush1.bf16.msra.mxu0 0
    %1334 = vmatprep.subr.bf16.mxu0 0
    %1335 = vmatpush1.bf16.msra.mxu0 0
    %1336 = vmatprep.mubr.bf16.mxu0 0
    %1337 = vmatmul.mubr.bf16.gmra.mrb[0].mxu0 %v1302
    %v1338 = vpop.f32.mrb[0].mxu0
    %v1339 = vadd.f32 0.0, %v1338
    %v1340 = vpop.f32.mrb[0].mxu0
    %v1341 = vpop.f32.mrb[0].mxu0
    %v1342 = vpop.f32.mrb[0].mxu0
    %1343 = vdwg.mxu0
    %v1344 = vadd.f32 %v1296, %v1339
    %v1345 = vxor.u32 %v1344, 2147483648
    %v1346 = vmul.f32 %v1345, 1.442695
    %v1347 = vpow.pop %v1346
    %v1348 = vadd.f32 %v1347, 1.0
    %v1349 = vrcp.pop %v1348
    %v1350 = vmul.f32 1.0, %v1349
    %v1351 = vtanh.pop %v1344
    %v1352 = vmul.f32 %v1350, %v1292
    %1354 = vrot.lane.b32.xlu0 %v1351, 32
    %v1355 = vpop.permute.xlu0 %1354
    %v1357 = vmul.f32 %v1350, %v1355
    %1359 = vrot.lane.b32.xlu0 %v1357, 32
    %v1360 = vpop.permute.xlu0 %1359
    %v1362 = vadd.f32 %v1352, %v1360
    %v1363 = vtanh.pop %v1362
    %1365 = vrot.lane.b32.xlu0 %v1363, 32
    %v1366 = vpop.permute.xlu0 %1365
    %v1368 = vmul.f32 %v1350, %v1366
    %s1369 = sadd.s32 %s71, 14
    %v1370 = vstv %s1369
    %vm1371 = vcmp.lt.s32.totalorder %v1370, %v70
    %v1372 = vsel %vm1371, 1, 0
    %1373 = vset.pattern.permute.xlu0 0
    %1374 = vperm.xlu0 %1373, %v1372
    %v1375 = vpop.permute.xlu0 %1374
    %vm1376 = vcmp.eq.s32.totalorder %v1375, 1
    %v1377 = vsel %vm1376, %v1368, %v1291
    %v1378 = vsel %vm1376, %v1362, %v1292
    %v1379 = vsel %vm1376, %v1368, 0.0
    %s1380 = scalar_lea.vmem [#allocation5], 60
    %v1381 = vld [vmem:[%s1380] sm:$0xf]
    %v1382 = vunpack.c.l.bf16 %v1381
    %v1383 = vpack.c.bf16 %v1377, %v1377
    %1385 = vrot.lane.b32.xlu0 %v1383, 64
    %v1386 = vpop.permute.xlu0 %1385
    %v1388 = vsel %vm89, %v1386, 0
    %1390 = vmatprep.subr.bf16.mxu0 0
    %1391 = vmatpush1.bf16.msra.mxu0 %v85
    %1392 = vmatprep.subr.bf16.mxu0 0
    %1393 = vmatpush1.bf16.msra.mxu0 %v86
    %1394 = vmatprep.subr.bf16.mxu0 0
    %1395 = vmatpush1.bf16.msra.mxu0 0
    %1396 = vmatprep.subr.bf16.mxu0 0
    %1397 = vmatpush1.bf16.msra.mxu0 0
    %1398 = vmatprep.subr.bf16.mxu0 0
    %1399 = vmatpush1.bf16.msra.mxu0 0
    %1400 = vmatprep.subr.bf16.mxu0 0
    %1401 = vmatpush1.bf16.msra.mxu0 0
    %1402 = vmatprep.subr.bf16.mxu0 0
    %1403 = vmatpush1.bf16.msra.mxu0 0
    %1404 = vmatprep.subr.bf16.mxu0 0
    %1405 = vmatpush1.bf16.msra.mxu0 0
    %1406 = vmatprep.subr.bf16.mxu0 0
    %1407 = vmatpush1.bf16.msra.mxu0 0
    %1408 = vmatprep.subr.bf16.mxu0 0
    %1409 = vmatpush1.bf16.msra.mxu0 0
    %1410 = vmatprep.subr.bf16.mxu0 0
    %1411 = vmatpush1.bf16.msra.mxu0 0
    %1412 = vmatprep.subr.bf16.mxu0 0
    %1413 = vmatpush1.bf16.msra.mxu0 0
    %1414 = vmatprep.subr.bf16.mxu0 0
    %1415 = vmatpush1.bf16.msra.mxu0 0
    %1416 = vmatprep.subr.bf16.mxu0 0
    %1417 = vmatpush1.bf16.msra.mxu0 0
    %1418 = vmatprep.subr.bf16.mxu0 0
    %1419 = vmatpush1.bf16.msra.mxu0 0
    %1420 = vmatprep.subr.bf16.mxu0 0
    %1421 = vmatpush1.bf16.msra.mxu0 0
    %1422 = vmatprep.mubr.bf16.mxu0 0
    %1423 = vmatmul.mubr.bf16.gmra.mrb[0].mxu0 %v1388
    %v1424 = vpop.f32.mrb[0].mxu0
    %v1425 = vadd.f32 0.0, %v1424
    %v1426 = vpop.f32.mrb[0].mxu0
    %v1427 = vpop.f32.mrb[0].mxu0
    %v1428 = vpop.f32.mrb[0].mxu0
    %1429 = vdwg.mxu0
    %v1430 = vadd.f32 %v1382, %v1425
    %v1431 = vxor.u32 %v1430, 2147483648
    %v1432 = vmul.f32 %v1431, 1.442695
    %v1433 = vpow.pop %v1432
    %v1434 = vadd.f32 %v1433, 1.0
    %v1435 = vrcp.pop %v1434
    %v1436 = vmul.f32 1.0, %v1435
    %v1437 = vtanh.pop %v1430
    %v1438 = vmul.f32 %v1436, %v1378
    %1440 = vrot.lane.b32.xlu0 %v1437, 32
    %v1441 = vpop.permute.xlu0 %1440
    %v1443 = vmul.f32 %v1436, %v1441
    %1445 = vrot.lane.b32.xlu0 %v1443, 32
    %v1446 = vpop.permute.xlu0 %1445
    %v1448 = vadd.f32 %v1438, %v1446
    %v1449 = vtanh.pop %v1448
    %1451 = vrot.lane.b32.xlu0 %v1449, 32
    %v1452 = vpop.permute.xlu0 %1451
    %v1454 = vmul.f32 %v1436, %v1452
    %s1455 = sadd.s32 %s71, 15
    %v1456 = vstv %s1455
    %vm1457 = vcmp.lt.s32.totalorder %v1456, %v70
    %v1458 = vsel %vm1457, 1, 0
    %1459 = vset.pattern.permute.xlu0 0
    %1460 = vperm.xlu0 %1459, %v1458
    %v1461 = vpop.permute.xlu0 %1460
    %vm1462 = vcmp.eq.s32.totalorder %v1461, 1
    %v1463 = vsel %vm1462, %v1454, %v1377
    %v1464 = vsel %vm1462, %v1448, %v1378
    %v1465 = vsel %vm1462, %v1454, 0.0
    %1467 = vrot.lane.b32.xlu0 %v175, 64
    %v1468 = vpop.permute.xlu0 %1467
    %1471 = vrot.lane.b32.xlu0 %v261, 96
    %v1472 = vpop.permute.xlu0 %1471
    %1475 = vrot.lane.b32.xlu0 %v433, 32
    %v1476 = vpop.permute.xlu0 %1475
    %1479 = vrot.lane.b32.xlu0 %v519, 64
    %v1480 = vpop.permute.xlu0 %1479
    %1483 = vrot.lane.b32.xlu0 %v605, 96
    %v1484 = vpop.permute.xlu0 %1483
    %1487 = vrot.lane.b32.xlu0 %v777, 32
    %v1488 = vpop.permute.xlu0 %1487
    %1491 = vrot.lane.b32.xlu0 %v863, 64
    %v1492 = vpop.permute.xlu0 %1491
    %1495 = vrot.lane.b32.xlu0 %v949, 96
    %v1496 = vpop.permute.xlu0 %1495
    %1499 = vrot.lane.b32.xlu0 %v1121, 32
    %v1500 = vpop.permute.xlu0 %1499
    %1503 = vrot.lane.b32.xlu0 %v1207, 64
    %v1504 = vpop.permute.xlu0 %1503
    %1507 = vrot.lane.b32.xlu0 %v1293, 96
    %v1508 = vpop.permute.xlu0 %1507
    %1511 = vrot.lane.b32.xlu0 %v1465, 32
    %v1512 = vpop.permute.xlu0 %1511
    %v1514 = vsel %vm89, %v1468, %v1472
    %vm1515 = vcmask 523264
    %v1516 = vsel %vm1515, %v1514, %v347
    %vm1517 = vcmask 785408
    %v1518 = vsel %vm1517, %v1516, %v1476
    %v1519 = vsel %vm89, %v1480, %v1484
    %v1520 = vsel %vm1515, %v1519, %v691
    %v1521 = vsel %vm1517, %v1520, %v1488
    %v1522 = vsel %vm89, %v1492, %v1496
    %v1523 = vsel %vm1515, %v1522, %v1035
    %v1524 = vsel %vm1517, %v1523, %v1500
    %v1525 = vsel %vm89, %v1504, %v1508
    %v1526 = vsel %vm1515, %v1525, %v1379
    %v1527 = vsel %vm1517, %v1526, %v1512
    %1528 = vst [vmem:[#allocation8] sm:$0xff] %v1518
    %1529 = vst [vmem:[#allocation8 + $0x8] sm:$0xff] %v1521
    %1530 = vst [vmem:[#allocation8 + $0x10] sm:$0xff] %v1524
    %1531 = vst [vmem:[#allocation8 + $0x18] sm:$0xff] %v1527
    %1533 = vrot.lane.b32.xlu0 %v1463, 64
    %v1534 = vpop.permute.xlu0 %1533
    %1536 = vst.msk [vmem:[#allocation9] sm:$0xff] %vm89, %v1534
    %1538 = vrot.lane.b32.xlu0 %v1464, 96
    %v1539 = vpop.permute.xlu0 %1538
    %1541 = vst.msk [vmem:[#allocation11] sm:$0xff] %vm89, %v1539
    // Predicated region
    $region30: #{tpu_custom_call.1} parent=1 // pred_check
      _
    $region31: #{tpu_custom_call.1} parent=1 // pred_check_branch
      %1543 = sbr.rel (0) target = $region33
    $region32: #{tpu_custom_call.1} parent=1 // pred_region
      %s1545 = ssub.s32 512, 512
      %1546 = vsyncadd [#allocation4], %s1545
      %s1548 = sshll.u32 [#allocation8], 4
      %s1549 = int_to_ptr.vmem [resolvable:$true] %s1548
      %1551 = dma.vmem_to_hbm [thread:$0]  %s1549, 512, %s3, [#allocation4]
    $region33: #{tpu_custom_call.1} parent=1 // pred_fallthru
      _
    // Predicated region
    $region34: #{tpu_custom_call.1} parent=1 // pred_check
      _
    $region35: #{tpu_custom_call.1} parent=1 // pred_check_branch
      %1553 = sbr.rel (0) target = $region37
    $region36: #{tpu_custom_call.1} parent=1 // pred_region
      %s1555 = ssub.s32 128, 128
      %1556 = vsyncadd [#allocation10], %s1555
      %s1558 = sshll.u32 [#allocation9], 4
      %s1559 = int_to_ptr.vmem [resolvable:$true] %s1558
      %1561 = dma.vmem_to_hbm [thread:$0]  %s1559, 128, %s4, [#allocation10]
    $region37: #{tpu_custom_call.1} parent=1 // pred_fallthru
      _
    // Predicated region
    $region38: #{tpu_custom_call.1} parent=1 // pred_check
      _
    $region39: #{tpu_custom_call.1} parent=1 // pred_check_branch
      %1563 = sbr.rel (0) target = $region41
    $region40: #{tpu_custom_call.1} parent=1 // pred_region
      %s1565 = ssub.s32 128, 128
      %1566 = vsyncadd [#allocation10], %s1565
      %s1568 = sshll.u32 [#allocation11], 4
      %s1569 = int_to_ptr.vmem [resolvable:$true] %s1568
      %1571 = dma.vmem_to_hbm [thread:$0]  %s1569, 128, %s5, [#allocation10]
    $region41: #{tpu_custom_call.1} parent=1 // pred_fallthru
      _
    // Predicated region
    $region42: #{tpu_custom_call.1} parent=1 // pred_check
      _
    $region43: #{tpu_custom_call.1} parent=1 // pred_check_branch
      %1573 = sbr.rel (0) target = $region45
    $region44: #{tpu_custom_call.1} parent=1 // pred_region
      %1574 = dma.done [#allocation4], 512
    $region45: #{tpu_custom_call.1} parent=1 // pred_fallthru
      _
    // Predicated region
    $region46: #{tpu_custom_call.1} parent=1 // pred_check
      _
    $region47: #{tpu_custom_call.1} parent=1 // pred_check_branch
      %1576 = sbr.rel (0) target = $region49
    $region48: #{tpu_custom_call.1} parent=1 // pred_region
      %1577 = dma.done [#allocation10], 128
    $region49: #{tpu_custom_call.1} parent=1 // pred_fallthru
      _
    // Predicated region
    $region50: #{tpu_custom_call.1} parent=1 // pred_check
      _
    $region51: #{tpu_custom_call.1} parent=1 // pred_check_branch
      %1579 = sbr.rel (0) target = $region53
    $region52: #{tpu_custom_call.1} parent=1 // pred_region
      %1580 = dma.done [#allocation10], 128
    $region53: #{tpu_custom_call.1} parent=1 // pred_fallthru
      _
    %1581 = vsyncpa [#allocation3], 1
    %1582 = vsyncpa [#allocation6], 1
    %1583 = vsyncpa [#allocation4], 1
    %1584 = vsyncpa [#allocation10], 1

</llo_original>
